<compile_context>
chip_gen: v7x
topology: tpu7x:2x2x1
jax: 0.10.0
libtpu: 0.0.40
codegen_flags: <defaults>
</compile_context>

<pallas_src>
import functools
import math

import jax
import jax.numpy as jnp
from jax.experimental import pallas as pl
from jax.experimental.pallas import tpu as pltpu


# ----------------------------------------------------------------------------- in-kernel helpers

def _silu(x):
    return x * jax.nn.sigmoid(x)


def _group_norm(x, mmat, mmat_t, gamma, beta, n_per_group, eps=1e-5):
    """Stable GroupNorm over one sample. x: (N, C); mmat: (C, G); mmat_t: (G, C)."""
    sum_c = jnp.sum(x, axis=0, keepdims=True)                                   # (1, C)
    mean_g = jnp.dot(sum_c, mmat, preferred_element_type=jnp.float32) * (1.0 / n_per_group)
    mean_c = jnp.dot(mean_g, mmat_t, preferred_element_type=jnp.float32)        # (1, C)
    xc = x - mean_c
    ssq_c = jnp.sum(xc * xc, axis=0, keepdims=True)                             # (1, C)
    var_g = jnp.dot(ssq_c, mmat, preferred_element_type=jnp.float32) * (1.0 / n_per_group)
    inv_c = jnp.dot(jax.lax.rsqrt(var_g + eps), mmat_t, preferred_element_type=jnp.float32)
    return xc * (inv_c * gamma) + beta


# ----------------------------------------------------------------------------- fused kernel

def fused_resblock_attn_kernel(
        x_ref, t_ref,
        m_in_ref, m_in_t_ref, g1g_ref, g1b_ref,
        w1_ref, b1_ref, tw_ref,
        m_out_ref, m_out_t_ref, g2g_ref, g2b_ref,
        w2_ref, b2_ref,
        *rest,
        H, W, n_head, npg_in, npg_out, has_skip):
    if has_skip:
        (sw_ref, sb_ref, ag_ref, ab_ref,
         wqkv_ref, bqkv_ref, wo_ref, bo_ref, o_ref) = rest
    else:
        (ag_ref, ab_ref, wqkv_ref, bqkv_ref, wo_ref, bo_ref, o_ref) = rest

    HW = H * W
    x = x_ref[...]                                   # (HW, Cin) f32
    cout = b1_ref.shape[-1]

    # Boundary masks for the 9 conv taps — built ONCE, shared by both 3x3 convs.
    pidx = jax.lax.broadcasted_iota(jnp.int32, (HW, 1), 0)   # flat position p = y*W + x
    xcoord = pidx % W
    tap_shift, tap_mask = [], []
    for ky in range(3):
        for kx in range(3):
            k = (ky - 1) * W + (kx - 1)              # flat offset of this tap
            conds = []
            if k > 0:
                conds.append(pidx < HW - k)          # row (y) lower boundary
            elif k < 0:
                conds.append(pidx >= -k)             # row (y) upper boundary
            if kx == 0:
                conds.append(xcoord >= 1)            # column (x) left boundary
            elif kx == 2:
                conds.append(xcoord < W - 1)         # column (x) right boundary
            m = None
            for c in conds:
                m = c if m is None else (m & c)
            tap_shift.append(k)
            tap_mask.append(m)

    def conv3x3(h, w_ref_, b_ref_):
        """h: (HW, C) f32 -> (HW, Cout) f32.  One K=9*C bf16 matmul over rolled/masked taps."""
        taps = []
        for k, m in zip(tap_shift, tap_mask):
            t = h if k == 0 else pltpu.roll(h, (-k) % HW, 0)   # t[p] = h[(p+k) mod HW]
            if m is not None:
                t = jnp.where(m, t, 0.0)
            taps.append(t.astype(jnp.bfloat16))                # bf16 before concat (half width)
        tcat = jnp.concatenate(taps, axis=-1)                  # (HW, 9*C) bf16
        return (jnp.dot(tcat, w_ref_[...], preferred_element_type=jnp.float32)
                + b_ref_[...])

    # -------- ResBlock --------
    h = _silu(_group_norm(x, m_in_ref[...], m_in_t_ref[...],
                          g1g_ref[...], g1b_ref[...], npg_in))
    h = conv3x3(h, w1_ref, b1_ref)                             # b1 = conv1_b + time_b (pre-merged)
    h = h + jnp.dot(_silu(t_ref[...]), tw_ref[...],
                    preferred_element_type=jnp.float32)        # (1, Cout) broadcast over HW
    h = _silu(_group_norm(h, m_out_ref[...], m_out_t_ref[...],
                          g2g_ref[...], g2b_ref[...], npg_out))
    # TODO(synk): nn.Dropout is identity in eval mode; training-mode dropout not implemented.
    h = conv3x3(h, w2_ref, b2_ref)

    if has_skip:
        h = h + (jnp.dot(x.astype(jnp.bfloat16), sw_ref[...],
                         preferred_element_type=jnp.float32) + sb_ref[...])
    else:
        h = h + x

    # -------- SelfAttention --------
    hd = cout // n_head
    norm = _group_norm(h, m_out_ref[...], m_out_t_ref[...],
                       ag_ref[...], ab_ref[...], npg_out)
    qkv = (jnp.dot(norm.astype(jnp.bfloat16), wqkv_ref[...],
                   preferred_element_type=jnp.float32) + bqkv_ref[...])   # (HW, 3*Cout)
    scale = 1.0 / math.sqrt(cout)        # torch reference divides by sqrt(channel)
    wo = wo_ref[...]                     # (Cout, Cout) bf16, hoisted out of the head loop
    attn_out = jnp.zeros((HW, cout), jnp.float32)
    for n in range(n_head):
        base = n * 3 * hd
        q = (qkv[:, base:base + hd] * scale).astype(jnp.bfloat16)
        kk = qkv[:, base + hd:base + 2 * hd].astype(jnp.bfloat16)
        v = qkv[:, base + 2 * hd:base + 3 * hd].astype(jnp.bfloat16)
        logits = jax.lax.dot_general(q, kk, (((1,), (1,)), ((), ())),
                                     preferred_element_type=jnp.float32)   # (HW, HW)
        m = jnp.max(logits, axis=-1, keepdims=True)
        e = jnp.exp(logits - m)
        p = e * pl.reciprocal(jnp.sum(e, axis=-1, keepdims=True), approx=True)
        pv = jnp.dot(p.astype(jnp.bfloat16), v,
                     preferred_element_type=jnp.float32)                   # (HW, hd)
        attn_out = attn_out + jnp.dot(pv.astype(jnp.bfloat16),
                                      wo[n * hd:(n + 1) * hd, :],
                                      preferred_element_type=jnp.float32)
    o_ref[...] = attn_out + bo_ref[...] + h


# ----------------------------------------------------------------------------- wrapper / glue

def _group_matrix(C, groups=32):
    cpg = C // groups
    idx = jnp.arange(C)
    return jnp.zeros((C, groups), jnp.float32).at[idx, idx // cpg].set(1.0)


def _vs_uniform(key, shape, fan_in, fan_out, scale=1.0):
    s = scale / ((fan_in + fan_out) / 2.0)
    bound = math.sqrt(3.0 * s)
    return jax.random.uniform(key, shape, jnp.float32, -bound, bound)


def make_params(key, in_channel, out_channel, time_dim):
    ks = jax.random.split(key, 6)
    p = {}
    # ResBlock
    p["gn1_gamma"] = jnp.ones((1, in_channel), jnp.float32)
    p["gn1_beta"] = jnp.zeros((1, in_channel), jnp.float32)
    p["conv1_w"] = _vs_uniform(ks[0], (9, in_channel, out_channel),
                               in_channel * 9, out_channel * 9, 1.0
                               ).reshape(9 * in_channel, out_channel)
    p["conv1_b"] = jnp.zeros((1, out_channel), jnp.float32)
    p["time_w"] = _vs_uniform(ks[1], (time_dim, out_channel), time_dim, out_channel, 1.0)
    p["time_b"] = jnp.zeros((1, out_channel), jnp.float32)
    p["gn2_gamma"] = jnp.ones((1, out_channel), jnp.float32)
    p["gn2_beta"] = jnp.zeros((1, out_channel), jnp.float32)
    p["conv2_w"] = _vs_uniform(ks[2], (9, out_channel, out_channel),
                               out_channel * 9, out_channel * 9, 1e-10
                               ).reshape(9 * out_channel, out_channel)
    p["conv2_b"] = jnp.zeros((1, out_channel), jnp.float32)
    if in_channel != out_channel:
        p["skip_w"] = _vs_uniform(ks[3], (in_channel, out_channel),
                                  in_channel, out_channel, 1.0)
        p["skip_b"] = jnp.zeros((1, out_channel), jnp.float32)
    # SelfAttention
    p["attn_gamma"] = jnp.ones((1, out_channel), jnp.float32)
    p["attn_beta"] = jnp.zeros((1, out_channel), jnp.float32)
    p["qkv_w"] = _vs_uniform(ks[4], (out_channel, out_channel * 3),
                             out_channel, out_channel * 3, 1.0)
    p["qkv_b"] = jnp.zeros((1, out_channel * 3), jnp.float32)
    p["attn_out_w"] = _vs_uniform(ks[5], (out_channel, out_channel),
                                  out_channel, out_channel, 1e-10)
    p["attn_out_b"] = jnp.zeros((1, out_channel), jnp.float32)
    return p


def resblock_with_attention(x_nchw, time_emb, params, *, n_head=1, groups=32):
    B, Cin, H, W = x_nchw.shape
    Cout = params["conv1_b"].shape[-1]
    HW = H * W

    x = jnp.transpose(x_nchw, (0, 2, 3, 1)).reshape(B, HW, Cin)     # NHWC flat, channels on lanes
    t = time_emb.reshape(B, 1, -1)
    Tdim = t.shape[-1]

    m_in, m_out = _group_matrix(Cin, groups), _group_matrix(Cout, groups)
    npg_in = float(HW * (Cin // groups))
    npg_out = float(HW * (Cout // groups))
    has_skip = "skip_w" in params

    bf16 = lambda a: a.astype(jnp.bfloat16)     # bf16 operands for all MXU matmuls
    batched = [x, t]
    shared = [
        m_in, m_in.T, params["gn1_gamma"], params["gn1_beta"],
        bf16(params["conv1_w"]), params["conv1_b"] + params["time_b"],   # merge biases on host
        params["time_w"],
        m_out, m_out.T, params["gn2_gamma"], params["gn2_beta"],
        bf16(params["conv2_w"]), params["conv2_b"],
    ]
    if has_skip:
        shared += [bf16(params["skip_w"]), params["skip_b"]]
    shared += [
        params["attn_gamma"], params["attn_beta"],
        bf16(params["qkv_w"]), params["qkv_b"],
        bf16(params["attn_out_w"]), params["attn_out_b"],
    ]

    in_specs = [
        pl.BlockSpec((None, HW, Cin), lambda b: (b, 0, 0)),
        pl.BlockSpec((None, 1, Tdim), lambda b: (b, 0, 0)),
    ]
    for a in shared:
        in_specs.append(pl.BlockSpec(a.shape, lambda b, nd=a.ndim: (0,) * nd))

    kernel = functools.partial(
        fused_resblock_attn_kernel, H=H, W=W, n_head=n_head,
        npg_in=npg_in, npg_out=npg_out, has_skip=has_skip)

    out = pl.pallas_call(
        kernel,
        grid=(B,),
        in_specs=in_specs,
        out_specs=pl.BlockSpec((None, HW, Cout), lambda b: (b, 0, 0)),
        out_shape=jax.ShapeDtypeStruct((B, HW, Cout), jnp.float32),
        compiler_params=pltpu.CompilerParams(
            dimension_semantics=("parallel",),          # batch shards across v7x's 2 TCs
            vmem_limit_bytes=32 * 1024 * 1024,          # within default scoped VMEM on all chips
        ),
    )(*batched, *shared)

    return jnp.transpose(out.reshape(B, H, W, Cout), (0, 3, 1, 2))


# ----------------------------------------------------------------------------- demo

if __name__ == "__main__":
    B, Cin, Cout, H, W, Tdim = 2, 32, 64, 8, 8, 16   # GroupNorm(32) => channels % 32 == 0
    key = jax.random.PRNGKey(0)
    kx, kt, kp = jax.random.split(key, 3)
    x = jax.random.normal(kx, (B, Cin, H, W), jnp.float32)
    t = jax.random.normal(kt, (B, Tdim), jnp.float32)
    params = make_params(kp, Cin, Cout, Tdim)

    out = resblock_with_attention(x, t, params, n_head=1)
    out = jax.block_until_ready(out)
    assert out.shape == (B, Cout, H, W) and out.dtype == jnp.float32
    assert bool(jnp.all(jnp.isfinite(out)))
    print("KERNEL_OK")
</pallas_src>

<mosaic_0001>
module attributes {stable_mosaic.version = 11 : i64} {
  func.func @fused_resblock_attn_kernel(%arg0: i32, %arg1: memref<1x64x32xf32, #tpu.memory_space<vmem>>, %arg2: memref<1x1x16xf32, #tpu.memory_space<vmem>>, %arg3: memref<32x32xf32, #tpu.memory_space<vmem>>, %arg4: memref<32x32xf32, #tpu.memory_space<vmem>>, %arg5: memref<1x32xf32, #tpu.memory_space<vmem>>, %arg6: memref<1x32xf32, #tpu.memory_space<vmem>>, %arg7: memref<288x64xbf16, #tpu.memory_space<vmem>>, %arg8: memref<1x64xf32, #tpu.memory_space<vmem>>, %arg9: memref<16x64xf32, #tpu.memory_space<vmem>>, %arg10: memref<64x32xf32, #tpu.memory_space<vmem>>, %arg11: memref<32x64xf32, #tpu.memory_space<vmem>>, %arg12: memref<1x64xf32, #tpu.memory_space<vmem>>, %arg13: memref<1x64xf32, #tpu.memory_space<vmem>>, %arg14: memref<576x64xbf16, #tpu.memory_space<vmem>>, %arg15: memref<1x64xf32, #tpu.memory_space<vmem>>, %arg16: memref<32x64xbf16, #tpu.memory_space<vmem>>, %arg17: memref<1x64xf32, #tpu.memory_space<vmem>>, %arg18: memref<1x64xf32, #tpu.memory_space<vmem>>, %arg19: memref<1x64xf32, #tpu.memory_space<vmem>>, %arg20: memref<64x192xbf16, #tpu.memory_space<vmem>>, %arg21: memref<1x192xf32, #tpu.memory_space<vmem>>, %arg22: memref<64x64xbf16, #tpu.memory_space<vmem>>, %arg23: memref<1x64xf32, #tpu.memory_space<vmem>>, %arg24: memref<1x64x64xf32, #tpu.memory_space<vmem>>) attributes {dimension_semantics = [#tpu.dimension_semantics<parallel>], iteration_bounds = array<i64: 2>, scalar_prefetch = 0 : i64, scratch_operands = 0 : i64, tpu.core_type = #tpu.core_type<tc>, window_params = [{transform_indices = @transform_0, window_bounds = array<i64: 1, 64, 32>}, {transform_indices = @transform_1, window_bounds = array<i64: 1, 1, 16>}, {pipeline_mode = #tpu.pipeline_mode<synchronous>, transform_indices = @transform_2, window_bounds = array<i64: 32, 32>}, {pipeline_mode = #tpu.pipeline_mode<synchronous>, transform_indices = @transform_3, window_bounds = array<i64: 32, 32>}, {pipeline_mode = #tpu.pipeline_mode<synchronous>, transform_indices = @transform_4, window_bounds = array<i64: 1, 32>}, {pipeline_mode = #tpu.pipeline_mode<synchronous>, transform_indices = @transform_5, window_bounds = array<i64: 1, 32>}, {pipeline_mode = #tpu.pipeline_mode<synchronous>, transform_indices = @transform_6, window_bounds = array<i64: 288, 64>}, {pipeline_mode = #tpu.pipeline_mode<synchronous>, transform_indices = @transform_7, window_bounds = array<i64: 1, 64>}, {pipeline_mode = #tpu.pipeline_mode<synchronous>, transform_indices = @transform_8, window_bounds = array<i64: 16, 64>}, {pipeline_mode = #tpu.pipeline_mode<synchronous>, transform_indices = @transform_9, window_bounds = array<i64: 64, 32>}, {pipeline_mode = #tpu.pipeline_mode<synchronous>, transform_indices = @transform_10, window_bounds = array<i64: 32, 64>}, {pipeline_mode = #tpu.pipeline_mode<synchronous>, transform_indices = @transform_11, window_bounds = array<i64: 1, 64>}, {pipeline_mode = #tpu.pipeline_mode<synchronous>, transform_indices = @transform_12, window_bounds = array<i64: 1, 64>}, {pipeline_mode = #tpu.pipeline_mode<synchronous>, transform_indices = @transform_13, window_bounds = array<i64: 576, 64>}, {pipeline_mode = #tpu.pipeline_mode<synchronous>, transform_indices = @transform_14, window_bounds = array<i64: 1, 64>}, {pipeline_mode = #tpu.pipeline_mode<synchronous>, transform_indices = @transform_15, window_bounds = array<i64: 32, 64>}, {pipeline_mode = #tpu.pipeline_mode<synchronous>, transform_indices = @transform_16, window_bounds = array<i64: 1, 64>}, {pipeline_mode = #tpu.pipeline_mode<synchronous>, transform_indices = @transform_17, window_bounds = array<i64: 1, 64>}, {pipeline_mode = #tpu.pipeline_mode<synchronous>, transform_indices = @transform_18, window_bounds = array<i64: 1, 64>}, {pipeline_mode = #tpu.pipeline_mode<synchronous>, transform_indices = @transform_19, window_bounds = array<i64: 64, 192>}, {pipeline_mode = #tpu.pipeline_mode<synchronous>, transform_indices = @transform_20, window_bounds = array<i64: 1, 192>}, {pipeline_mode = #tpu.pipeline_mode<synchronous>, transform_indices = @transform_21, window_bounds = array<i64: 64, 64>}, {pipeline_mode = #tpu.pipeline_mode<synchronous>, transform_indices = @transform_22, window_bounds = array<i64: 1, 64>}, {transform_indices = @transform_23, window_bounds = array<i64: 1, 64, 64>}]} {
    %c0 = arith.constant 0 : index
    %c0_0 = arith.constant 0 : index
    %c0_1 = arith.constant 0 : index
    %0 = vector.load %arg1[%c0, %c0_0, %c0_1] : memref<1x64x32xf32, #tpu.memory_space<vmem>>, vector<1x64x32xf32>
    %1 = vector.shape_cast %0 : vector<1x64x32xf32> to vector<64x32xf32>
    %2 = tpu.iota {dimensions = array<i32: 0>} : vector<64x1xi32>
    %c8_i32 = arith.constant 8 : i32
    %c0_i32 = arith.constant 0 : i32
    %3 = arith.cmpi eq, %c8_i32, %c0_i32 : i32
    %c1_i32 = arith.constant 1 : i32
    %4 = arith.select %3, %c1_i32, %c8_i32 : i32
    %5 = vector.broadcast %4 : i32 to vector<64x1xi32>
    %6 = arith.remsi %2, %5 : vector<64x1xi32>
    %c0_i32_2 = arith.constant 0 : i32
    %7 = vector.broadcast %c0_i32_2 : i32 to vector<64x1xi32>
    %8 = arith.cmpi ne, %6, %7 : vector<64x1xi32>
    %c0_i32_3 = arith.constant 0 : i32
    %9 = vector.broadcast %c0_i32_3 : i32 to vector<64x1xi32>
    %10 = arith.cmpi slt, %6, %9 : vector<64x1xi32>
    %c0_i32_4 = arith.constant 0 : i32
    %11 = arith.cmpi slt, %4, %c0_i32_4 : i32
    %12 = vector.broadcast %11 : i1 to vector<64x1xi1>
    %13 = vector.broadcast %12 : vector<64x1xi1> to vector<64x1xi1>
    %14 = arith.xori %10, %13 : vector<64x1xi1>
    %15 = arith.andi %14, %8 : vector<64x1xi1>
    %16 = vector.broadcast %4 : i32 to vector<64x1xi32>
    %17 = arith.addi %6, %16 : vector<64x1xi32>
    %18 = arith.select %15, %17, %6 : vector<64x1xi1>, vector<64x1xi32>
    %c9_i32 = arith.constant 9 : i32
    %19 = vector.broadcast %c9_i32 : i32 to vector<64x1xi32>
    %20 = arith.cmpi sge, %2, %19 : vector<64x1xi32>
    %c1_i32_5 = arith.constant 1 : i32
    %21 = vector.broadcast %c1_i32_5 : i32 to vector<64x1xi32>
    %22 = arith.cmpi sge, %18, %21 : vector<64x1xi32>
    %23 = arith.andi %20, %22 : vector<64x1xi1>
    %c8_i32_6 = arith.constant 8 : i32
    %24 = vector.broadcast %c8_i32_6 : i32 to vector<64x1xi32>
    %25 = arith.cmpi sge, %2, %24 : vector<64x1xi32>
    %c7_i32 = arith.constant 7 : i32
    %26 = vector.broadcast %c7_i32 : i32 to vector<64x1xi32>
    %27 = arith.cmpi sge, %2, %26 : vector<64x1xi32>
    %c7_i32_7 = arith.constant 7 : i32
    %28 = vector.broadcast %c7_i32_7 : i32 to vector<64x1xi32>
    %29 = arith.cmpi slt, %18, %28 : vector<64x1xi32>
    %30 = arith.andi %27, %29 : vector<64x1xi1>
    %c1_i32_8 = arith.constant 1 : i32
    %31 = vector.broadcast %c1_i32_8 : i32 to vector<64x1xi32>
    %32 = arith.cmpi sge, %2, %31 : vector<64x1xi32>
    %c1_i32_9 = arith.constant 1 : i32
    %33 = vector.broadcast %c1_i32_9 : i32 to vector<64x1xi32>
    %34 = arith.cmpi sge, %18, %33 : vector<64x1xi32>
    %35 = arith.andi %32, %34 : vector<64x1xi1>
    %c63_i32 = arith.constant 63 : i32
    %36 = vector.broadcast %c63_i32 : i32 to vector<64x1xi32>
    %37 = arith.cmpi slt, %2, %36 : vector<64x1xi32>
    %c7_i32_10 = arith.constant 7 : i32
    %38 = vector.broadcast %c7_i32_10 : i32 to vector<64x1xi32>
    %39 = arith.cmpi slt, %18, %38 : vector<64x1xi32>
    %40 = arith.andi %37, %39 : vector<64x1xi1>
    %c57_i32 = arith.constant 57 : i32
    %41 = vector.broadcast %c57_i32 : i32 to vector<64x1xi32>
    %42 = arith.cmpi slt, %2, %41 : vector<64x1xi32>
    %c1_i32_11 = arith.constant 1 : i32
    %43 = vector.broadcast %c1_i32_11 : i32 to vector<64x1xi32>
    %44 = arith.cmpi sge, %18, %43 : vector<64x1xi32>
    %45 = arith.andi %42, %44 : vector<64x1xi1>
    %c56_i32 = arith.constant 56 : i32
    %46 = vector.broadcast %c56_i32 : i32 to vector<64x1xi32>
    %47 = arith.cmpi slt, %2, %46 : vector<64x1xi32>
    %c55_i32 = arith.constant 55 : i32
    %48 = vector.broadcast %c55_i32 : i32 to vector<64x1xi32>
    %49 = arith.cmpi slt, %2, %48 : vector<64x1xi32>
    %c7_i32_12 = arith.constant 7 : i32
    %50 = vector.broadcast %c7_i32_12 : i32 to vector<64x1xi32>
    %51 = arith.cmpi slt, %18, %50 : vector<64x1xi32>
    %52 = arith.andi %49, %51 : vector<64x1xi1>
    %c0_13 = arith.constant 0 : index
    %c0_14 = arith.constant 0 : index
    %53 = vector.load %arg3[%c0_13, %c0_14] : memref<32x32xf32, #tpu.memory_space<vmem>>, vector<32x32xf32>
    %c0_15 = arith.constant 0 : index
    %c0_16 = arith.constant 0 : index
    %54 = vector.load %arg4[%c0_15, %c0_16] : memref<32x32xf32, #tpu.memory_space<vmem>>, vector<32x32xf32>
    %c0_17 = arith.constant 0 : index
    %c0_18 = arith.constant 0 : index
    %55 = vector.load %arg5[%c0_17, %c0_18] : memref<1x32xf32, #tpu.memory_space<vmem>>, vector<1x32xf32>
    %c0_19 = arith.constant 0 : index
    %c0_20 = arith.constant 0 : index
    %56 = vector.load %arg6[%c0_19, %c0_20] : memref<1x32xf32, #tpu.memory_space<vmem>>, vector<1x32xf32>
    %cst = arith.constant dense<0.000000e+00> : vector<32xf32>
    %57 = vector.multi_reduction <add>, %1, %cst [0] : vector<64x32xf32> to vector<32xf32>
    %58 = vector.shape_cast %57 : vector<32xf32> to vector<1x32xf32>
    %cst_21 = arith.constant dense<0.000000e+00> : vector<1x32xf32>
    %59 = tpu.matmul %58, %53, %cst_21 {dimension_numbers = #tpu.dot_dimension_numbers<[1], [0], [0], [1], [0, 0, 1, 1], [], []>} : vector<1x32xf32>, vector<32x32xf32>, vector<1x32xf32> -> vector<1x32xf32>
    %cst_22 = arith.constant 1.562500e-02 : f32
    %60 = vector.broadcast %cst_22 : f32 to vector<1x32xf32>
    %61 = arith.mulf %59, %60 : vector<1x32xf32>
    %cst_23 = arith.constant dense<0.000000e+00> : vector<1x32xf32>
    %62 = tpu.matmul %61, %54, %cst_23 {dimension_numbers = #tpu.dot_dimension_numbers<[1], [0], [0], [1], [0, 0, 1, 1], [], []>} : vector<1x32xf32>, vector<32x32xf32>, vector<1x32xf32> -> vector<1x32xf32>
    %63 = vector.broadcast %62 : vector<1x32xf32> to vector<64x32xf32>
    %64 = arith.subf %1, %63 : vector<64x32xf32>
    %65 = arith.mulf %64, %64 : vector<64x32xf32>
    %cst_24 = arith.constant dense<0.000000e+00> : vector<32xf32>
    %66 = vector.multi_reduction <add>, %65, %cst_24 [0] : vector<64x32xf32> to vector<32xf32>
    %67 = vector.shape_cast %66 : vector<32xf32> to vector<1x32xf32>
    %cst_25 = arith.constant dense<0.000000e+00> : vector<1x32xf32>
    %68 = tpu.matmul %67, %53, %cst_25 {dimension_numbers = #tpu.dot_dimension_numbers<[1], [0], [0], [1], [0, 0, 1, 1], [], []>} : vector<1x32xf32>, vector<32x32xf32>, vector<1x32xf32> -> vector<1x32xf32>
    %cst_26 = arith.constant 1.562500e-02 : f32
    %69 = vector.broadcast %cst_26 : f32 to vector<1x32xf32>
    %70 = arith.mulf %68, %69 : vector<1x32xf32>
    %cst_27 = arith.constant 9.99999974E-6 : f32
    %71 = vector.broadcast %cst_27 : f32 to vector<1x32xf32>
    %72 = arith.addf %70, %71 : vector<1x32xf32>
    %73 = math.rsqrt %72 : vector<1x32xf32>
    %cst_28 = arith.constant dense<0.000000e+00> : vector<1x32xf32>
    %74 = tpu.matmul %73, %54, %cst_28 {dimension_numbers = #tpu.dot_dimension_numbers<[1], [0], [0], [1], [0, 0, 1, 1], [], []>} : vector<1x32xf32>, vector<32x32xf32>, vector<1x32xf32> -> vector<1x32xf32>
    %75 = arith.mulf %74, %55 : vector<1x32xf32>
    %76 = vector.broadcast %75 : vector<1x32xf32> to vector<64x32xf32>
    %77 = arith.mulf %64, %76 : vector<64x32xf32>
    %78 = vector.broadcast %56 : vector<1x32xf32> to vector<64x32xf32>
    %79 = arith.addf %77, %78 : vector<64x32xf32>
    %80 = arith.negf %79 : vector<64x32xf32>
    %81 = math.exp %80 : vector<64x32xf32>
    %cst_29 = arith.constant 1.000000e+00 : f32
    %82 = vector.broadcast %cst_29 : f32 to vector<64x32xf32>
    %83 = arith.addf %82, %81 : vector<64x32xf32>
    %84 = arith.divf %82, %83 : vector<64x32xf32>
    %85 = arith.mulf %79, %84 : vector<64x32xf32>
    %c9_i32_30 = arith.constant 9 : i32
    %86 = tpu.dynamic_rotate %85 by %c9_i32_30 dim 0 : vector<64x32xf32>, i32 -> vector<64x32xf32>
    %cst_31 = arith.constant 0.000000e+00 : f32
    %87 = vector.shape_cast %23 : vector<64x1xi1> to vector<64x1xi1>
    %88 = vector.broadcast %87 : vector<64x1xi1> to vector<64x32xi1>
    %89 = vector.broadcast %cst_31 : f32 to vector<64x32xf32>
    %90 = arith.select %88, %86, %89 : vector<64x32xi1>, vector<64x32xf32>
    %91 = arith.truncf %90 : vector<64x32xf32> to vector<64x32xbf16>
    %c8_i32_32 = arith.constant 8 : i32
    %92 = tpu.dynamic_rotate %85 by %c8_i32_32 dim 0 : vector<64x32xf32>, i32 -> vector<64x32xf32>
    %cst_33 = arith.constant 0.000000e+00 : f32
    %93 = vector.shape_cast %25 : vector<64x1xi1> to vector<64x1xi1>
    %94 = vector.broadcast %93 : vector<64x1xi1> to vector<64x32xi1>
    %95 = vector.broadcast %cst_33 : f32 to vector<64x32xf32>
    %96 = arith.select %94, %92, %95 : vector<64x32xi1>, vector<64x32xf32>
    %97 = arith.truncf %96 : vector<64x32xf32> to vector<64x32xbf16>
    %c7_i32_34 = arith.constant 7 : i32
    %98 = tpu.dynamic_rotate %85 by %c7_i32_34 dim 0 : vector<64x32xf32>, i32 -> vector<64x32xf32>
    %cst_35 = arith.constant 0.000000e+00 : f32
    %99 = vector.shape_cast %30 : vector<64x1xi1> to vector<64x1xi1>
    %100 = vector.broadcast %99 : vector<64x1xi1> to vector<64x32xi1>
    %101 = vector.broadcast %cst_35 : f32 to vector<64x32xf32>
    %102 = arith.select %100, %98, %101 : vector<64x32xi1>, vector<64x32xf32>
    %103 = arith.truncf %102 : vector<64x32xf32> to vector<64x32xbf16>
    %c1_i32_36 = arith.constant 1 : i32
    %104 = tpu.dynamic_rotate %85 by %c1_i32_36 dim 0 : vector<64x32xf32>, i32 -> vector<64x32xf32>
    %cst_37 = arith.constant 0.000000e+00 : f32
    %105 = vector.shape_cast %35 : vector<64x1xi1> to vector<64x1xi1>
    %106 = vector.broadcast %105 : vector<64x1xi1> to vector<64x32xi1>
    %107 = vector.broadcast %cst_37 : f32 to vector<64x32xf32>
    %108 = arith.select %106, %104, %107 : vector<64x32xi1>, vector<64x32xf32>
    %109 = arith.truncf %108 : vector<64x32xf32> to vector<64x32xbf16>
    %110 = arith.truncf %85 : vector<64x32xf32> to vector<64x32xbf16>
    %c63_i32_38 = arith.constant 63 : i32
    %111 = tpu.dynamic_rotate %85 by %c63_i32_38 dim 0 : vector<64x32xf32>, i32 -> vector<64x32xf32>
    %cst_39 = arith.constant 0.000000e+00 : f32
    %112 = vector.shape_cast %40 : vector<64x1xi1> to vector<64x1xi1>
    %113 = vector.broadcast %112 : vector<64x1xi1> to vector<64x32xi1>
    %114 = vector.broadcast %cst_39 : f32 to vector<64x32xf32>
    %115 = arith.select %113, %111, %114 : vector<64x32xi1>, vector<64x32xf32>
    %116 = arith.truncf %115 : vector<64x32xf32> to vector<64x32xbf16>
    %c57_i32_40 = arith.constant 57 : i32
    %117 = tpu.dynamic_rotate %85 by %c57_i32_40 dim 0 : vector<64x32xf32>, i32 -> vector<64x32xf32>
    %cst_41 = arith.constant 0.000000e+00 : f32
    %118 = vector.shape_cast %45 : vector<64x1xi1> to vector<64x1xi1>
    %119 = vector.broadcast %118 : vector<64x1xi1> to vector<64x32xi1>
    %120 = vector.broadcast %cst_41 : f32 to vector<64x32xf32>
    %121 = arith.select %119, %117, %120 : vector<64x32xi1>, vector<64x32xf32>
    %122 = arith.truncf %121 : vector<64x32xf32> to vector<64x32xbf16>
    %c56_i32_42 = arith.constant 56 : i32
    %123 = tpu.dynamic_rotate %85 by %c56_i32_42 dim 0 : vector<64x32xf32>, i32 -> vector<64x32xf32>
    %cst_43 = arith.constant 0.000000e+00 : f32
    %124 = vector.shape_cast %47 : vector<64x1xi1> to vector<64x1xi1>
    %125 = vector.broadcast %124 : vector<64x1xi1> to vector<64x32xi1>
    %126 = vector.broadcast %cst_43 : f32 to vector<64x32xf32>
    %127 = arith.select %125, %123, %126 : vector<64x32xi1>, vector<64x32xf32>
    %128 = arith.truncf %127 : vector<64x32xf32> to vector<64x32xbf16>
    %c55_i32_44 = arith.constant 55 : i32
    %129 = tpu.dynamic_rotate %85 by %c55_i32_44 dim 0 : vector<64x32xf32>, i32 -> vector<64x32xf32>
    %cst_45 = arith.constant 0.000000e+00 : f32
    %130 = vector.shape_cast %52 : vector<64x1xi1> to vector<64x1xi1>
    %131 = vector.broadcast %130 : vector<64x1xi1> to vector<64x32xi1>
    %132 = vector.broadcast %cst_45 : f32 to vector<64x32xf32>
    %133 = arith.select %131, %129, %132 : vector<64x32xi1>, vector<64x32xf32>
    %134 = arith.truncf %133 : vector<64x32xf32> to vector<64x32xbf16>
    %135 = tpu.concatenate %91, %97, %103, %109, %110, %116, %122, %128, %134 in 1 : vector<64x32xbf16>, vector<64x32xbf16>, vector<64x32xbf16>, vector<64x32xbf16>, vector<64x32xbf16>, vector<64x32xbf16>, vector<64x32xbf16>, vector<64x32xbf16>, vector<64x32xbf16> -> vector<64x288xbf16>
    %c0_46 = arith.constant 0 : index
    %c0_47 = arith.constant 0 : index
    %136 = vector.load %arg7[%c0_46, %c0_47] : memref<288x64xbf16, #tpu.memory_space<vmem>>, vector<288x64xbf16>
    %cst_48 = arith.constant dense<0.000000e+00> : vector<64x64xf32>
    %137 = tpu.matmul %135, %136, %cst_48 {dimension_numbers = #tpu.dot_dimension_numbers<[1], [0], [0], [1], [0, 0, 1, 1], [], []>} : vector<64x288xbf16>, vector<288x64xbf16>, vector<64x64xf32> -> vector<64x64xf32>
    %c0_49 = arith.constant 0 : index
    %c0_50 = arith.constant 0 : index
    %138 = vector.load %arg8[%c0_49, %c0_50] : memref<1x64xf32, #tpu.memory_space<vmem>>, vector<1x64xf32>
    %139 = vector.broadcast %138 : vector<1x64xf32> to vector<64x64xf32>
    %140 = arith.addf %137, %139 : vector<64x64xf32>
    %c0_51 = arith.constant 0 : index
    %c0_52 = arith.constant 0 : index
    %c0_53 = arith.constant 0 : index
    %141 = vector.load %arg2[%c0_51, %c0_52, %c0_53] : memref<1x1x16xf32, #tpu.memory_space<vmem>>, vector<1x1x16xf32>
    %142 = vector.shape_cast %141 : vector<1x1x16xf32> to vector<1x16xf32>
    %143 = arith.negf %142 : vector<1x16xf32>
    %144 = math.exp %143 : vector<1x16xf32>
    %cst_54 = arith.constant 1.000000e+00 : f32
    %145 = vector.broadcast %cst_54 : f32 to vector<1x16xf32>
    %146 = arith.addf %145, %144 : vector<1x16xf32>
    %147 = arith.divf %145, %146 : vector<1x16xf32>
    %148 = arith.mulf %142, %147 : vector<1x16xf32>
    %c0_55 = arith.constant 0 : index
    %c0_56 = arith.constant 0 : index
    %149 = vector.load %arg9[%c0_55, %c0_56] : memref<16x64xf32, #tpu.memory_space<vmem>>, vector<16x64xf32>
    %cst_57 = arith.constant dense<0.000000e+00> : vector<1x64xf32>
    %150 = tpu.matmul %148, %149, %cst_57 {dimension_numbers = #tpu.dot_dimension_numbers<[1], [0], [0], [1], [0, 0, 1, 1], [], []>} : vector<1x16xf32>, vector<16x64xf32>, vector<1x64xf32> -> vector<1x64xf32>
    %151 = vector.broadcast %150 : vector<1x64xf32> to vector<64x64xf32>
    %152 = arith.addf %140, %151 : vector<64x64xf32>
    %c0_58 = arith.constant 0 : index
    %c0_59 = arith.constant 0 : index
    %153 = vector.load %arg10[%c0_58, %c0_59] : memref<64x32xf32, #tpu.memory_space<vmem>>, vector<64x32xf32>
    %c0_60 = arith.constant 0 : index
    %c0_61 = arith.constant 0 : index
    %154 = vector.load %arg11[%c0_60, %c0_61] : memref<32x64xf32, #tpu.memory_space<vmem>>, vector<32x64xf32>
    %c0_62 = arith.constant 0 : index
    %c0_63 = arith.constant 0 : index
    %155 = vector.load %arg12[%c0_62, %c0_63] : memref<1x64xf32, #tpu.memory_space<vmem>>, vector<1x64xf32>
    %c0_64 = arith.constant 0 : index
    %c0_65 = arith.constant 0 : index
    %156 = vector.load %arg13[%c0_64, %c0_65] : memref<1x64xf32, #tpu.memory_space<vmem>>, vector<1x64xf32>
    %cst_66 = arith.constant dense<0.000000e+00> : vector<64xf32>
    %157 = vector.multi_reduction <add>, %152, %cst_66 [0] : vector<64x64xf32> to vector<64xf32>
    %158 = vector.shape_cast %157 : vector<64xf32> to vector<1x64xf32>
    %cst_67 = arith.constant dense<0.000000e+00> : vector<1x32xf32>
    %159 = tpu.matmul %158, %153, %cst_67 {dimension_numbers = #tpu.dot_dimension_numbers<[1], [0], [0], [1], [0, 0, 1, 1], [], []>} : vector<1x64xf32>, vector<64x32xf32>, vector<1x32xf32> -> vector<1x32xf32>
    %cst_68 = arith.constant 7.812500e-03 : f32
    %160 = vector.broadcast %cst_68 : f32 to vector<1x32xf32>
    %161 = arith.mulf %159, %160 : vector<1x32xf32>
    %cst_69 = arith.constant dense<0.000000e+00> : vector<1x64xf32>
    %162 = tpu.matmul %161, %154, %cst_69 {dimension_numbers = #tpu.dot_dimension_numbers<[1], [0], [0], [1], [0, 0, 1, 1], [], []>} : vector<1x32xf32>, vector<32x64xf32>, vector<1x64xf32> -> vector<1x64xf32>
    %163 = vector.broadcast %162 : vector<1x64xf32> to vector<64x64xf32>
    %164 = arith.subf %152, %163 : vector<64x64xf32>
    %165 = arith.mulf %164, %164 : vector<64x64xf32>
    %cst_70 = arith.constant dense<0.000000e+00> : vector<64xf32>
    %166 = vector.multi_reduction <add>, %165, %cst_70 [0] : vector<64x64xf32> to vector<64xf32>
    %167 = vector.shape_cast %166 : vector<64xf32> to vector<1x64xf32>
    %cst_71 = arith.constant dense<0.000000e+00> : vector<1x32xf32>
    %168 = tpu.matmul %167, %153, %cst_71 {dimension_numbers = #tpu.dot_dimension_numbers<[1], [0], [0], [1], [0, 0, 1, 1], [], []>} : vector<1x64xf32>, vector<64x32xf32>, vector<1x32xf32> -> vector<1x32xf32>
    %cst_72 = arith.constant 7.812500e-03 : f32
    %169 = vector.broadcast %cst_72 : f32 to vector<1x32xf32>
    %170 = arith.mulf %168, %169 : vector<1x32xf32>
    %cst_73 = arith.constant 9.99999974E-6 : f32
    %171 = vector.broadcast %cst_73 : f32 to vector<1x32xf32>
    %172 = arith.addf %170, %171 : vector<1x32xf32>
    %173 = math.rsqrt %172 : vector<1x32xf32>
    %cst_74 = arith.constant dense<0.000000e+00> : vector<1x64xf32>
    %174 = tpu.matmul %173, %154, %cst_74 {dimension_numbers = #tpu.dot_dimension_numbers<[1], [0], [0], [1], [0, 0, 1, 1], [], []>} : vector<1x32xf32>, vector<32x64xf32>, vector<1x64xf32> -> vector<1x64xf32>
    %175 = arith.mulf %174, %155 : vector<1x64xf32>
    %176 = vector.broadcast %175 : vector<1x64xf32> to vector<64x64xf32>
    %177 = arith.mulf %164, %176 : vector<64x64xf32>
    %178 = vector.broadcast %156 : vector<1x64xf32> to vector<64x64xf32>
    %179 = arith.addf %177, %178 : vector<64x64xf32>
    %180 = arith.negf %179 : vector<64x64xf32>
    %181 = math.exp %180 : vector<64x64xf32>
    %cst_75 = arith.constant 1.000000e+00 : f32
    %182 = vector.broadcast %cst_75 : f32 to vector<64x64xf32>
    %183 = arith.addf %182, %181 : vector<64x64xf32>
    %184 = arith.divf %182, %183 : vector<64x64xf32>
    %185 = arith.mulf %179, %184 : vector<64x64xf32>
    %c9_i32_76 = arith.constant 9 : i32
    %186 = tpu.dynamic_rotate %185 by %c9_i32_76 dim 0 : vector<64x64xf32>, i32 -> vector<64x64xf32>
    %cst_77 = arith.constant 0.000000e+00 : f32
    %187 = vector.shape_cast %23 : vector<64x1xi1> to vector<64x1xi1>
    %188 = vector.broadcast %187 : vector<64x1xi1> to vector<64x64xi1>
    %189 = vector.broadcast %cst_77 : f32 to vector<64x64xf32>
    %190 = arith.select %188, %186, %189 : vector<64x64xi1>, vector<64x64xf32>
    %191 = arith.truncf %190 : vector<64x64xf32> to vector<64x64xbf16>
    %c8_i32_78 = arith.constant 8 : i32
    %192 = tpu.dynamic_rotate %185 by %c8_i32_78 dim 0 : vector<64x64xf32>, i32 -> vector<64x64xf32>
    %cst_79 = arith.constant 0.000000e+00 : f32
    %193 = vector.shape_cast %25 : vector<64x1xi1> to vector<64x1xi1>
    %194 = vector.broadcast %193 : vector<64x1xi1> to vector<64x64xi1>
    %195 = vector.broadcast %cst_79 : f32 to vector<64x64xf32>
    %196 = arith.select %194, %192, %195 : vector<64x64xi1>, vector<64x64xf32>
    %197 = arith.truncf %196 : vector<64x64xf32> to vector<64x64xbf16>
    %c7_i32_80 = arith.constant 7 : i32
    %198 = tpu.dynamic_rotate %185 by %c7_i32_80 dim 0 : vector<64x64xf32>, i32 -> vector<64x64xf32>
    %cst_81 = arith.constant 0.000000e+00 : f32
    %199 = vector.shape_cast %30 : vector<64x1xi1> to vector<64x1xi1>
    %200 = vector.broadcast %199 : vector<64x1xi1> to vector<64x64xi1>
    %201 = vector.broadcast %cst_81 : f32 to vector<64x64xf32>
    %202 = arith.select %200, %198, %201 : vector<64x64xi1>, vector<64x64xf32>
    %203 = arith.truncf %202 : vector<64x64xf32> to vector<64x64xbf16>
    %c1_i32_82 = arith.constant 1 : i32
    %204 = tpu.dynamic_rotate %185 by %c1_i32_82 dim 0 : vector<64x64xf32>, i32 -> vector<64x64xf32>
    %cst_83 = arith.constant 0.000000e+00 : f32
    %205 = vector.shape_cast %35 : vector<64x1xi1> to vector<64x1xi1>
    %206 = vector.broadcast %205 : vector<64x1xi1> to vector<64x64xi1>
    %207 = vector.broadcast %cst_83 : f32 to vector<64x64xf32>
    %208 = arith.select %206, %204, %207 : vector<64x64xi1>, vector<64x64xf32>
    %209 = arith.truncf %208 : vector<64x64xf32> to vector<64x64xbf16>
    %210 = arith.truncf %185 : vector<64x64xf32> to vector<64x64xbf16>
    %c63_i32_84 = arith.constant 63 : i32
    %211 = tpu.dynamic_rotate %185 by %c63_i32_84 dim 0 : vector<64x64xf32>, i32 -> vector<64x64xf32>
    %cst_85 = arith.constant 0.000000e+00 : f32
    %212 = vector.shape_cast %40 : vector<64x1xi1> to vector<64x1xi1>
    %213 = vector.broadcast %212 : vector<64x1xi1> to vector<64x64xi1>
    %214 = vector.broadcast %cst_85 : f32 to vector<64x64xf32>
    %215 = arith.select %213, %211, %214 : vector<64x64xi1>, vector<64x64xf32>
    %216 = arith.truncf %215 : vector<64x64xf32> to vector<64x64xbf16>
    %c57_i32_86 = arith.constant 57 : i32
    %217 = tpu.dynamic_rotate %185 by %c57_i32_86 dim 0 : vector<64x64xf32>, i32 -> vector<64x64xf32>
    %cst_87 = arith.constant 0.000000e+00 : f32
    %218 = vector.shape_cast %45 : vector<64x1xi1> to vector<64x1xi1>
    %219 = vector.broadcast %218 : vector<64x1xi1> to vector<64x64xi1>
    %220 = vector.broadcast %cst_87 : f32 to vector<64x64xf32>
    %221 = arith.select %219, %217, %220 : vector<64x64xi1>, vector<64x64xf32>
    %222 = arith.truncf %221 : vector<64x64xf32> to vector<64x64xbf16>
    %c56_i32_88 = arith.constant 56 : i32
    %223 = tpu.dynamic_rotate %185 by %c56_i32_88 dim 0 : vector<64x64xf32>, i32 -> vector<64x64xf32>
    %cst_89 = arith.constant 0.000000e+00 : f32
    %224 = vector.shape_cast %47 : vector<64x1xi1> to vector<64x1xi1>
    %225 = vector.broadcast %224 : vector<64x1xi1> to vector<64x64xi1>
    %226 = vector.broadcast %cst_89 : f32 to vector<64x64xf32>
    %227 = arith.select %225, %223, %226 : vector<64x64xi1>, vector<64x64xf32>
    %228 = arith.truncf %227 : vector<64x64xf32> to vector<64x64xbf16>
    %c55_i32_90 = arith.constant 55 : i32
    %229 = tpu.dynamic_rotate %185 by %c55_i32_90 dim 0 : vector<64x64xf32>, i32 -> vector<64x64xf32>
    %cst_91 = arith.constant 0.000000e+00 : f32
    %230 = vector.shape_cast %52 : vector<64x1xi1> to vector<64x1xi1>
    %231 = vector.broadcast %230 : vector<64x1xi1> to vector<64x64xi1>
    %232 = vector.broadcast %cst_91 : f32 to vector<64x64xf32>
    %233 = arith.select %231, %229, %232 : vector<64x64xi1>, vector<64x64xf32>
    %234 = arith.truncf %233 : vector<64x64xf32> to vector<64x64xbf16>
    %235 = tpu.concatenate %191, %197, %203, %209, %210, %216, %222, %228, %234 in 1 : vector<64x64xbf16>, vector<64x64xbf16>, vector<64x64xbf16>, vector<64x64xbf16>, vector<64x64xbf16>, vector<64x64xbf16>, vector<64x64xbf16>, vector<64x64xbf16>, vector<64x64xbf16> -> vector<64x576xbf16>
    %c0_92 = arith.constant 0 : index
    %c0_93 = arith.constant 0 : index
    %236 = vector.load %arg14[%c0_92, %c0_93] : memref<576x64xbf16, #tpu.memory_space<vmem>>, vector<576x64xbf16>
    %cst_94 = arith.constant dense<0.000000e+00> : vector<64x64xf32>
    %237 = tpu.matmul %235, %236, %cst_94 {dimension_numbers = #tpu.dot_dimension_numbers<[1], [0], [0], [1], [0, 0, 1, 1], [], []>} : vector<64x576xbf16>, vector<576x64xbf16>, vector<64x64xf32> -> vector<64x64xf32>
    %c0_95 = arith.constant 0 : index
    %c0_96 = arith.constant 0 : index
    %238 = vector.load %arg15[%c0_95, %c0_96] : memref<1x64xf32, #tpu.memory_space<vmem>>, vector<1x64xf32>
    %239 = vector.broadcast %238 : vector<1x64xf32> to vector<64x64xf32>
    %240 = arith.addf %237, %239 : vector<64x64xf32>
    %241 = arith.truncf %1 : vector<64x32xf32> to vector<64x32xbf16>
    %c0_97 = arith.constant 0 : index
    %c0_98 = arith.constant 0 : index
    %242 = vector.load %arg16[%c0_97, %c0_98] : memref<32x64xbf16, #tpu.memory_space<vmem>>, vector<32x64xbf16>
    %cst_99 = arith.constant dense<0.000000e+00> : vector<64x64xf32>
    %243 = tpu.matmul %241, %242, %cst_99 {dimension_numbers = #tpu.dot_dimension_numbers<[1], [0], [0], [1], [0, 0, 1, 1], [], []>} : vector<64x32xbf16>, vector<32x64xbf16>, vector<64x64xf32> -> vector<64x64xf32>
    %c0_100 = arith.constant 0 : index
    %c0_101 = arith.constant 0 : index
    %244 = vector.load %arg17[%c0_100, %c0_101] : memref<1x64xf32, #tpu.memory_space<vmem>>, vector<1x64xf32>
    %245 = vector.broadcast %244 : vector<1x64xf32> to vector<64x64xf32>
    %246 = arith.addf %243, %245 : vector<64x64xf32>
    %247 = arith.addf %240, %246 : vector<64x64xf32>
    %c0_102 = arith.constant 0 : index
    %c0_103 = arith.constant 0 : index
    %248 = vector.load %arg10[%c0_102, %c0_103] : memref<64x32xf32, #tpu.memory_space<vmem>>, vector<64x32xf32>
    %c0_104 = arith.constant 0 : index
    %c0_105 = arith.constant 0 : index
    %249 = vector.load %arg11[%c0_104, %c0_105] : memref<32x64xf32, #tpu.memory_space<vmem>>, vector<32x64xf32>
    %c0_106 = arith.constant 0 : index
    %c0_107 = arith.constant 0 : index
    %250 = vector.load %arg18[%c0_106, %c0_107] : memref<1x64xf32, #tpu.memory_space<vmem>>, vector<1x64xf32>
    %c0_108 = arith.constant 0 : index
    %c0_109 = arith.constant 0 : index
    %251 = vector.load %arg19[%c0_108, %c0_109] : memref<1x64xf32, #tpu.memory_space<vmem>>, vector<1x64xf32>
    %cst_110 = arith.constant dense<0.000000e+00> : vector<64xf32>
    %252 = vector.multi_reduction <add>, %247, %cst_110 [0] : vector<64x64xf32> to vector<64xf32>
    %253 = vector.shape_cast %252 : vector<64xf32> to vector<1x64xf32>
    %cst_111 = arith.constant dense<0.000000e+00> : vector<1x32xf32>
    %254 = tpu.matmul %253, %248, %cst_111 {dimension_numbers = #tpu.dot_dimension_numbers<[1], [0], [0], [1], [0, 0, 1, 1], [], []>} : vector<1x64xf32>, vector<64x32xf32>, vector<1x32xf32> -> vector<1x32xf32>
    %cst_112 = arith.constant 7.812500e-03 : f32
    %255 = vector.broadcast %cst_112 : f32 to vector<1x32xf32>
    %256 = arith.mulf %254, %255 : vector<1x32xf32>
    %cst_113 = arith.constant dense<0.000000e+00> : vector<1x64xf32>
    %257 = tpu.matmul %256, %249, %cst_113 {dimension_numbers = #tpu.dot_dimension_numbers<[1], [0], [0], [1], [0, 0, 1, 1], [], []>} : vector<1x32xf32>, vector<32x64xf32>, vector<1x64xf32> -> vector<1x64xf32>
    %258 = vector.broadcast %257 : vector<1x64xf32> to vector<64x64xf32>
    %259 = arith.subf %247, %258 : vector<64x64xf32>
    %260 = arith.mulf %259, %259 : vector<64x64xf32>
    %cst_114 = arith.constant dense<0.000000e+00> : vector<64xf32>
    %261 = vector.multi_reduction <add>, %260, %cst_114 [0] : vector<64x64xf32> to vector<64xf32>
    %262 = vector.shape_cast %261 : vector<64xf32> to vector<1x64xf32>
    %cst_115 = arith.constant dense<0.000000e+00> : vector<1x32xf32>
    %263 = tpu.matmul %262, %248, %cst_115 {dimension_numbers = #tpu.dot_dimension_numbers<[1], [0], [0], [1], [0, 0, 1, 1], [], []>} : vector<1x64xf32>, vector<64x32xf32>, vector<1x32xf32> -> vector<1x32xf32>
    %cst_116 = arith.constant 7.812500e-03 : f32
    %264 = vector.broadcast %cst_116 : f32 to vector<1x32xf32>
    %265 = arith.mulf %263, %264 : vector<1x32xf32>
    %cst_117 = arith.constant 9.99999974E-6 : f32
    %266 = vector.broadcast %cst_117 : f32 to vector<1x32xf32>
    %267 = arith.addf %265, %266 : vector<1x32xf32>
    %268 = math.rsqrt %267 : vector<1x32xf32>
    %cst_118 = arith.constant dense<0.000000e+00> : vector<1x64xf32>
    %269 = tpu.matmul %268, %249, %cst_118 {dimension_numbers = #tpu.dot_dimension_numbers<[1], [0], [0], [1], [0, 0, 1, 1], [], []>} : vector<1x32xf32>, vector<32x64xf32>, vector<1x64xf32> -> vector<1x64xf32>
    %270 = arith.mulf %269, %250 : vector<1x64xf32>
    %271 = vector.broadcast %270 : vector<1x64xf32> to vector<64x64xf32>
    %272 = arith.mulf %259, %271 : vector<64x64xf32>
    %273 = vector.broadcast %251 : vector<1x64xf32> to vector<64x64xf32>
    %274 = arith.addf %272, %273 : vector<64x64xf32>
    %275 = arith.truncf %274 : vector<64x64xf32> to vector<64x64xbf16>
    %c0_119 = arith.constant 0 : index
    %c0_120 = arith.constant 0 : index
    %276 = vector.load %arg20[%c0_119, %c0_120] : memref<64x192xbf16, #tpu.memory_space<vmem>>, vector<64x192xbf16>
    %cst_121 = arith.constant dense<0.000000e+00> : vector<64x192xf32>
    %277 = tpu.matmul %275, %276, %cst_121 {dimension_numbers = #tpu.dot_dimension_numbers<[1], [0], [0], [1], [0, 0, 1, 1], [], []>} : vector<64x64xbf16>, vector<64x192xbf16>, vector<64x192xf32> -> vector<64x192xf32>
    %c0_122 = arith.constant 0 : index
    %c0_123 = arith.constant 0 : index
    %278 = vector.load %arg21[%c0_122, %c0_123] : memref<1x192xf32, #tpu.memory_space<vmem>>, vector<1x192xf32>
    %279 = vector.broadcast %278 : vector<1x192xf32> to vector<64x192xf32>
    %280 = arith.addf %277, %279 : vector<64x192xf32>
    %c0_124 = arith.constant 0 : index
    %c0_125 = arith.constant 0 : index
    %281 = vector.load %arg22[%c0_124, %c0_125] : memref<64x64xbf16, #tpu.memory_space<vmem>>, vector<64x64xbf16>
    %cst_126 = arith.constant 0.000000e+00 : f32
    %282 = vector.broadcast %cst_126 : f32 to vector<64x64xf32>
    %283 = vector.extract_strided_slice %280 {offsets = [0, 0], sizes = [64, 64], strides = [1, 1]} : vector<64x192xf32> to vector<64x64xf32>
    %cst_127 = arith.constant 1.250000e-01 : f32
    %284 = vector.broadcast %cst_127 : f32 to vector<64x64xf32>
    %285 = arith.mulf %283, %284 : vector<64x64xf32>
    %286 = arith.truncf %285 : vector<64x64xf32> to vector<64x64xbf16>
    %287 = vector.extract_strided_slice %280 {offsets = [0, 64], sizes = [64, 64], strides = [1, 1]} : vector<64x192xf32> to vector<64x64xf32>
    %288 = arith.truncf %287 : vector<64x64xf32> to vector<64x64xbf16>
    %289 = vector.extract_strided_slice %280 {offsets = [0, 128], sizes = [64, 64], strides = [1, 1]} : vector<64x192xf32> to vector<64x64xf32>
    %290 = arith.truncf %289 : vector<64x64xf32> to vector<64x64xbf16>
    %cst_128 = arith.constant dense<0.000000e+00> : vector<64x64xf32>
    %291 = tpu.matmul %286, %288, %cst_128 {dimension_numbers = #tpu.dot_dimension_numbers<[1], [1], [0], [0], [0, 0, 1, 0], [], []>} : vector<64x64xbf16>, vector<64x64xbf16>, vector<64x64xf32> -> vector<64x64xf32>
    %cst_129 = arith.constant dense<0xFF800000> : vector<64xf32>
    %292 = vector.multi_reduction <maximumf>, %291, %cst_129 [1] : vector<64x64xf32> to vector<64xf32>
    %293 = vector.shape_cast %292 : vector<64xf32> to vector<64x1xf32>
    %294 = vector.broadcast %293 : vector<64x1xf32> to vector<64x64xf32>
    %295 = arith.subf %291, %294 : vector<64x64xf32>
    %296 = math.exp %295 : vector<64x64xf32>
    %cst_130 = arith.constant dense<0.000000e+00> : vector<64xf32>
    %297 = vector.multi_reduction <add>, %296, %cst_130 [1] : vector<64x64xf32> to vector<64xf32>
    %298 = vector.shape_cast %297 : vector<64xf32> to vector<64x1xf32>
    %299 = tpu.reciprocal %298 {approx = true} : vector<64x1xf32> -> vector<64x1xf32>
    %300 = vector.broadcast %299 : vector<64x1xf32> to vector<64x64xf32>
    %301 = arith.mulf %296, %300 : vector<64x64xf32>
    %302 = arith.truncf %301 : vector<64x64xf32> to vector<64x64xbf16>
    %cst_131 = arith.constant dense<0.000000e+00> : vector<64x64xf32>
    %303 = tpu.matmul %302, %290, %cst_131 {dimension_numbers = #tpu.dot_dimension_numbers<[1], [0], [0], [1], [0, 0, 1, 1], [], []>} : vector<64x64xbf16>, vector<64x64xbf16>, vector<64x64xf32> -> vector<64x64xf32>
    %304 = arith.truncf %303 : vector<64x64xf32> to vector<64x64xbf16>
    %cst_132 = arith.constant dense<0.000000e+00> : vector<64x64xf32>
    %305 = tpu.matmul %304, %281, %cst_132 {dimension_numbers = #tpu.dot_dimension_numbers<[1], [0], [0], [1], [0, 0, 1, 1], [], []>} : vector<64x64xbf16>, vector<64x64xbf16>, vector<64x64xf32> -> vector<64x64xf32>
    %306 = arith.addf %282, %305 : vector<64x64xf32>
    %c0_133 = arith.constant 0 : index
    %c0_134 = arith.constant 0 : index
    %307 = vector.load %arg23[%c0_133, %c0_134] : memref<1x64xf32, #tpu.memory_space<vmem>>, vector<1x64xf32>
    %308 = vector.broadcast %307 : vector<1x64xf32> to vector<64x64xf32>
    %309 = arith.addf %306, %308 : vector<64x64xf32>
    %310 = arith.addf %309, %247 : vector<64x64xf32>
    %c0_135 = arith.constant 0 : index
    %c0_136 = arith.constant 0 : index
    %c0_137 = arith.constant 0 : index
    %311 = vector.load %arg24[%c0_135, %c0_136, %c0_137] : memref<1x64x64xf32, #tpu.memory_space<vmem>>, vector<1x64x64xf32>
    %312 = vector.shape_cast %311 : vector<1x64x64xf32> to vector<64x64xf32>
    %313 = vector.shape_cast %310 : vector<64x64xf32> to vector<1x64x64xf32>
    tpu.vector_store %arg24[%c0_135, %c0_136, %c0_137], %313 {strides = array<i32>} : memref<1x64x64xf32, #tpu.memory_space<vmem>>, vector<1x64x64xf32>,
    return
  }
  func.func @transform_0(%arg0: i32) -> (i32, i32, i32) {
    %c0_i32 = arith.constant 0 : i32
    %c0_i32_0 = arith.constant 0 : i32
    %c0_i32_1 = arith.constant 0 : i32
    return %arg0, %c0_i32, %c0_i32_0 : i32, i32, i32
  }
  func.func @transform_1(%arg0: i32) -> (i32, i32, i32) {
    %c0_i32 = arith.constant 0 : i32
    %c0_i32_0 = arith.constant 0 : i32
    %c0_i32_1 = arith.constant 0 : i32
    return %arg0, %c0_i32, %c0_i32_0 : i32, i32, i32
  }
  func.func @transform_2(%arg0: i32) -> (i32, i32) {
    %c0_i32 = arith.constant 0 : i32
    %c0_i32_0 = arith.constant 0 : i32
    %c0_i32_1 = arith.constant 0 : i32
    return %c0_i32, %c0_i32_0 : i32, i32
  }
  func.func @transform_3(%arg0: i32) -> (i32, i32) {
    %c0_i32 = arith.constant 0 : i32
    %c0_i32_0 = arith.constant 0 : i32
    %c0_i32_1 = arith.constant 0 : i32
    return %c0_i32, %c0_i32_0 : i32, i32
  }
  func.func @transform_4(%arg0: i32) -> (i32, i32) {
    %c0_i32 = arith.constant 0 : i32
    %c0_i32_0 = arith.constant 0 : i32
    %c0_i32_1 = arith.constant 0 : i32
    return %c0_i32, %c0_i32_0 : i32, i32
  }
  func.func @transform_5(%arg0: i32) -> (i32, i32) {
    %c0_i32 = arith.constant 0 : i32
    %c0_i32_0 = arith.constant 0 : i32
    %c0_i32_1 = arith.constant 0 : i32
    return %c0_i32, %c0_i32_0 : i32, i32
  }
  func.func @transform_6(%arg0: i32) -> (i32, i32) {
    %c0_i32 = arith.constant 0 : i32
    %c0_i32_0 = arith.constant 0 : i32
    %c0_i32_1 = arith.constant 0 : i32
    return %c0_i32, %c0_i32_0 : i32, i32
  }
  func.func @transform_7(%arg0: i32) -> (i32, i32) {
    %c0_i32 = arith.constant 0 : i32
    %c0_i32_0 = arith.constant 0 : i32
    %c0_i32_1 = arith.constant 0 : i32
    return %c0_i32, %c0_i32_0 : i32, i32
  }
  func.func @transform_8(%arg0: i32) -> (i32, i32) {
    %c0_i32 = arith.constant 0 : i32
    %c0_i32_0 = arith.constant 0 : i32
    %c0_i32_1 = arith.constant 0 : i32
    return %c0_i32, %c0_i32_0 : i32, i32
  }
  func.func @transform_9(%arg0: i32) -> (i32, i32) {
    %c0_i32 = arith.constant 0 : i32
    %c0_i32_0 = arith.constant 0 : i32
    %c0_i32_1 = arith.constant 0 : i32
    return %c0_i32, %c0_i32_0 : i32, i32
  }
  func.func @transform_10(%arg0: i32) -> (i32, i32) {
    %c0_i32 = arith.constant 0 : i32
    %c0_i32_0 = arith.constant 0 : i32
    %c0_i32_1 = arith.constant 0 : i32
    return %c0_i32, %c0_i32_0 : i32, i32
  }
  func.func @transform_11(%arg0: i32) -> (i32, i32) {
    %c0_i32 = arith.constant 0 : i32
    %c0_i32_0 = arith.constant 0 : i32
    %c0_i32_1 = arith.constant 0 : i32
    return %c0_i32, %c0_i32_0 : i32, i32
  }
  func.func @transform_12(%arg0: i32) -> (i32, i32) {
    %c0_i32 = arith.constant 0 : i32
    %c0_i32_0 = arith.constant 0 : i32
    %c0_i32_1 = arith.constant 0 : i32
    return %c0_i32, %c0_i32_0 : i32, i32
  }
  func.func @transform_13(%arg0: i32) -> (i32, i32) {
    %c0_i32 = arith.constant 0 : i32
    %c0_i32_0 = arith.constant 0 : i32
    %c0_i32_1 = arith.constant 0 : i32
    return %c0_i32, %c0_i32_0 : i32, i32
  }
  func.func @transform_14(%arg0: i32) -> (i32, i32) {
    %c0_i32 = arith.constant 0 : i32
    %c0_i32_0 = arith.constant 0 : i32
    %c0_i32_1 = arith.constant 0 : i32
    return %c0_i32, %c0_i32_0 : i32, i32
  }
  func.func @transform_15(%arg0: i32) -> (i32, i32) {
    %c0_i32 = arith.constant 0 : i32
    %c0_i32_0 = arith.constant 0 : i32
    %c0_i32_1 = arith.constant 0 : i32
    return %c0_i32, %c0_i32_0 : i32, i32
  }
  func.func @transform_16(%arg0: i32) -> (i32, i32) {
    %c0_i32 = arith.constant 0 : i32
    %c0_i32_0 = arith.constant 0 : i32
    %c0_i32_1 = arith.constant 0 : i32
    return %c0_i32, %c0_i32_0 : i32, i32
  }
  func.func @transform_17(%arg0: i32) -> (i32, i32) {
    %c0_i32 = arith.constant 0 : i32
    %c0_i32_0 = arith.constant 0 : i32
    %c0_i32_1 = arith.constant 0 : i32
    return %c0_i32, %c0_i32_0 : i32, i32
  }
  func.func @transform_18(%arg0: i32) -> (i32, i32) {
    %c0_i32 = arith.constant 0 : i32
    %c0_i32_0 = arith.constant 0 : i32
    %c0_i32_1 = arith.constant 0 : i32
    return %c0_i32, %c0_i32_0 : i32, i32
  }
  func.func @transform_19(%arg0: i32) -> (i32, i32) {
    %c0_i32 = arith.constant 0 : i32
    %c0_i32_0 = arith.constant 0 : i32
    %c0_i32_1 = arith.constant 0 : i32
    return %c0_i32, %c0_i32_0 : i32, i32
  }
  func.func @transform_20(%arg0: i32) -> (i32, i32) {
    %c0_i32 = arith.constant 0 : i32
    %c0_i32_0 = arith.constant 0 : i32
    %c0_i32_1 = arith.constant 0 : i32
    return %c0_i32, %c0_i32_0 : i32, i32
  }
  func.func @transform_21(%arg0: i32) -> (i32, i32) {
    %c0_i32 = arith.constant 0 : i32
    %c0_i32_0 = arith.constant 0 : i32
    %c0_i32_1 = arith.constant 0 : i32
    return %c0_i32, %c0_i32_0 : i32, i32
  }
  func.func @transform_22(%arg0: i32) -> (i32, i32) {
    %c0_i32 = arith.constant 0 : i32
    %c0_i32_0 = arith.constant 0 : i32
    %c0_i32_1 = arith.constant 0 : i32
    return %c0_i32, %c0_i32_0 : i32, i32
  }
  func.func @transform_23(%arg0: i32) -> (i32, i32, i32) {
    %c0_i32 = arith.constant 0 : i32
    %c0_i32_0 = arith.constant 0 : i32
    %c0_i32_1 = arith.constant 0 : i32
    return %arg0, %c0_i32, %c0_i32_0 : i32, i32, i32
  }
}

</mosaic_0001>

<llo_original>
// kernel: tpu_custom_call.1
$region0: #{tpu_custom_call.1}
  #allocation0 [shape = 'u32[]', space=smem, size = 0x4, offset = 0x4, fixed_abs, tag = 'smem constant byte address 0x4 - core index']
  #allocation1 [shape = 'u32[144,128]{1,0:T(1,128)}', space=vmem, size = 0x12000, scoped, tag = 'internal scratch']
  %s0 = inlined_call_operand.vmem [shape: f32[2,64,32], index: 0, kind: input, shape index: {}]
  %s1 = inlined_call_operand.vmem [shape: f32[2,1,16], index: 1, kind: input, shape index: {}]
  %s2 = inlined_call_operand.vmem [shape: f32[32,32], index: 2, kind: input, shape index: {}]
  %s3 = inlined_call_operand.vmem [shape: f32[32,32], index: 3, kind: input, shape index: {}]
  %s4 = inlined_call_operand.vmem [shape: f32[1,32], index: 4, kind: input, shape index: {}]
  %s5 = inlined_call_operand.vmem [shape: f32[1,32], index: 5, kind: input, shape index: {}]
  %s6 = inlined_call_operand.vmem [shape: bf16[288,64], index: 6, kind: input, shape index: {}]
  %s7 = inlined_call_operand.vmem [shape: f32[1,64], index: 7, kind: input, shape index: {}]
  %s8 = inlined_call_operand.vmem [shape: f32[16,64], index: 8, kind: input, shape index: {}]
  %s9 = inlined_call_operand.vmem [shape: f32[64,32], index: 9, kind: input, shape index: {}]
  %s10 = inlined_call_operand.vmem [shape: f32[32,64], index: 10, kind: input, shape index: {}]
  %s11 = inlined_call_operand.vmem [shape: f32[1,64], index: 11, kind: input, shape index: {}]
  %s12 = inlined_call_operand.vmem [shape: f32[1,64], index: 12, kind: input, shape index: {}]
  %s13 = inlined_call_operand.vmem [shape: bf16[576,64], index: 13, kind: input, shape index: {}]
  %s14 = inlined_call_operand.vmem [shape: f32[1,64], index: 14, kind: input, shape index: {}]
  %s15 = inlined_call_operand.vmem [shape: bf16[32,64], index: 15, kind: input, shape index: {}]
  %s16 = inlined_call_operand.vmem [shape: f32[1,64], index: 16, kind: input, shape index: {}]
  %s17 = inlined_call_operand.vmem [shape: f32[1,64], index: 17, kind: input, shape index: {}]
  %s18 = inlined_call_operand.vmem [shape: f32[1,64], index: 18, kind: input, shape index: {}]
  %s19 = inlined_call_operand.vmem [shape: bf16[64,192], index: 19, kind: input, shape index: {}]
  %s20 = inlined_call_operand.vmem [shape: f32[1,192], index: 20, kind: input, shape index: {}]
  %s21 = inlined_call_operand.vmem [shape: bf16[64,64], index: 21, kind: input, shape index: {}]
  %s22 = inlined_call_operand.vmem [shape: f32[1,64], index: 22, kind: input, shape index: {}]
  %s23 = inlined_call_operand.hbm [shape: f32[2,64,64], index: 23, kind: output, shape index: {}]
  %s24 = sld [smem:[#allocation0]]
  $region125: #{tpu_custom_call.1} parent=0
    _
  %s26 = ssub.s32 1, %s24
  %s27 = scalar_select 0, %s26, %s24
  $region1: #{tpu_custom_call.1} parent=0
    #allocation2 [shape = 'u8[65536]{0}', space=vmem, size = 0x10000, scoped, tag = 'output window, operand 0']
    #allocation3 [shape = 's32[2]{0}', space=sflag, size = 0x8, scoped, tag = 'scoped memory for tpu_custom_call.1']
    %28 = vsyncpa [#allocation3], 0
    %s29 = scalar_lea.sflag [#allocation3], 1
    %30 = vsyncpa %s29, 0
    loop: start=0, step=1, limit=4
    $region2: #{tpu_custom_call.1} parent=1 // loop_pre_header
      _
    $region3: #{tpu_custom_call.1} parent=1 // loop_header
      %s32 = sphi 0, %s36
      %p33 = scmp.ge.s32.totalorder %s32, 4
      %s42 = sphi 0, %s44
      %s45 = sphi 0, %s42
      %s46 = sphi 0, %s45
      %s62 = sphi 0, %s46
      %s68 = sphi 0, %s70
      %s71 = sphi 0, %s68
      %s72 = sphi 0, %s71
      %s88 = sphi 0, %s72
      %s92 = sphi 0, %s92
      %s94 = sphi 0, %s92
      %s95 = sphi 0, %s94
      %s109 = sphi 0, %s95
      %s113 = sphi 0, %s113
      %s115 = sphi 0, %s113
      %s116 = sphi 0, %s115
      %s130 = sphi 0, %s116
      %s134 = sphi 0, %s134
      %s136 = sphi 0, %s134
      %s137 = sphi 0, %s136
      %s151 = sphi 0, %s137
      %s155 = sphi 0, %s155
      %s157 = sphi 0, %s155
      %s158 = sphi 0, %s157
      %s172 = sphi 0, %s158
      %s176 = sphi 0, %s176
      %s178 = sphi 0, %s176
      %s179 = sphi 0, %s178
      %s193 = sphi 0, %s179
      %s197 = sphi 0, %s197
      %s199 = sphi 0, %s197
      %s200 = sphi 0, %s199
      %s214 = sphi 0, %s200
      %s218 = sphi 0, %s218
      %s220 = sphi 0, %s218
      %s221 = sphi 0, %s220
      %s235 = sphi 0, %s221
      %s239 = sphi 0, %s239
      %s241 = sphi 0, %s239
      %s242 = sphi 0, %s241
      %s256 = sphi 0, %s242
      %s260 = sphi 0, %s260
      %s262 = sphi 0, %s260
      %s263 = sphi 0, %s262
      %s277 = sphi 0, %s263
      %s281 = sphi 0, %s281
      %s283 = sphi 0, %s281
      %s284 = sphi 0, %s283
      %s298 = sphi 0, %s284
      %s302 = sphi 0, %s302
      %s304 = sphi 0, %s302
      %s305 = sphi 0, %s304
      %s319 = sphi 0, %s305
      %s323 = sphi 0, %s323
      %s325 = sphi 0, %s323
      %s326 = sphi 0, %s325
      %s340 = sphi 0, %s326
      %s344 = sphi 0, %s344
      %s346 = sphi 0, %s344
      %s347 = sphi 0, %s346
      %s361 = sphi 0, %s347
      %s365 = sphi 0, %s365
      %s367 = sphi 0, %s365
      %s368 = sphi 0, %s367
      %s382 = sphi 0, %s368
      %s386 = sphi 0, %s386
      %s388 = sphi 0, %s386
      %s389 = sphi 0, %s388
      %s403 = sphi 0, %s389
      %s407 = sphi 0, %s407
      %s409 = sphi 0, %s407
      %s410 = sphi 0, %s409
      %s424 = sphi 0, %s410
      %s428 = sphi 0, %s428
      %s430 = sphi 0, %s428
      %s431 = sphi 0, %s430
      %s445 = sphi 0, %s431
      %s449 = sphi 0, %s449
      %s451 = sphi 0, %s449
      %s452 = sphi 0, %s451
      %s466 = sphi 0, %s452
      %s470 = sphi 0, %s470
      %s472 = sphi 0, %s470
      %s473 = sphi 0, %s472
      %s487 = sphi 0, %s473
      %s491 = sphi 0, %s491
      %s493 = sphi 0, %s491
      %s494 = sphi 0, %s493
      %s508 = sphi 0, %s494
      %s512 = sphi 0, %s512
      %s514 = sphi 0, %s512
      %s515 = sphi 0, %s514
      %s529 = sphi 0, %s515
      %s535 = sphi 0, %s537
      %s538 = sphi 0, %s535
      %s539 = sphi 0, %s538
      %s555 = sphi 0, %s539
    $region4: #{tpu_custom_call.1} parent=1 // loop_header_branch
      %35 = sbr.rel (%p33) target = $region8
    $region5: #{tpu_custom_call.1} parent=1 // loop_body
      %s37 = ssub.s32 %s32, 1
      %s38 = ssub.s32 %s32, 2
      %s39 = sadd.s32 %s32, 1
      %s40 = ssub.s32 %s32, %s39
      %p41 = scmp.eq.s32.totalorder %s40, 0
      %s43 = sadd.s32 %s42, 1
      %s44 = scalar_select %p41, %s42, %s43
      %p47 = pneg %p41
      %p48 = scmp.eq.s32.totalorder %s32, 1
      %p49 = por %p47, %p48
      %p50 = scmp.ne.s32.totalorder %s42, %s45
      %p51 = scmp.eq.s32.totalorder %s32, 0
      %p52 = por %p50, %p51
      %p53 = scmp.ne.s32.totalorder %s42, %s45
      %p54 = scmp.eq.s32.totalorder %s37, 1
      %p55 = por %p53, %p54
      %p56 = scmp.ne.s32.totalorder %s45, %s46
      %p57 = scmp.eq.s32.totalorder %s37, 0
      %p58 = por %p56, %p57
      %p59 = scmp.ne.s32.totalorder %s45, %s46
      %p60 = scmp.eq.s32.totalorder %s38, 1
      %p61 = por %p59, %p60
      %p63 = scmp.ne.s32.totalorder %s46, %s62
      %p64 = scmp.eq.s32.totalorder %s38, 0
      %p65 = por %p63, %p64
      %s66 = ssub.s32 %s32, %s39
      %p67 = scmp.eq.s32.totalorder %s66, 0
      %s69 = sadd.s32 %s68, 1
      %s70 = scalar_select %p67, %s68, %s69
      %p73 = pneg %p67
      %p74 = scmp.eq.s32.totalorder %s32, 1
      %p75 = por %p73, %p74
      %p76 = scmp.ne.s32.totalorder %s68, %s71
      %p77 = scmp.eq.s32.totalorder %s32, 0
      %p78 = por %p76, %p77
      %p79 = scmp.ne.s32.totalorder %s68, %s71
      %p80 = scmp.eq.s32.totalorder %s37, 1
      %p81 = por %p79, %p80
      %p82 = scmp.ne.s32.totalorder %s71, %s72
      %p83 = scmp.eq.s32.totalorder %s37, 0
      %p84 = por %p82, %p83
      %p85 = scmp.ne.s32.totalorder %s71, %s72
      %p86 = scmp.eq.s32.totalorder %s38, 1
      %p87 = por %p85, %p86
      %p89 = scmp.ne.s32.totalorder %s72, %s88
      %p90 = scmp.eq.s32.totalorder %s38, 0
      %p91 = por %p89, %p90
      %s93 = sadd.s32 %s92, 1
      %p96 = scmp.eq.s32.totalorder %s32, 1
      %p97 = scmp.ne.s32.totalorder %s92, %s94
      %p98 = scmp.eq.s32.totalorder %s32, 0
      %p99 = por %p97, %p98
      %p100 = scmp.ne.s32.totalorder %s92, %s94
      %p101 = scmp.eq.s32.totalorder %s37, 1
      %p102 = por %p100, %p101
      %p103 = scmp.ne.s32.totalorder %s94, %s95
      %p104 = scmp.eq.s32.totalorder %s37, 0
      %p105 = por %p103, %p104
      %p106 = scmp.ne.s32.totalorder %s94, %s95
      %p107 = scmp.eq.s32.totalorder %s38, 1
      %p108 = por %p106, %p107
      %p110 = scmp.ne.s32.totalorder %s95, %s109
      %p111 = scmp.eq.s32.totalorder %s38, 0
      %p112 = por %p110, %p111
      %s114 = sadd.s32 %s113, 1
      %p117 = scmp.eq.s32.totalorder %s32, 1
      %p118 = scmp.ne.s32.totalorder %s113, %s115
      %p119 = scmp.eq.s32.totalorder %s32, 0
      %p120 = por %p118, %p119
      %p121 = scmp.ne.s32.totalorder %s113, %s115
      %p122 = scmp.eq.s32.totalorder %s37, 1
      %p123 = por %p121, %p122
      %p124 = scmp.ne.s32.totalorder %s115, %s116
      %p125 = scmp.eq.s32.totalorder %s37, 0
      %p126 = por %p124, %p125
      %p127 = scmp.ne.s32.totalorder %s115, %s116
      %p128 = scmp.eq.s32.totalorder %s38, 1
      %p129 = por %p127, %p128
      %p131 = scmp.ne.s32.totalorder %s116, %s130
      %p132 = scmp.eq.s32.totalorder %s38, 0
      %p133 = por %p131, %p132
      %s135 = sadd.s32 %s134, 1
      %p138 = scmp.eq.s32.totalorder %s32, 1
      %p139 = scmp.ne.s32.totalorder %s134, %s136
      %p140 = scmp.eq.s32.totalorder %s32, 0
      %p141 = por %p139, %p140
      %p142 = scmp.ne.s32.totalorder %s134, %s136
      %p143 = scmp.eq.s32.totalorder %s37, 1
      %p144 = por %p142, %p143
      %p145 = scmp.ne.s32.totalorder %s136, %s137
      %p146 = scmp.eq.s32.totalorder %s37, 0
      %p147 = por %p145, %p146
      %p148 = scmp.ne.s32.totalorder %s136, %s137
      %p149 = scmp.eq.s32.totalorder %s38, 1
      %p150 = por %p148, %p149
      %p152 = scmp.ne.s32.totalorder %s137, %s151
      %p153 = scmp.eq.s32.totalorder %s38, 0
      %p154 = por %p152, %p153
      %s156 = sadd.s32 %s155, 1
      %p159 = scmp.eq.s32.totalorder %s32, 1
      %p160 = scmp.ne.s32.totalorder %s155, %s157
      %p161 = scmp.eq.s32.totalorder %s32, 0
      %p162 = por %p160, %p161
      %p163 = scmp.ne.s32.totalorder %s155, %s157
      %p164 = scmp.eq.s32.totalorder %s37, 1
      %p165 = por %p163, %p164
      %p166 = scmp.ne.s32.totalorder %s157, %s158
      %p167 = scmp.eq.s32.totalorder %s37, 0
      %p168 = por %p166, %p167
      %p169 = scmp.ne.s32.totalorder %s157, %s158
      %p170 = scmp.eq.s32.totalorder %s38, 1
      %p171 = por %p169, %p170
      %p173 = scmp.ne.s32.totalorder %s158, %s172
      %p174 = scmp.eq.s32.totalorder %s38, 0
      %p175 = por %p173, %p174
      %s177 = sadd.s32 %s176, 1
      %p180 = scmp.eq.s32.totalorder %s32, 1
      %p181 = scmp.ne.s32.totalorder %s176, %s178
      %p182 = scmp.eq.s32.totalorder %s32, 0
      %p183 = por %p181, %p182
      %p184 = scmp.ne.s32.totalorder %s176, %s178
      %p185 = scmp.eq.s32.totalorder %s37, 1
      %p186 = por %p184, %p185
      %p187 = scmp.ne.s32.totalorder %s178, %s179
      %p188 = scmp.eq.s32.totalorder %s37, 0
      %p189 = por %p187, %p188
      %p190 = scmp.ne.s32.totalorder %s178, %s179
      %p191 = scmp.eq.s32.totalorder %s38, 1
      %p192 = por %p190, %p191
      %p194 = scmp.ne.s32.totalorder %s179, %s193
      %p195 = scmp.eq.s32.totalorder %s38, 0
      %p196 = por %p194, %p195
      %s198 = sadd.s32 %s197, 1
      %p201 = scmp.eq.s32.totalorder %s32, 1
      %p202 = scmp.ne.s32.totalorder %s197, %s199
      %p203 = scmp.eq.s32.totalorder %s32, 0
      %p204 = por %p202, %p203
      %p205 = scmp.ne.s32.totalorder %s197, %s199
      %p206 = scmp.eq.s32.totalorder %s37, 1
      %p207 = por %p205, %p206
      %p208 = scmp.ne.s32.totalorder %s199, %s200
      %p209 = scmp.eq.s32.totalorder %s37, 0
      %p210 = por %p208, %p209
      %p211 = scmp.ne.s32.totalorder %s199, %s200
      %p212 = scmp.eq.s32.totalorder %s38, 1
      %p213 = por %p211, %p212
      %p215 = scmp.ne.s32.totalorder %s200, %s214
      %p216 = scmp.eq.s32.totalorder %s38, 0
      %p217 = por %p215, %p216
      %s219 = sadd.s32 %s218, 1
      %p222 = scmp.eq.s32.totalorder %s32, 1
      %p223 = scmp.ne.s32.totalorder %s218, %s220
      %p224 = scmp.eq.s32.totalorder %s32, 0
      %p225 = por %p223, %p224
      %p226 = scmp.ne.s32.totalorder %s218, %s220
      %p227 = scmp.eq.s32.totalorder %s37, 1
      %p228 = por %p226, %p227
      %p229 = scmp.ne.s32.totalorder %s220, %s221
      %p230 = scmp.eq.s32.totalorder %s37, 0
      %p231 = por %p229, %p230
      %p232 = scmp.ne.s32.totalorder %s220, %s221
      %p233 = scmp.eq.s32.totalorder %s38, 1
      %p234 = por %p232, %p233
      %p236 = scmp.ne.s32.totalorder %s221, %s235
      %p237 = scmp.eq.s32.totalorder %s38, 0
      %p238 = por %p236, %p237
      %s240 = sadd.s32 %s239, 1
      %p243 = scmp.eq.s32.totalorder %s32, 1
      %p244 = scmp.ne.s32.totalorder %s239, %s241
      %p245 = scmp.eq.s32.totalorder %s32, 0
      %p246 = por %p244, %p245
      %p247 = scmp.ne.s32.totalorder %s239, %s241
      %p248 = scmp.eq.s32.totalorder %s37, 1
      %p249 = por %p247, %p248
      %p250 = scmp.ne.s32.totalorder %s241, %s242
      %p251 = scmp.eq.s32.totalorder %s37, 0
      %p252 = por %p250, %p251
      %p253 = scmp.ne.s32.totalorder %s241, %s242
      %p254 = scmp.eq.s32.totalorder %s38, 1
      %p255 = por %p253, %p254
      %p257 = scmp.ne.s32.totalorder %s242, %s256
      %p258 = scmp.eq.s32.totalorder %s38, 0
      %p259 = por %p257, %p258
      %s261 = sadd.s32 %s260, 1
      %p264 = scmp.eq.s32.totalorder %s32, 1
      %p265 = scmp.ne.s32.totalorder %s260, %s262
      %p266 = scmp.eq.s32.totalorder %s32, 0
      %p267 = por %p265, %p266
      %p268 = scmp.ne.s32.totalorder %s260, %s262
      %p269 = scmp.eq.s32.totalorder %s37, 1
      %p270 = por %p268, %p269
      %p271 = scmp.ne.s32.totalorder %s262, %s263
      %p272 = scmp.eq.s32.totalorder %s37, 0
      %p273 = por %p271, %p272
      %p274 = scmp.ne.s32.totalorder %s262, %s263
      %p275 = scmp.eq.s32.totalorder %s38, 1
      %p276 = por %p274, %p275
      %p278 = scmp.ne.s32.totalorder %s263, %s277
      %p279 = scmp.eq.s32.totalorder %s38, 0
      %p280 = por %p278, %p279
      %s282 = sadd.s32 %s281, 1
      %p285 = scmp.eq.s32.totalorder %s32, 1
      %p286 = scmp.ne.s32.totalorder %s281, %s283
      %p287 = scmp.eq.s32.totalorder %s32, 0
      %p288 = por %p286, %p287
      %p289 = scmp.ne.s32.totalorder %s281, %s283
      %p290 = scmp.eq.s32.totalorder %s37, 1
      %p291 = por %p289, %p290
      %p292 = scmp.ne.s32.totalorder %s283, %s284
      %p293 = scmp.eq.s32.totalorder %s37, 0
      %p294 = por %p292, %p293
      %p295 = scmp.ne.s32.totalorder %s283, %s284
      %p296 = scmp.eq.s32.totalorder %s38, 1
      %p297 = por %p295, %p296
      %p299 = scmp.ne.s32.totalorder %s284, %s298
      %p300 = scmp.eq.s32.totalorder %s38, 0
      %p301 = por %p299, %p300
      %s303 = sadd.s32 %s302, 1
      %p306 = scmp.eq.s32.totalorder %s32, 1
      %p307 = scmp.ne.s32.totalorder %s302, %s304
      %p308 = scmp.eq.s32.totalorder %s32, 0
      %p309 = por %p307, %p308
      %p310 = scmp.ne.s32.totalorder %s302, %s304
      %p311 = scmp.eq.s32.totalorder %s37, 1
      %p312 = por %p310, %p311
      %p313 = scmp.ne.s32.totalorder %s304, %s305
      %p314 = scmp.eq.s32.totalorder %s37, 0
      %p315 = por %p313, %p314
      %p316 = scmp.ne.s32.totalorder %s304, %s305
      %p317 = scmp.eq.s32.totalorder %s38, 1
      %p318 = por %p316, %p317
      %p320 = scmp.ne.s32.totalorder %s305, %s319
      %p321 = scmp.eq.s32.totalorder %s38, 0
      %p322 = por %p320, %p321
      %s324 = sadd.s32 %s323, 1
      %p327 = scmp.eq.s32.totalorder %s32, 1
      %p328 = scmp.ne.s32.totalorder %s323, %s325
      %p329 = scmp.eq.s32.totalorder %s32, 0
      %p330 = por %p328, %p329
      %p331 = scmp.ne.s32.totalorder %s323, %s325
      %p332 = scmp.eq.s32.totalorder %s37, 1
      %p333 = por %p331, %p332
      %p334 = scmp.ne.s32.totalorder %s325, %s326
      %p335 = scmp.eq.s32.totalorder %s37, 0
      %p336 = por %p334, %p335
      %p337 = scmp.ne.s32.totalorder %s325, %s326
      %p338 = scmp.eq.s32.totalorder %s38, 1
      %p339 = por %p337, %p338
      %p341 = scmp.ne.s32.totalorder %s326, %s340
      %p342 = scmp.eq.s32.totalorder %s38, 0
      %p343 = por %p341, %p342
      %s345 = sadd.s32 %s344, 1
      %p348 = scmp.eq.s32.totalorder %s32, 1
      %p349 = scmp.ne.s32.totalorder %s344, %s346
      %p350 = scmp.eq.s32.totalorder %s32, 0
      %p351 = por %p349, %p350
      %p352 = scmp.ne.s32.totalorder %s344, %s346
      %p353 = scmp.eq.s32.totalorder %s37, 1
      %p354 = por %p352, %p353
      %p355 = scmp.ne.s32.totalorder %s346, %s347
      %p356 = scmp.eq.s32.totalorder %s37, 0
      %p357 = por %p355, %p356
      %p358 = scmp.ne.s32.totalorder %s346, %s347
      %p359 = scmp.eq.s32.totalorder %s38, 1
      %p360 = por %p358, %p359
      %p362 = scmp.ne.s32.totalorder %s347, %s361
      %p363 = scmp.eq.s32.totalorder %s38, 0
      %p364 = por %p362, %p363
      %s366 = sadd.s32 %s365, 1
      %p369 = scmp.eq.s32.totalorder %s32, 1
      %p370 = scmp.ne.s32.totalorder %s365, %s367
      %p371 = scmp.eq.s32.totalorder %s32, 0
      %p372 = por %p370, %p371
      %p373 = scmp.ne.s32.totalorder %s365, %s367
      %p374 = scmp.eq.s32.totalorder %s37, 1
      %p375 = por %p373, %p374
      %p376 = scmp.ne.s32.totalorder %s367, %s368
      %p377 = scmp.eq.s32.totalorder %s37, 0
      %p378 = por %p376, %p377
      %p379 = scmp.ne.s32.totalorder %s367, %s368
      %p380 = scmp.eq.s32.totalorder %s38, 1
      %p381 = por %p379, %p380
      %p383 = scmp.ne.s32.totalorder %s368, %s382
      %p384 = scmp.eq.s32.totalorder %s38, 0
      %p385 = por %p383, %p384
      %s387 = sadd.s32 %s386, 1
      %p390 = scmp.eq.s32.totalorder %s32, 1
      %p391 = scmp.ne.s32.totalorder %s386, %s388
      %p392 = scmp.eq.s32.totalorder %s32, 0
      %p393 = por %p391, %p392
      %p394 = scmp.ne.s32.totalorder %s386, %s388
      %p395 = scmp.eq.s32.totalorder %s37, 1
      %p396 = por %p394, %p395
      %p397 = scmp.ne.s32.totalorder %s388, %s389
      %p398 = scmp.eq.s32.totalorder %s37, 0
      %p399 = por %p397, %p398
      %p400 = scmp.ne.s32.totalorder %s388, %s389
      %p401 = scmp.eq.s32.totalorder %s38, 1
      %p402 = por %p400, %p401
      %p404 = scmp.ne.s32.totalorder %s389, %s403
      %p405 = scmp.eq.s32.totalorder %s38, 0
      %p406 = por %p404, %p405
      %s408 = sadd.s32 %s407, 1
      %p411 = scmp.eq.s32.totalorder %s32, 1
      %p412 = scmp.ne.s32.totalorder %s407, %s409
      %p413 = scmp.eq.s32.totalorder %s32, 0
      %p414 = por %p412, %p413
      %p415 = scmp.ne.s32.totalorder %s407, %s409
      %p416 = scmp.eq.s32.totalorder %s37, 1
      %p417 = por %p415, %p416
      %p418 = scmp.ne.s32.totalorder %s409, %s410
      %p419 = scmp.eq.s32.totalorder %s37, 0
      %p420 = por %p418, %p419
      %p421 = scmp.ne.s32.totalorder %s409, %s410
      %p422 = scmp.eq.s32.totalorder %s38, 1
      %p423 = por %p421, %p422
      %p425 = scmp.ne.s32.totalorder %s410, %s424
      %p426 = scmp.eq.s32.totalorder %s38, 0
      %p427 = por %p425, %p426
      %s429 = sadd.s32 %s428, 1
      %p432 = scmp.eq.s32.totalorder %s32, 1
      %p433 = scmp.ne.s32.totalorder %s428, %s430
      %p434 = scmp.eq.s32.totalorder %s32, 0
      %p435 = por %p433, %p434
      %p436 = scmp.ne.s32.totalorder %s428, %s430
      %p437 = scmp.eq.s32.totalorder %s37, 1
      %p438 = por %p436, %p437
      %p439 = scmp.ne.s32.totalorder %s430, %s431
      %p440 = scmp.eq.s32.totalorder %s37, 0
      %p441 = por %p439, %p440
      %p442 = scmp.ne.s32.totalorder %s430, %s431
      %p443 = scmp.eq.s32.totalorder %s38, 1
      %p444 = por %p442, %p443
      %p446 = scmp.ne.s32.totalorder %s431, %s445
      %p447 = scmp.eq.s32.totalorder %s38, 0
      %p448 = por %p446, %p447
      %s450 = sadd.s32 %s449, 1
      %p453 = scmp.eq.s32.totalorder %s32, 1
      %p454 = scmp.ne.s32.totalorder %s449, %s451
      %p455 = scmp.eq.s32.totalorder %s32, 0
      %p456 = por %p454, %p455
      %p457 = scmp.ne.s32.totalorder %s449, %s451
      %p458 = scmp.eq.s32.totalorder %s37, 1
      %p459 = por %p457, %p458
      %p460 = scmp.ne.s32.totalorder %s451, %s452
      %p461 = scmp.eq.s32.totalorder %s37, 0
      %p462 = por %p460, %p461
      %p463 = scmp.ne.s32.totalorder %s451, %s452
      %p464 = scmp.eq.s32.totalorder %s38, 1
      %p465 = por %p463, %p464
      %p467 = scmp.ne.s32.totalorder %s452, %s466
      %p468 = scmp.eq.s32.totalorder %s38, 0
      %p469 = por %p467, %p468
      %s471 = sadd.s32 %s470, 1
      %p474 = scmp.eq.s32.totalorder %s32, 1
      %p475 = scmp.ne.s32.totalorder %s470, %s472
      %p476 = scmp.eq.s32.totalorder %s32, 0
      %p477 = por %p475, %p476
      %p478 = scmp.ne.s32.totalorder %s470, %s472
      %p479 = scmp.eq.s32.totalorder %s37, 1
      %p480 = por %p478, %p479
      %p481 = scmp.ne.s32.totalorder %s472, %s473
      %p482 = scmp.eq.s32.totalorder %s37, 0
      %p483 = por %p481, %p482
      %p484 = scmp.ne.s32.totalorder %s472, %s473
      %p485 = scmp.eq.s32.totalorder %s38, 1
      %p486 = por %p484, %p485
      %p488 = scmp.ne.s32.totalorder %s473, %s487
      %p489 = scmp.eq.s32.totalorder %s38, 0
      %p490 = por %p488, %p489
      %s492 = sadd.s32 %s491, 1
      %p495 = scmp.eq.s32.totalorder %s32, 1
      %p496 = scmp.ne.s32.totalorder %s491, %s493
      %p497 = scmp.eq.s32.totalorder %s32, 0
      %p498 = por %p496, %p497
      %p499 = scmp.ne.s32.totalorder %s491, %s493
      %p500 = scmp.eq.s32.totalorder %s37, 1
      %p501 = por %p499, %p500
      %p502 = scmp.ne.s32.totalorder %s493, %s494
      %p503 = scmp.eq.s32.totalorder %s37, 0
      %p504 = por %p502, %p503
      %p505 = scmp.ne.s32.totalorder %s493, %s494
      %p506 = scmp.eq.s32.totalorder %s38, 1
      %p507 = por %p505, %p506
      %p509 = scmp.ne.s32.totalorder %s494, %s508
      %p510 = scmp.eq.s32.totalorder %s38, 0
      %p511 = por %p509, %p510
      %s513 = sadd.s32 %s512, 1
      %p516 = scmp.eq.s32.totalorder %s32, 1
      %p517 = scmp.ne.s32.totalorder %s512, %s514
      %p518 = scmp.eq.s32.totalorder %s32, 0
      %p519 = por %p517, %p518
      %p520 = scmp.ne.s32.totalorder %s512, %s514
      %p521 = scmp.eq.s32.totalorder %s37, 1
      %p522 = por %p520, %p521
      %p523 = scmp.ne.s32.totalorder %s514, %s515
      %p524 = scmp.eq.s32.totalorder %s37, 0
      %p525 = por %p523, %p524
      %p526 = scmp.ne.s32.totalorder %s514, %s515
      %p527 = scmp.eq.s32.totalorder %s38, 1
      %p528 = por %p526, %p527
      %p530 = scmp.ne.s32.totalorder %s515, %s529
      %p531 = scmp.eq.s32.totalorder %s38, 0
      %p532 = por %p530, %p531
      %s533 = ssub.s32 %s32, %s39
      %p534 = scmp.eq.s32.totalorder %s533, 0
      %s536 = sadd.s32 %s535, 1
      %s537 = scalar_select %p534, %s535, %s536
      %p540 = pneg %p534
      %p541 = scmp.eq.s32.totalorder %s32, 1
      %p542 = por %p540, %p541
      %p543 = scmp.ne.s32.totalorder %s535, %s538
      %p544 = scmp.eq.s32.totalorder %s32, 0
      %p545 = por %p543, %p544
      %p546 = scmp.ne.s32.totalorder %s535, %s538
      %p547 = scmp.eq.s32.totalorder %s37, 1
      %p548 = por %p546, %p547
      %p549 = scmp.ne.s32.totalorder %s538, %s539
      %p550 = scmp.eq.s32.totalorder %s37, 0
      %p551 = por %p549, %p550
      %p552 = scmp.ne.s32.totalorder %s538, %s539
      %p553 = scmp.eq.s32.totalorder %s38, 1
      %p554 = por %p552, %p553
      %p556 = scmp.ne.s32.totalorder %s539, %s555
      %p557 = scmp.eq.s32.totalorder %s38, 0
      %p558 = por %p556, %p557
      %p559 = scmp.le.s32.totalorder 1, %s32
      %p560 = scmp.lt.s32.totalorder %s32, 3
      %p561 = pnand %p559, %p560
      %p562 = pneg %p561
      // Predicated region
      $region9: #{tpu_custom_call.1} parent=5 // pred_check
        _
      $region10: #{tpu_custom_call.1} parent=5 // pred_check_branch
        %564 = sbr.rel (%p561) target = $region12
      $region11: #{tpu_custom_call.1} parent=5 // pred_region
        %s565 = ssub.s32 %s32, 1
        // Predicated region
        $region13: #{tpu_custom_call.1} parent=11 // pred_check
          %p566 = pneg %p105
        $region14: #{tpu_custom_call.1} parent=11 // pred_check_branch
          %568 = sbr.rel (%p566) target = $region16
        $region15: #{tpu_custom_call.1} parent=11 // pred_region
          _
        $region16: #{tpu_custom_call.1} parent=11 // pred_fallthru
          _
        // Predicated region
        $region17: #{tpu_custom_call.1} parent=11 // pred_check
          %p569 = pneg %p126
        $region18: #{tpu_custom_call.1} parent=11 // pred_check_branch
          %571 = sbr.rel (%p569) target = $region20
        $region19: #{tpu_custom_call.1} parent=11 // pred_region
          _
        $region20: #{tpu_custom_call.1} parent=11 // pred_fallthru
          _
        // Predicated region
        $region21: #{tpu_custom_call.1} parent=11 // pred_check
          %p572 = pneg %p147
        $region22: #{tpu_custom_call.1} parent=11 // pred_check_branch
          %574 = sbr.rel (%p572) target = $region24
        $region23: #{tpu_custom_call.1} parent=11 // pred_region
          _
        $region24: #{tpu_custom_call.1} parent=11 // pred_fallthru
          _
        // Predicated region
        $region25: #{tpu_custom_call.1} parent=11 // pred_check
          %p575 = pneg %p168
        $region26: #{tpu_custom_call.1} parent=11 // pred_check_branch
          %577 = sbr.rel (%p575) target = $region28
        $region27: #{tpu_custom_call.1} parent=11 // pred_region
          _
        $region28: #{tpu_custom_call.1} parent=11 // pred_fallthru
          _
        // Predicated region
        $region29: #{tpu_custom_call.1} parent=11 // pred_check
          %p578 = pneg %p189
        $region30: #{tpu_custom_call.1} parent=11 // pred_check_branch
          %580 = sbr.rel (%p578) target = $region32
        $region31: #{tpu_custom_call.1} parent=11 // pred_region
          _
        $region32: #{tpu_custom_call.1} parent=11 // pred_fallthru
          _
        // Predicated region
        $region33: #{tpu_custom_call.1} parent=11 // pred_check
          %p581 = pneg %p210
        $region34: #{tpu_custom_call.1} parent=11 // pred_check_branch
          %583 = sbr.rel (%p581) target = $region36
        $region35: #{tpu_custom_call.1} parent=11 // pred_region
          _
        $region36: #{tpu_custom_call.1} parent=11 // pred_fallthru
          _
        // Predicated region
        $region37: #{tpu_custom_call.1} parent=11 // pred_check
          %p584 = pneg %p231
        $region38: #{tpu_custom_call.1} parent=11 // pred_check_branch
          %586 = sbr.rel (%p584) target = $region40
        $region39: #{tpu_custom_call.1} parent=11 // pred_region
          _
        $region40: #{tpu_custom_call.1} parent=11 // pred_fallthru
          _
        // Predicated region
        $region41: #{tpu_custom_call.1} parent=11 // pred_check
          %p587 = pneg %p252
        $region42: #{tpu_custom_call.1} parent=11 // pred_check_branch
          %589 = sbr.rel (%p587) target = $region44
        $region43: #{tpu_custom_call.1} parent=11 // pred_region
          _
        $region44: #{tpu_custom_call.1} parent=11 // pred_fallthru
          _
        // Predicated region
        $region45: #{tpu_custom_call.1} parent=11 // pred_check
          %p590 = pneg %p273
        $region46: #{tpu_custom_call.1} parent=11 // pred_check_branch
          %592 = sbr.rel (%p590) target = $region48
        $region47: #{tpu_custom_call.1} parent=11 // pred_region
          _
        $region48: #{tpu_custom_call.1} parent=11 // pred_fallthru
          _
        // Predicated region
        $region49: #{tpu_custom_call.1} parent=11 // pred_check
          %p593 = pneg %p294
        $region50: #{tpu_custom_call.1} parent=11 // pred_check_branch
          %595 = sbr.rel (%p593) target = $region52
        $region51: #{tpu_custom_call.1} parent=11 // pred_region
          _
        $region52: #{tpu_custom_call.1} parent=11 // pred_fallthru
          _
        // Predicated region
        $region53: #{tpu_custom_call.1} parent=11 // pred_check
          %p596 = pneg %p315
        $region54: #{tpu_custom_call.1} parent=11 // pred_check_branch
          %598 = sbr.rel (%p596) target = $region56
        $region55: #{tpu_custom_call.1} parent=11 // pred_region
          _
        $region56: #{tpu_custom_call.1} parent=11 // pred_fallthru
          _
        // Predicated region
        $region57: #{tpu_custom_call.1} parent=11 // pred_check
          %p599 = pneg %p336
        $region58: #{tpu_custom_call.1} parent=11 // pred_check_branch
          %601 = sbr.rel (%p599) target = $region60
        $region59: #{tpu_custom_call.1} parent=11 // pred_region
          _
        $region60: #{tpu_custom_call.1} parent=11 // pred_fallthru
          _
        // Predicated region
        $region61: #{tpu_custom_call.1} parent=11 // pred_check
          %p602 = pneg %p357
        $region62: #{tpu_custom_call.1} parent=11 // pred_check_branch
          %604 = sbr.rel (%p602) target = $region64
        $region63: #{tpu_custom_call.1} parent=11 // pred_region
          _
        $region64: #{tpu_custom_call.1} parent=11 // pred_fallthru
          _
        // Predicated region
        $region65: #{tpu_custom_call.1} parent=11 // pred_check
          %p605 = pneg %p378
        $region66: #{tpu_custom_call.1} parent=11 // pred_check_branch
          %607 = sbr.rel (%p605) target = $region68
        $region67: #{tpu_custom_call.1} parent=11 // pred_region
          _
        $region68: #{tpu_custom_call.1} parent=11 // pred_fallthru
          _
        // Predicated region
        $region69: #{tpu_custom_call.1} parent=11 // pred_check
          %p608 = pneg %p399
        $region70: #{tpu_custom_call.1} parent=11 // pred_check_branch
          %610 = sbr.rel (%p608) target = $region72
        $region71: #{tpu_custom_call.1} parent=11 // pred_region
          _
        $region72: #{tpu_custom_call.1} parent=11 // pred_fallthru
          _
        // Predicated region
        $region73: #{tpu_custom_call.1} parent=11 // pred_check
          %p611 = pneg %p420
        $region74: #{tpu_custom_call.1} parent=11 // pred_check_branch
          %613 = sbr.rel (%p611) target = $region76
        $region75: #{tpu_custom_call.1} parent=11 // pred_region
          _
        $region76: #{tpu_custom_call.1} parent=11 // pred_fallthru
          _
        // Predicated region
        $region77: #{tpu_custom_call.1} parent=11 // pred_check
          %p614 = pneg %p441
        $region78: #{tpu_custom_call.1} parent=11 // pred_check_branch
          %616 = sbr.rel (%p614) target = $region80
        $region79: #{tpu_custom_call.1} parent=11 // pred_region
          _
        $region80: #{tpu_custom_call.1} parent=11 // pred_fallthru
          _
        // Predicated region
        $region81: #{tpu_custom_call.1} parent=11 // pred_check
          %p617 = pneg %p462
        $region82: #{tpu_custom_call.1} parent=11 // pred_check_branch
          %619 = sbr.rel (%p617) target = $region84
        $region83: #{tpu_custom_call.1} parent=11 // pred_region
          _
        $region84: #{tpu_custom_call.1} parent=11 // pred_fallthru
          _
        // Predicated region
        $region85: #{tpu_custom_call.1} parent=11 // pred_check
          %p620 = pneg %p483
        $region86: #{tpu_custom_call.1} parent=11 // pred_check_branch
          %622 = sbr.rel (%p620) target = $region88
        $region87: #{tpu_custom_call.1} parent=11 // pred_region
          _
        $region88: #{tpu_custom_call.1} parent=11 // pred_fallthru
          _
        // Predicated region
        $region89: #{tpu_custom_call.1} parent=11 // pred_check
          %p623 = pneg %p504
        $region90: #{tpu_custom_call.1} parent=11 // pred_check_branch
          %625 = sbr.rel (%p623) target = $region92
        $region91: #{tpu_custom_call.1} parent=11 // pred_region
          _
        $region92: #{tpu_custom_call.1} parent=11 // pred_fallthru
          _
        // Predicated region
        $region93: #{tpu_custom_call.1} parent=11 // pred_check
          %p626 = pneg %p525
        $region94: #{tpu_custom_call.1} parent=11 // pred_check_branch
          %628 = sbr.rel (%p626) target = $region96
        $region95: #{tpu_custom_call.1} parent=11 // pred_region
          _
        $region96: #{tpu_custom_call.1} parent=11 // pred_fallthru
          _
      $region12: #{tpu_custom_call.1} parent=5 // pred_fallthru
        _
      %p629 = scmp.lt.s32.totalorder %s32, 2
      // Predicated region
      $region97: #{tpu_custom_call.1} parent=5 // pred_check
        %p630 = pneg %p629
      $region98: #{tpu_custom_call.1} parent=5 // pred_check_branch
        %632 = sbr.rel (%p630) target = $region100
      $region99: #{tpu_custom_call.1} parent=5 // pred_region
        // Predicated region
        $region101: #{tpu_custom_call.1} parent=99 // pred_check
          %p633 = pneg %p52
        $region102: #{tpu_custom_call.1} parent=99 // pred_check_branch
          %635 = sbr.rel (%p633) target = $region104
        $region103: #{tpu_custom_call.1} parent=99 // pred_region
          %p636 = scmp.lt.s32.totalorder %s32, 1
          %s637 = scalar_select %p636, %s32, 1
          %s638 = smul.addr %s637, 8
          %s639 = smul.addr %s638, 8
          %s640 = scalar_lea.vmem %s0, %s639
        $region104: #{tpu_custom_call.1} parent=99 // pred_fallthru
          _
        // Predicated region
        $region105: #{tpu_custom_call.1} parent=99 // pred_check
          %p641 = pneg %p78
        $region106: #{tpu_custom_call.1} parent=99 // pred_check_branch
          %643 = sbr.rel (%p641) target = $region108
        $region107: #{tpu_custom_call.1} parent=99 // pred_region
          %p644 = scmp.lt.s32.totalorder %s32, 1
          %s645 = scalar_select %p644, %s32, 1
          %s646 = scalar_lea.vmem %s1, %s645
        $region108: #{tpu_custom_call.1} parent=99 // pred_fallthru
          _
      $region100: #{tpu_custom_call.1} parent=5 // pred_fallthru
        _
      %p647 = scmp.le.s32.totalorder 1, %s32
      %p648 = scmp.lt.s32.totalorder %s32, 3
      %p649 = pnand %p647, %p648
      %p650 = pneg %p649
      // Predicated region
      $region109: #{tpu_custom_call.1} parent=5 // pred_check
        _
      $region110: #{tpu_custom_call.1} parent=5 // pred_check_branch
        %652 = sbr.rel (%p649) target = $region112
      $region111: #{tpu_custom_call.1} parent=5 // pred_region
        %s653 = ssub.s32 %s32, 1
        %p654 = scmp.lt.s32.totalorder %s37, 1
        %s655 = scalar_select %p654, %s37, 1
        %s656 = smul.addr %s655, 8
        %s657 = smul.addr %s656, 8
        %s658 = scalar_lea.vmem %s0, %s657
        %p659 = pneg %p58
        %p660 = pneg %p55
        %p661 = scmp.lt.s32.totalorder %s37, 1
        %s662 = scalar_select %p661, %s37, 1
        %s663 = scalar_lea.vmem %s1, %s662
        %p664 = pneg %p84
        %p665 = pneg %p81
        %p666 = pneg %p105
        %p667 = pneg %p102
        %p668 = pneg %p126
        %p669 = pneg %p123
        %p670 = pneg %p147
        %p671 = pneg %p144
        %p672 = pneg %p168
        %p673 = pneg %p165
        %p674 = pneg %p189
        %p675 = pneg %p186
        %p676 = pneg %p210
        %p677 = pneg %p207
        %p678 = pneg %p231
        %p679 = pneg %p228
        %p680 = pneg %p252
        %p681 = pneg %p249
        %p682 = pneg %p273
        %p683 = pneg %p270
        %p684 = pneg %p294
        %p685 = pneg %p291
        %p686 = pneg %p315
        %p687 = pneg %p312
        %p688 = pneg %p336
        %p689 = pneg %p333
        %p690 = pneg %p357
        %p691 = pneg %p354
        %p692 = pneg %p378
        %p693 = pneg %p375
        %p694 = pneg %p399
        %p695 = pneg %p396
        %p696 = pneg %p420
        %p697 = pneg %p417
        %p698 = pneg %p441
        %p699 = pneg %p438
        %p700 = pneg %p462
        %p701 = pneg %p459
        %p702 = pneg %p483
        %p703 = pneg %p480
        %p704 = pneg %p504
        %p705 = pneg %p501
        %p706 = pneg %p525
        %p707 = pneg %p522
        %p708 = pneg %p551
        %p709 = pneg %p548
        %s710 = sand.u32 %s538, 1
        %s711 = scalar_lea.sflag [#allocation3], %s710
        %s712 = sand.u32 %s538, 1
        %s713 = smul.addr %s712, 64
        %s714 = scalar_lea.vmem [#allocation2], %s713
        %p715 = scmp.lt.s32.totalorder %s37, 1
        %s716 = scalar_select %p715, %s37, 1
        %s717 = smul.addr %s716, 8
        %s718 = smul.addr %s717, 8
        %s719 = scalar_lea.vmem %s0, %s718
        %p720 = scmp.lt.s32.totalorder %s37, 1
        %s721 = scalar_select %p720, %s37, 1
        %s722 = scalar_lea.vmem %s1, %s721
        %v724 = vld [vmem:[%s719] sm:$0xff]
        %v725 = vld [vmem:[%s719 + $0x8] sm:$0xff]
        %v726 = vld [vmem:[%s719 + $0x10] sm:$0xff]
        %v727 = vld [vmem:[%s719 + $0x18] sm:$0xff]
        %v728 = vld [vmem:[%s719 + $0x20] sm:$0xff]
        %v729 = vld [vmem:[%s719 + $0x28] sm:$0xff]
        %v730 = vld [vmem:[%s719 + $0x30] sm:$0xff]
        %v731 = vld [vmem:[%s719 + $0x38] sm:$0xff]
        %v732 = vlaneseq
        %v733 = vshrl.u32 %v732, 7
        %v734 = vadd.s32 %v733, 8
        %v735 = vadd.s32 %v733, 16
        %v736 = vadd.s32 %v733, 24
        %v737 = vadd.s32 %v733, 32
        %v738 = vadd.s32 %v733, 40
        %v739 = vadd.s32 %v733, 48
        %v740 = vadd.s32 %v733, 56
        %vm741 = vcmp.lt.s32.totalorder %v733, 0
        %v742 = vsub.s32 0, %v733
        %v743 = vsel %vm741, %v742, %v733
        %v744 = vshrl.u32 %v743, 3
        %v745 = vand.u32 %v743, 7
        %v746 = vsub.s32 0, %v745
        %v747 = vsel %vm741, %v746, %v745
        %vm748 = vcmp.lt.s32.totalorder %v734, 0
        %v749 = vsub.s32 0, %v734
        %v750 = vsel %vm748, %v749, %v734
        %v751 = vshrl.u32 %v750, 3
        %v752 = vand.u32 %v750, 7
        %v753 = vsub.s32 0, %v752
        %v754 = vsel %vm748, %v753, %v752
        %vm755 = vcmp.lt.s32.totalorder %v735, 0
        %v756 = vsub.s32 0, %v735
        %v757 = vsel %vm755, %v756, %v735
        %v758 = vshrl.u32 %v757, 3
        %v759 = vand.u32 %v757, 7
        %v760 = vsub.s32 0, %v759
        %v761 = vsel %vm755, %v760, %v759
        %vm762 = vcmp.lt.s32.totalorder %v736, 0
        %v763 = vsub.s32 0, %v736
        %v764 = vsel %vm762, %v763, %v736
        %v765 = vshrl.u32 %v764, 3
        %v766 = vand.u32 %v764, 7
        %v767 = vsub.s32 0, %v766
        %v768 = vsel %vm762, %v767, %v766
        %vm769 = vcmp.lt.s32.totalorder %v737, 0
        %v770 = vsub.s32 0, %v737
        %v771 = vsel %vm769, %v770, %v737
        %v772 = vshrl.u32 %v771, 3
        %v773 = vand.u32 %v771, 7
        %v774 = vsub.s32 0, %v773
        %v775 = vsel %vm769, %v774, %v773
        %vm776 = vcmp.lt.s32.totalorder %v738, 0
        %v777 = vsub.s32 0, %v738
        %v778 = vsel %vm776, %v777, %v738
        %v779 = vshrl.u32 %v778, 3
        %v780 = vand.u32 %v778, 7
        %v781 = vsub.s32 0, %v780
        %v782 = vsel %vm776, %v781, %v780
        %vm783 = vcmp.lt.s32.totalorder %v739, 0
        %v784 = vsub.s32 0, %v739
        %v785 = vsel %vm783, %v784, %v739
        %v786 = vshrl.u32 %v785, 3
        %v787 = vand.u32 %v785, 7
        %v788 = vsub.s32 0, %v787
        %v789 = vsel %vm783, %v788, %v787
        %vm790 = vcmp.lt.s32.totalorder %v740, 0
        %v791 = vsub.s32 0, %v740
        %v792 = vsel %vm790, %v791, %v740
        %v793 = vshrl.u32 %v792, 3
        %v794 = vand.u32 %v792, 7
        %v795 = vsub.s32 0, %v794
        %v796 = vsel %vm790, %v795, %v794
        %vm797 = vcmp.ne.s32.totalorder %v747, 0
        %vm798 = vcmp.ne.s32.totalorder %v754, 0
        %vm799 = vcmp.ne.s32.totalorder %v761, 0
        %vm800 = vcmp.ne.s32.totalorder %v768, 0
        %vm801 = vcmp.ne.s32.totalorder %v775, 0
        %vm802 = vcmp.ne.s32.totalorder %v782, 0
        %vm803 = vcmp.ne.s32.totalorder %v789, 0
        %vm804 = vcmp.ne.s32.totalorder %v796, 0
        %vm805 = vcmp.lt.s32.totalorder %v747, 0
        %vm806 = vcmp.lt.s32.totalorder %v754, 0
        %vm807 = vcmp.lt.s32.totalorder %v761, 0
        %vm808 = vcmp.lt.s32.totalorder %v768, 0
        %vm809 = vcmp.lt.s32.totalorder %v775, 0
        %vm810 = vcmp.lt.s32.totalorder %v782, 0
        %vm811 = vcmp.lt.s32.totalorder %v789, 0
        %vm812 = vcmp.lt.s32.totalorder %v796, 0
        %vm813 = vmand %vm805, %vm797
        %vm814 = vmand %vm806, %vm798
        %vm815 = vmand %vm807, %vm799
        %vm816 = vmand %vm808, %vm800
        %vm817 = vmand %vm809, %vm801
        %vm818 = vmand %vm810, %vm802
        %vm819 = vmand %vm811, %vm803
        %vm820 = vmand %vm812, %vm804
        %v821 = vadd.s32 %v747, 8
        %v822 = vadd.s32 %v754, 8
        %v823 = vadd.s32 %v761, 8
        %v824 = vadd.s32 %v768, 8
        %v825 = vadd.s32 %v775, 8
        %v826 = vadd.s32 %v782, 8
        %v827 = vadd.s32 %v789, 8
        %v828 = vadd.s32 %v796, 8
        %v829 = vsel %vm813, %v821, %v747
        %v830 = vsel %vm814, %v822, %v754
        %v831 = vsel %vm815, %v823, %v761
        %v832 = vsel %vm816, %v824, %v768
        %v833 = vsel %vm817, %v825, %v775
        %v834 = vsel %vm818, %v826, %v782
        %v835 = vsel %vm819, %v827, %v789
        %v836 = vsel %vm820, %v828, %v796
        %vm837 = vcmp.ge.s32.totalorder %v733, 9
        %vm838 = vcmp.ge.s32.totalorder %v734, 9
        %vm839 = vcmp.ge.s32.totalorder %v735, 9
        %vm840 = vcmp.ge.s32.totalorder %v736, 9
        %vm841 = vcmp.ge.s32.totalorder %v737, 9
        %vm842 = vcmp.ge.s32.totalorder %v738, 9
        %vm843 = vcmp.ge.s32.totalorder %v739, 9
        %vm844 = vcmp.ge.s32.totalorder %v740, 9
        %vm845 = vcmp.ge.s32.totalorder %v829, 1
        %vm846 = vcmp.ge.s32.totalorder %v830, 1
        %vm847 = vcmp.ge.s32.totalorder %v831, 1
        %vm848 = vcmp.ge.s32.totalorder %v832, 1
        %vm849 = vcmp.ge.s32.totalorder %v833, 1
        %vm850 = vcmp.ge.s32.totalorder %v834, 1
        %vm851 = vcmp.ge.s32.totalorder %v835, 1
        %vm852 = vcmp.ge.s32.totalorder %v836, 1
        %vm853 = vmand %vm837, %vm845
        %vm854 = vmand %vm838, %vm846
        %vm855 = vmand %vm839, %vm847
        %vm856 = vmand %vm840, %vm848
        %vm857 = vmand %vm841, %vm849
        %vm858 = vmand %vm842, %vm850
        %vm859 = vmand %vm843, %vm851
        %vm860 = vmand %vm844, %vm852
        %vm861 = vcmp.ge.s32.totalorder %v733, 8
        %vm862 = vcmp.ge.s32.totalorder %v734, 8
        %vm863 = vcmp.ge.s32.totalorder %v735, 8
        %vm864 = vcmp.ge.s32.totalorder %v736, 8
        %vm865 = vcmp.ge.s32.totalorder %v737, 8
        %vm866 = vcmp.ge.s32.totalorder %v738, 8
        %vm867 = vcmp.ge.s32.totalorder %v739, 8
        %vm868 = vcmp.ge.s32.totalorder %v740, 8
        %vm869 = vcmp.ge.s32.totalorder %v733, 7
        %vm870 = vcmp.ge.s32.totalorder %v734, 7
        %vm871 = vcmp.ge.s32.totalorder %v735, 7
        %vm872 = vcmp.ge.s32.totalorder %v736, 7
        %vm873 = vcmp.ge.s32.totalorder %v737, 7
        %vm874 = vcmp.ge.s32.totalorder %v738, 7
        %vm875 = vcmp.ge.s32.totalorder %v739, 7
        %vm876 = vcmp.ge.s32.totalorder %v740, 7
        %vm877 = vcmp.lt.s32.totalorder %v829, 7
        %vm878 = vcmp.lt.s32.totalorder %v830, 7
        %vm879 = vcmp.lt.s32.totalorder %v831, 7
        %vm880 = vcmp.lt.s32.totalorder %v832, 7
        %vm881 = vcmp.lt.s32.totalorder %v833, 7
        %vm882 = vcmp.lt.s32.totalorder %v834, 7
        %vm883 = vcmp.lt.s32.totalorder %v835, 7
        %vm884 = vcmp.lt.s32.totalorder %v836, 7
        %vm885 = vmand %vm869, %vm877
        %vm886 = vmand %vm870, %vm878
        %vm887 = vmand %vm871, %vm879
        %vm888 = vmand %vm872, %vm880
        %vm889 = vmand %vm873, %vm881
        %vm890 = vmand %vm874, %vm882
        %vm891 = vmand %vm875, %vm883
        %vm892 = vmand %vm876, %vm884
        %vm893 = vcmp.ge.s32.totalorder %v733, 1
        %vm894 = vcmp.ge.s32.totalorder %v734, 1
        %vm895 = vcmp.ge.s32.totalorder %v735, 1
        %vm896 = vcmp.ge.s32.totalorder %v736, 1
        %vm897 = vcmp.ge.s32.totalorder %v737, 1
        %vm898 = vcmp.ge.s32.totalorder %v738, 1
        %vm899 = vcmp.ge.s32.totalorder %v739, 1
        %vm900 = vcmp.ge.s32.totalorder %v740, 1
        %vm901 = vmand %vm893, %vm845
        %vm902 = vmand %vm894, %vm846
        %vm903 = vmand %vm895, %vm847
        %vm904 = vmand %vm896, %vm848
        %vm905 = vmand %vm897, %vm849
        %vm906 = vmand %vm898, %vm850
        %vm907 = vmand %vm899, %vm851
        %vm908 = vmand %vm900, %vm852
        %vm909 = vcmp.lt.s32.totalorder %v733, 63
        %vm910 = vcmp.lt.s32.totalorder %v734, 63
        %vm911 = vcmp.lt.s32.totalorder %v735, 63
        %vm912 = vcmp.lt.s32.totalorder %v736, 63
        %vm913 = vcmp.lt.s32.totalorder %v737, 63
        %vm914 = vcmp.lt.s32.totalorder %v738, 63
        %vm915 = vcmp.lt.s32.totalorder %v739, 63
        %vm916 = vcmp.lt.s32.totalorder %v740, 63
        %vm917 = vmand %vm909, %vm877
        %vm918 = vmand %vm910, %vm878
        %vm919 = vmand %vm911, %vm879
        %vm920 = vmand %vm912, %vm880
        %vm921 = vmand %vm913, %vm881
        %vm922 = vmand %vm914, %vm882
        %vm923 = vmand %vm915, %vm883
        %vm924 = vmand %vm916, %vm884
        %vm925 = vcmp.lt.s32.totalorder %v733, 57
        %vm926 = vcmp.lt.s32.totalorder %v734, 57
        %vm927 = vcmp.lt.s32.totalorder %v735, 57
        %vm928 = vcmp.lt.s32.totalorder %v736, 57
        %vm929 = vcmp.lt.s32.totalorder %v737, 57
        %vm930 = vcmp.lt.s32.totalorder %v738, 57
        %vm931 = vcmp.lt.s32.totalorder %v739, 57
        %vm932 = vcmp.lt.s32.totalorder %v740, 57
        %vm933 = vmand %vm925, %vm845
        %vm934 = vmand %vm926, %vm846
        %vm935 = vmand %vm927, %vm847
        %vm936 = vmand %vm928, %vm848
        %vm937 = vmand %vm929, %vm849
        %vm938 = vmand %vm930, %vm850
        %vm939 = vmand %vm931, %vm851
        %vm940 = vmand %vm932, %vm852
        %vm941 = vcmp.lt.s32.totalorder %v733, 56
        %vm942 = vcmp.lt.s32.totalorder %v734, 56
        %vm943 = vcmp.lt.s32.totalorder %v735, 56
        %vm944 = vcmp.lt.s32.totalorder %v736, 56
        %vm945 = vcmp.lt.s32.totalorder %v737, 56
        %vm946 = vcmp.lt.s32.totalorder %v738, 56
        %vm947 = vcmp.lt.s32.totalorder %v739, 56
        %vm948 = vcmp.lt.s32.totalorder %v740, 56
        %vm949 = vcmp.lt.s32.totalorder %v733, 55
        %vm950 = vcmp.lt.s32.totalorder %v734, 55
        %vm951 = vcmp.lt.s32.totalorder %v735, 55
        %vm952 = vcmp.lt.s32.totalorder %v736, 55
        %vm953 = vcmp.lt.s32.totalorder %v737, 55
        %vm954 = vcmp.lt.s32.totalorder %v738, 55
        %vm955 = vcmp.lt.s32.totalorder %v739, 55
        %vm956 = vcmp.lt.s32.totalorder %v740, 55
        %vm957 = vmand %vm949, %vm877
        %vm958 = vmand %vm950, %vm878
        %vm959 = vmand %vm951, %vm879
        %vm960 = vmand %vm952, %vm880
        %vm961 = vmand %vm953, %vm881
        %vm962 = vmand %vm954, %vm882
        %vm963 = vmand %vm955, %vm883
        %vm964 = vmand %vm956, %vm884
        %v965 = vld [vmem:[%s2] sm:$0xff]
        %v966 = vld [vmem:[%s2 + $0x8] sm:$0xff]
        %v967 = vld [vmem:[%s2 + $0x10] sm:$0xff]
        %v968 = vld [vmem:[%s2 + $0x18] sm:$0xff]
        %v969 = vld [vmem:[%s3] sm:$0xff]
        %v970 = vld [vmem:[%s3 + $0x8] sm:$0xff]
        %v971 = vld [vmem:[%s3 + $0x10] sm:$0xff]
        %v972 = vld [vmem:[%s3 + $0x18] sm:$0xff]
        %v973 = vld [vmem:[%s4] sm:$0x1]
        %v974 = vld [vmem:[%s5] sm:$0x1]
        %vm975 = vcmask 261120
        %v976 = vsel %vm975, %v724, 0.0
        %v977 = vsel %vm975, %v725, 0.0
        %v978 = vadd.f32 %v976, %v977
        %v979 = vsel %vm975, %v726, 0.0
        %v980 = vadd.f32 %v978, %v979
        %v981 = vsel %vm975, %v727, 0.0
        %v982 = vadd.f32 %v980, %v981
        %v983 = vsel %vm975, %v728, 0.0
        %v984 = vadd.f32 %v982, %v983
        %v985 = vsel %vm975, %v729, 0.0
        %v986 = vadd.f32 %v984, %v985
        %v987 = vsel %vm975, %v730, 0.0
        %v988 = vadd.f32 %v986, %v987
        %v989 = vsel %vm975, %v731, 0.0
        %v990 = vadd.f32 %v988, %v989
        %v991 = vrot.slane %v990, 4
        %v992 = vadd.f32 %v990, %v991
        %v993 = vrot.slane %v992, 2
        %v994 = vadd.f32 %v992, %v993
        %v995 = vrot.slane %v994, 1
        %v996 = vadd.f32 %v994, %v995
        %v998 = vsel %vm975, %v996, 0
        %1000 = vmatprep.subr.mxu0 0.0
        %1001 = vmatpush1.msra.mxu0 %v965
        %1002 = vmatprep.subr.mxu0 0.0
        %1003 = vmatpush1.msra.mxu0 %v966
        %1004 = vmatprep.subr.mxu0 0.0
        %1005 = vmatpush1.msra.mxu0 %v967
        %1006 = vmatprep.subr.mxu0 0.0
        %1007 = vmatpush1.msra.mxu0 %v968
        %1008 = vmatprep.subr.mxu0 0.0
        %1009 = vmatpush1.msra.mxu0 0.0
        %1010 = vmatprep.subr.mxu0 0.0
        %1011 = vmatpush1.msra.mxu0 0.0
        %1012 = vmatprep.subr.mxu0 0.0
        %1013 = vmatpush1.msra.mxu0 0.0
        %1014 = vmatprep.subr.mxu0 0.0
        %1015 = vmatpush1.msra.mxu0 0.0
        %1016 = vmatprep.subr.mxu0 0.0
        %1017 = vmatpush1.msra.mxu0 0.0
        %1018 = vmatprep.subr.mxu0 0.0
        %1019 = vmatpush1.msra.mxu0 0.0
        %1020 = vmatprep.subr.mxu0 0.0
        %1021 = vmatpush1.msra.mxu0 0.0
        %1022 = vmatprep.subr.mxu0 0.0
        %1023 = vmatpush1.msra.mxu0 0.0
        %1024 = vmatprep.subr.mxu0 0.0
        %1025 = vmatpush1.msra.mxu0 0.0
        %1026 = vmatprep.subr.mxu0 0.0
        %1027 = vmatpush1.msra.mxu0 0.0
        %1028 = vmatprep.subr.mxu0 0.0
        %1029 = vmatpush1.msra.mxu0 0.0
        %1030 = vmatprep.subr.mxu0 0.0
        %1031 = vmatpush1.msra.mxu0 0.0
        %1032 = vmatprep.subr.mxu0 0.0
        %1033 = vmatpush1.msra.mxu0 0.0
        %1034 = vmatprep.subr.mxu0 0.0
        %1035 = vmatpush1.msra.mxu0 0.0
        %1036 = vmatprep.subr.mxu0 0.0
        %1037 = vmatpush1.msra.mxu0 0.0
        %1038 = vmatprep.subr.mxu0 0.0
        %1039 = vmatpush1.msra.mxu0 0.0
        %1040 = vmatprep.subr.mxu0 0.0
        %1041 = vmatpush1.msra.mxu0 0.0
        %1042 = vmatprep.subr.mxu0 0.0
        %1043 = vmatpush1.msra.mxu0 0.0
        %1044 = vmatprep.subr.mxu0 0.0
        %1045 = vmatpush1.msra.mxu0 0.0
        %1046 = vmatprep.subr.mxu0 0.0
        %1047 = vmatpush1.msra.mxu0 0.0
        %1048 = vmatprep.subr.mxu0 0.0
        %1049 = vmatpush1.msra.mxu0 0.0
        %1050 = vmatprep.subr.mxu0 0.0
        %1051 = vmatpush1.msra.mxu0 0.0
        %1052 = vmatprep.subr.mxu0 0.0
        %1053 = vmatpush1.msra.mxu0 0.0
        %1054 = vmatprep.subr.mxu0 0.0
        %1055 = vmatpush1.msra.mxu0 0.0
        %1056 = vmatprep.subr.mxu0 0.0
        %1057 = vmatpush1.msra.mxu0 0.0
        %1058 = vmatprep.subr.mxu0 0.0
        %1059 = vmatpush1.msra.mxu0 0.0
        %1060 = vmatprep.subr.mxu0 0.0
        %1061 = vmatpush1.msra.mxu0 0.0
        %1062 = vmatprep.subr.mxu0 0.0
        %1063 = vmatpush1.msra.mxu0 0.0
        %1064 = vmatprep.mubr.f32.mxu0 0.0
        %1065 = vmatmul.mubr.f32.gmra.mrb[0].mxu0 %v998
        %v1066 = vpop.f32.mrb[0].mxu0
        %v1067 = vadd.f32 0.0, %v1066
        %v1068 = vpop.f32.mrb[0].mxu0
        %1069 = vdwg.mxu0
        %v1070 = vmul.f32 %v1067, 0.015625
        %v1072 = vsel %vm975, %v1070, 0
        %1074 = vmatprep.subr.mxu0 0.0
        %1075 = vmatpush1.msra.mxu0 %v969
        %1076 = vmatprep.subr.mxu0 0.0
        %1077 = vmatpush1.msra.mxu0 %v970
        %1078 = vmatprep.subr.mxu0 0.0
        %1079 = vmatpush1.msra.mxu0 %v971
        %1080 = vmatprep.subr.mxu0 0.0
        %1081 = vmatpush1.msra.mxu0 %v972
        %1082 = vmatprep.subr.mxu0 0.0
        %1083 = vmatpush1.msra.mxu0 0.0
        %1084 = vmatprep.subr.mxu0 0.0
        %1085 = vmatpush1.msra.mxu0 0.0
        %1086 = vmatprep.subr.mxu0 0.0
        %1087 = vmatpush1.msra.mxu0 0.0
        %1088 = vmatprep.subr.mxu0 0.0
        %1089 = vmatpush1.msra.mxu0 0.0
        %1090 = vmatprep.subr.mxu0 0.0
        %1091 = vmatpush1.msra.mxu0 0.0
        %1092 = vmatprep.subr.mxu0 0.0
        %1093 = vmatpush1.msra.mxu0 0.0
        %1094 = vmatprep.subr.mxu0 0.0
        %1095 = vmatpush1.msra.mxu0 0.0
        %1096 = vmatprep.subr.mxu0 0.0
        %1097 = vmatpush1.msra.mxu0 0.0
        %1098 = vmatprep.subr.mxu0 0.0
        %1099 = vmatpush1.msra.mxu0 0.0
        %1100 = vmatprep.subr.mxu0 0.0
        %1101 = vmatpush1.msra.mxu0 0.0
        %1102 = vmatprep.subr.mxu0 0.0
        %1103 = vmatpush1.msra.mxu0 0.0
        %1104 = vmatprep.subr.mxu0 0.0
        %1105 = vmatpush1.msra.mxu0 0.0
        %1106 = vmatprep.subr.mxu0 0.0
        %1107 = vmatpush1.msra.mxu0 0.0
        %1108 = vmatprep.subr.mxu0 0.0
        %1109 = vmatpush1.msra.mxu0 0.0
        %1110 = vmatprep.subr.mxu0 0.0
        %1111 = vmatpush1.msra.mxu0 0.0
        %1112 = vmatprep.subr.mxu0 0.0
        %1113 = vmatpush1.msra.mxu0 0.0
        %1114 = vmatprep.subr.mxu0 0.0
        %1115 = vmatpush1.msra.mxu0 0.0
        %1116 = vmatprep.subr.mxu0 0.0
        %1117 = vmatpush1.msra.mxu0 0.0
        %1118 = vmatprep.subr.mxu0 0.0
        %1119 = vmatpush1.msra.mxu0 0.0
        %1120 = vmatprep.subr.mxu0 0.0
        %1121 = vmatpush1.msra.mxu0 0.0
        %1122 = vmatprep.subr.mxu0 0.0
        %1123 = vmatpush1.msra.mxu0 0.0
        %1124 = vmatprep.subr.mxu0 0.0
        %1125 = vmatpush1.msra.mxu0 0.0
        %1126 = vmatprep.subr.mxu0 0.0
        %1127 = vmatpush1.msra.mxu0 0.0
        %1128 = vmatprep.subr.mxu0 0.0
        %1129 = vmatpush1.msra.mxu0 0.0
        %1130 = vmatprep.subr.mxu0 0.0
        %1131 = vmatpush1.msra.mxu0 0.0
        %1132 = vmatprep.subr.mxu0 0.0
        %1133 = vmatpush1.msra.mxu0 0.0
        %1134 = vmatprep.subr.mxu0 0.0
        %1135 = vmatpush1.msra.mxu0 0.0
        %1136 = vmatprep.subr.mxu0 0.0
        %1137 = vmatpush1.msra.mxu0 0.0
        %1138 = vmatprep.mubr.f32.mxu0 0.0
        %1139 = vmatmul.mubr.f32.gmra.mrb[0].mxu0 %v1072
        %v1140 = vpop.f32.mrb[0].mxu0
        %v1141 = vadd.f32 0.0, %v1140
        %v1142 = vpop.f32.mrb[0].mxu0
        %1143 = vdwg.mxu0
        %v1144 = vlaneseq
        %v1145 = vshrl.u32 %v1144, 7
        %v1146 = vsub.s32 0, %v1145
        %v1147 = vrot.slane %v1141, %v1146
        %v1148 = vsub.f32 %v724, %v1147
        %v1149 = vsub.f32 %v725, %v1147
        %v1150 = vsub.f32 %v726, %v1147
        %v1151 = vsub.f32 %v727, %v1147
        %v1152 = vsub.f32 %v728, %v1147
        %v1153 = vsub.f32 %v729, %v1147
        %v1154 = vsub.f32 %v730, %v1147
        %v1155 = vsub.f32 %v731, %v1147
        %v1156 = vmul.f32 %v1148, %v1148
        %v1157 = vmul.f32 %v1149, %v1149
        %v1158 = vmul.f32 %v1150, %v1150
        %v1159 = vmul.f32 %v1151, %v1151
        %v1160 = vmul.f32 %v1152, %v1152
        %v1161 = vmul.f32 %v1153, %v1153
        %v1162 = vmul.f32 %v1154, %v1154
        %v1163 = vmul.f32 %v1155, %v1155
        %v1164 = vsel %vm975, %v1156, 0.0
        %v1165 = vsel %vm975, %v1157, 0.0
        %v1166 = vadd.f32 %v1164, %v1165
        %v1167 = vsel %vm975, %v1158, 0.0
        %v1168 = vadd.f32 %v1166, %v1167
        %v1169 = vsel %vm975, %v1159, 0.0
        %v1170 = vadd.f32 %v1168, %v1169
        %v1171 = vsel %vm975, %v1160, 0.0
        %v1172 = vadd.f32 %v1170, %v1171
        %v1173 = vsel %vm975, %v1161, 0.0
        %v1174 = vadd.f32 %v1172, %v1173
        %v1175 = vsel %vm975, %v1162, 0.0
        %v1176 = vadd.f32 %v1174, %v1175
        %v1177 = vsel %vm975, %v1163, 0.0
        %v1178 = vadd.f32 %v1176, %v1177
        %v1179 = vrot.slane %v1178, 4
        %v1180 = vadd.f32 %v1178, %v1179
        %v1181 = vrot.slane %v1180, 2
        %v1182 = vadd.f32 %v1180, %v1181
        %v1183 = vrot.slane %v1182, 1
        %v1184 = vadd.f32 %v1182, %v1183
        %v1186 = vsel %vm975, %v1184, 0
        %1188 = vmatprep.subr.mxu0 0.0
        %1189 = vmatpush1.msra.mxu0 %v965
        %1190 = vmatprep.subr.mxu0 0.0
        %1191 = vmatpush1.msra.mxu0 %v966
        %1192 = vmatprep.subr.mxu0 0.0
        %1193 = vmatpush1.msra.mxu0 %v967
        %1194 = vmatprep.subr.mxu0 0.0
        %1195 = vmatpush1.msra.mxu0 %v968
        %1196 = vmatprep.subr.mxu0 0.0
        %1197 = vmatpush1.msra.mxu0 0.0
        %1198 = vmatprep.subr.mxu0 0.0
        %1199 = vmatpush1.msra.mxu0 0.0
        %1200 = vmatprep.subr.mxu0 0.0
        %1201 = vmatpush1.msra.mxu0 0.0
        %1202 = vmatprep.subr.mxu0 0.0
        %1203 = vmatpush1.msra.mxu0 0.0
        %1204 = vmatprep.subr.mxu0 0.0
        %1205 = vmatpush1.msra.mxu0 0.0
        %1206 = vmatprep.subr.mxu0 0.0
        %1207 = vmatpush1.msra.mxu0 0.0
        %1208 = vmatprep.subr.mxu0 0.0
        %1209 = vmatpush1.msra.mxu0 0.0
        %1210 = vmatprep.subr.mxu0 0.0
        %1211 = vmatpush1.msra.mxu0 0.0
        %1212 = vmatprep.subr.mxu0 0.0
        %1213 = vmatpush1.msra.mxu0 0.0
        %1214 = vmatprep.subr.mxu0 0.0
        %1215 = vmatpush1.msra.mxu0 0.0
        %1216 = vmatprep.subr.mxu0 0.0
        %1217 = vmatpush1.msra.mxu0 0.0
        %1218 = vmatprep.subr.mxu0 0.0
        %1219 = vmatpush1.msra.mxu0 0.0
        %1220 = vmatprep.subr.mxu0 0.0
        %1221 = vmatpush1.msra.mxu0 0.0
        %1222 = vmatprep.subr.mxu0 0.0
        %1223 = vmatpush1.msra.mxu0 0.0
        %1224 = vmatprep.subr.mxu0 0.0
        %1225 = vmatpush1.msra.mxu0 0.0
        %1226 = vmatprep.subr.mxu0 0.0
        %1227 = vmatpush1.msra.mxu0 0.0
        %1228 = vmatprep.subr.mxu0 0.0
        %1229 = vmatpush1.msra.mxu0 0.0
        %1230 = vmatprep.subr.mxu0 0.0
        %1231 = vmatpush1.msra.mxu0 0.0
        %1232 = vmatprep.subr.mxu0 0.0
        %1233 = vmatpush1.msra.mxu0 0.0
        %1234 = vmatprep.subr.mxu0 0.0
        %1235 = vmatpush1.msra.mxu0 0.0
        %1236 = vmatprep.subr.mxu0 0.0
        %1237 = vmatpush1.msra.mxu0 0.0
        %1238 = vmatprep.subr.mxu0 0.0
        %1239 = vmatpush1.msra.mxu0 0.0
        %1240 = vmatprep.subr.mxu0 0.0
        %1241 = vmatpush1.msra.mxu0 0.0
        %1242 = vmatprep.subr.mxu0 0.0
        %1243 = vmatpush1.msra.mxu0 0.0
        %1244 = vmatprep.subr.mxu0 0.0
        %1245 = vmatpush1.msra.mxu0 0.0
        %1246 = vmatprep.subr.mxu0 0.0
        %1247 = vmatpush1.msra.mxu0 0.0
        %1248 = vmatprep.subr.mxu0 0.0
        %1249 = vmatpush1.msra.mxu0 0.0
        %1250 = vmatprep.subr.mxu0 0.0
        %1251 = vmatpush1.msra.mxu0 0.0
        %1252 = vmatprep.mubr.f32.mxu0 0.0
        %1253 = vmatmul.mubr.f32.gmra.mrb[0].mxu0 %v1186
        %v1254 = vpop.f32.mrb[0].mxu0
        %v1255 = vadd.f32 0.0, %v1254
        %v1256 = vpop.f32.mrb[0].mxu0
        %1257 = vdwg.mxu0
        %v1258 = vmul.f32 %v1255, 0.015625
        %v1259 = vadd.f32 %v1258, 1e-05
        %v1260 = vrsqrt.pop %v1259
        %v1262 = vsel %vm975, %v1260, 0
        %1264 = vmatprep.subr.mxu0 0.0
        %1265 = vmatpush1.msra.mxu0 %v969
        %1266 = vmatprep.subr.mxu0 0.0
        %1267 = vmatpush1.msra.mxu0 %v970
        %1268 = vmatprep.subr.mxu0 0.0
        %1269 = vmatpush1.msra.mxu0 %v971
        %1270 = vmatprep.subr.mxu0 0.0
        %1271 = vmatpush1.msra.mxu0 %v972
        %1272 = vmatprep.subr.mxu0 0.0
        %1273 = vmatpush1.msra.mxu0 0.0
        %1274 = vmatprep.subr.mxu0 0.0
        %1275 = vmatpush1.msra.mxu0 0.0
        %1276 = vmatprep.subr.mxu0 0.0
        %1277 = vmatpush1.msra.mxu0 0.0
        %1278 = vmatprep.subr.mxu0 0.0
        %1279 = vmatpush1.msra.mxu0 0.0
        %1280 = vmatprep.subr.mxu0 0.0
        %1281 = vmatpush1.msra.mxu0 0.0
        %1282 = vmatprep.subr.mxu0 0.0
        %1283 = vmatpush1.msra.mxu0 0.0
        %1284 = vmatprep.subr.mxu0 0.0
        %1285 = vmatpush1.msra.mxu0 0.0
        %1286 = vmatprep.subr.mxu0 0.0
        %1287 = vmatpush1.msra.mxu0 0.0
        %1288 = vmatprep.subr.mxu0 0.0
        %1289 = vmatpush1.msra.mxu0 0.0
        %1290 = vmatprep.subr.mxu0 0.0
        %1291 = vmatpush1.msra.mxu0 0.0
        %1292 = vmatprep.subr.mxu0 0.0
        %1293 = vmatpush1.msra.mxu0 0.0
        %1294 = vmatprep.subr.mxu0 0.0
        %1295 = vmatpush1.msra.mxu0 0.0
        %1296 = vmatprep.subr.mxu0 0.0
        %1297 = vmatpush1.msra.mxu0 0.0
        %1298 = vmatprep.subr.mxu0 0.0
        %1299 = vmatpush1.msra.mxu0 0.0
        %1300 = vmatprep.subr.mxu0 0.0
        %1301 = vmatpush1.msra.mxu0 0.0
        %1302 = vmatprep.subr.mxu0 0.0
        %1303 = vmatpush1.msra.mxu0 0.0
        %1304 = vmatprep.subr.mxu0 0.0
        %1305 = vmatpush1.msra.mxu0 0.0
        %1306 = vmatprep.subr.mxu0 0.0
        %1307 = vmatpush1.msra.mxu0 0.0
        %1308 = vmatprep.subr.mxu0 0.0
        %1309 = vmatpush1.msra.mxu0 0.0
        %1310 = vmatprep.subr.mxu0 0.0
        %1311 = vmatpush1.msra.mxu0 0.0
        %1312 = vmatprep.subr.mxu0 0.0
        %1313 = vmatpush1.msra.mxu0 0.0
        %1314 = vmatprep.subr.mxu0 0.0
        %1315 = vmatpush1.msra.mxu0 0.0
        %1316 = vmatprep.subr.mxu0 0.0
        %1317 = vmatpush1.msra.mxu0 0.0
        %1318 = vmatprep.subr.mxu0 0.0
        %1319 = vmatpush1.msra.mxu0 0.0
        %1320 = vmatprep.subr.mxu0 0.0
        %1321 = vmatpush1.msra.mxu0 0.0
        %1322 = vmatprep.subr.mxu0 0.0
        %1323 = vmatpush1.msra.mxu0 0.0
        %1324 = vmatprep.subr.mxu0 0.0
        %1325 = vmatpush1.msra.mxu0 0.0
        %1326 = vmatprep.subr.mxu0 0.0
        %1327 = vmatpush1.msra.mxu0 0.0
        %1328 = vmatprep.mubr.f32.mxu0 0.0
        %1329 = vmatmul.mubr.f32.gmra.mrb[0].mxu0 %v1262
        %v1330 = vpop.f32.mrb[0].mxu0
        %v1331 = vadd.f32 0.0, %v1330
        %v1332 = vpop.f32.mrb[0].mxu0
        %1333 = vdwg.mxu0
        %v1334 = vmul.f32 %v1331, %v973
        %v1335 = vlaneseq
        %v1336 = vshrl.u32 %v1335, 7
        %v1337 = vsub.s32 0, %v1336
        %v1338 = vrot.slane %v1334, %v1337
        %v1339 = vmul.f32 %v1148, %v1338
        %v1340 = vmul.f32 %v1149, %v1338
        %v1341 = vmul.f32 %v1150, %v1338
        %v1342 = vmul.f32 %v1151, %v1338
        %v1343 = vmul.f32 %v1152, %v1338
        %v1344 = vmul.f32 %v1153, %v1338
        %v1345 = vmul.f32 %v1154, %v1338
        %v1346 = vmul.f32 %v1155, %v1338
        %v1348 = vlaneseq
        %v1349 = vshrl.u32 %v1348, 7
        %v1350 = vsub.s32 0, %v1349
        %v1351 = vrot.slane %v974, %v1350
        %v1353 = vadd.f32 %v1339, %v1351
        %v1354 = vadd.f32 %v1340, %v1351
        %v1355 = vadd.f32 %v1341, %v1351
        %v1356 = vadd.f32 %v1342, %v1351
        %v1357 = vadd.f32 %v1343, %v1351
        %v1358 = vadd.f32 %v1344, %v1351
        %v1359 = vadd.f32 %v1345, %v1351
        %v1360 = vadd.f32 %v1346, %v1351
        %v1361 = vxor.u32 %v1353, 2147483648
        %v1362 = vxor.u32 %v1354, 2147483648
        %v1363 = vxor.u32 %v1355, 2147483648
        %v1364 = vxor.u32 %v1356, 2147483648
        %v1365 = vxor.u32 %v1357, 2147483648
        %v1366 = vxor.u32 %v1358, 2147483648
        %v1367 = vxor.u32 %v1359, 2147483648
        %v1368 = vxor.u32 %v1360, 2147483648
        %v1369 = vmul.f32 %v1361, 1.442695
        %v1370 = vpow.pop %v1369
        %v1371 = vmul.f32 %v1362, 1.442695
        %v1372 = vpow.pop %v1371
        %v1373 = vmul.f32 %v1363, 1.442695
        %v1374 = vpow.pop %v1373
        %v1375 = vmul.f32 %v1364, 1.442695
        %v1376 = vpow.pop %v1375
        %v1377 = vmul.f32 %v1365, 1.442695
        %v1378 = vpow.pop %v1377
        %v1379 = vmul.f32 %v1366, 1.442695
        %v1380 = vpow.pop %v1379
        %v1381 = vmul.f32 %v1367, 1.442695
        %v1382 = vpow.pop %v1381
        %v1383 = vmul.f32 %v1368, 1.442695
        %v1384 = vpow.pop %v1383
        %v1385 = vadd.f32 %v1370, 1.0
        %v1386 = vadd.f32 %v1372, 1.0
        %v1387 = vadd.f32 %v1374, 1.0
        %v1388 = vadd.f32 %v1376, 1.0
        %v1389 = vadd.f32 %v1378, 1.0
        %v1390 = vadd.f32 %v1380, 1.0
        %v1391 = vadd.f32 %v1382, 1.0
        %v1392 = vadd.f32 %v1384, 1.0
        %v1393 = vrcp.pop %v1385
        %v1394 = vmul.f32 1.0, %v1393
        %v1395 = vrcp.pop %v1386
        %v1396 = vmul.f32 1.0, %v1395
        %v1397 = vrcp.pop %v1387
        %v1398 = vmul.f32 1.0, %v1397
        %v1399 = vrcp.pop %v1388
        %v1400 = vmul.f32 1.0, %v1399
        %v1401 = vrcp.pop %v1389
        %v1402 = vmul.f32 1.0, %v1401
        %v1403 = vrcp.pop %v1390
        %v1404 = vmul.f32 1.0, %v1403
        %v1405 = vrcp.pop %v1391
        %v1406 = vmul.f32 1.0, %v1405
        %v1407 = vrcp.pop %v1392
        %v1408 = vmul.f32 1.0, %v1407
        %v1409 = vmul.f32 %v1353, %v1394
        %v1410 = vmul.f32 %v1354, %v1396
        %v1411 = vmul.f32 %v1355, %v1398
        %v1412 = vmul.f32 %v1356, %v1400
        %v1413 = vmul.f32 %v1357, %v1402
        %v1414 = vmul.f32 %v1358, %v1404
        %v1415 = vmul.f32 %v1359, %v1406
        %v1416 = vmul.f32 %v1360, %v1408
        %v1417 = vrot.slane %v1409, 7
        %v1418 = vrot.slane %v1410, 7
        %v1419 = vrot.slane %v1411, 7
        %v1420 = vrot.slane %v1412, 7
        %v1421 = vrot.slane %v1413, 7
        %v1422 = vrot.slane %v1414, 7
        %v1423 = vrot.slane %v1415, 7
        %v1424 = vrot.slane %v1416, 7
        %vm1425 = vcmp.lt.s32.totalorder %v733, 1
        %v1426 = vsel %vm1425, %v1423, %v1424
        %v1427 = vsel %vm1425, %v1422, %v1423
        %v1428 = vsel %vm1425, %v1421, %v1422
        %v1429 = vsel %vm1425, %v1420, %v1421
        %v1430 = vsel %vm1425, %v1419, %v1420
        %v1431 = vsel %vm1425, %v1418, %v1419
        %v1432 = vsel %vm1425, %v1417, %v1418
        %v1433 = vsel %vm1425, %v1424, %v1417
        %v1434 = vsel %vm853, 1, 0
        %v1435 = vsel %vm854, 1, 0
        %v1436 = vsel %vm855, 1, 0
        %v1437 = vsel %vm856, 1, 0
        %v1438 = vsel %vm857, 1, 0
        %v1439 = vsel %vm858, 1, 0
        %v1440 = vsel %vm859, 1, 0
        %v1441 = vsel %vm860, 1, 0
        %vm1442 = vcmp.eq.s32.totalorder %v1434, 1
        %vm1443 = vcmp.eq.s32.totalorder %v1435, 1
        %vm1444 = vcmp.eq.s32.totalorder %v1436, 1
        %vm1445 = vcmp.eq.s32.totalorder %v1437, 1
        %vm1446 = vcmp.eq.s32.totalorder %v1438, 1
        %vm1447 = vcmp.eq.s32.totalorder %v1439, 1
        %vm1448 = vcmp.eq.s32.totalorder %v1440, 1
        %vm1449 = vcmp.eq.s32.totalorder %v1441, 1
        %v1450 = vsel %vm1442, %v1426, 0.0
        %v1451 = vsel %vm1443, %v1433, 0.0
        %v1452 = vsel %vm1444, %v1432, 0.0
        %v1453 = vsel %vm1445, %v1431, 0.0
        %v1454 = vsel %vm1446, %v1430, 0.0
        %v1455 = vsel %vm1447, %v1429, 0.0
        %v1456 = vsel %vm1448, %v1428, 0.0
        %v1457 = vsel %vm1449, %v1427, 0.0
        %v1458 = vpack.c.bf16 %v1451, %v1450
        %v1459 = vpack.c.bf16 %v1453, %v1452
        %v1460 = vpack.c.bf16 %v1455, %v1454
        %v1461 = vpack.c.bf16 %v1457, %v1456
        %v1462 = vsel %vm861, 1, 0
        %v1463 = vsel %vm862, 1, 0
        %v1464 = vsel %vm863, 1, 0
        %v1465 = vsel %vm864, 1, 0
        %v1466 = vsel %vm865, 1, 0
        %v1467 = vsel %vm866, 1, 0
        %v1468 = vsel %vm867, 1, 0
        %v1469 = vsel %vm868, 1, 0
        %vm1470 = vcmp.eq.s32.totalorder %v1462, 1
        %vm1471 = vcmp.eq.s32.totalorder %v1463, 1
        %vm1472 = vcmp.eq.s32.totalorder %v1464, 1
        %vm1473 = vcmp.eq.s32.totalorder %v1465, 1
        %vm1474 = vcmp.eq.s32.totalorder %v1466, 1
        %vm1475 = vcmp.eq.s32.totalorder %v1467, 1
        %vm1476 = vcmp.eq.s32.totalorder %v1468, 1
        %vm1477 = vcmp.eq.s32.totalorder %v1469, 1
        %v1478 = vsel %vm1470, %v1416, 0.0
        %v1479 = vsel %vm1471, %v1409, 0.0
        %v1480 = vsel %vm1472, %v1410, 0.0
        %v1481 = vsel %vm1473, %v1411, 0.0
        %v1482 = vsel %vm1474, %v1412, 0.0
        %v1483 = vsel %vm1475, %v1413, 0.0
        %v1484 = vsel %vm1476, %v1414, 0.0
        %v1485 = vsel %vm1477, %v1415, 0.0
        %v1486 = vpack.c.bf16 %v1479, %v1478
        %v1487 = vpack.c.bf16 %v1481, %v1480
        %v1488 = vpack.c.bf16 %v1483, %v1482
        %v1489 = vpack.c.bf16 %v1485, %v1484
        %v1490 = vrot.slane %v1409, 1
        %v1491 = vrot.slane %v1410, 1
        %v1492 = vrot.slane %v1411, 1
        %v1493 = vrot.slane %v1412, 1
        %v1494 = vrot.slane %v1413, 1
        %v1495 = vrot.slane %v1414, 1
        %v1496 = vrot.slane %v1415, 1
        %v1497 = vrot.slane %v1416, 1
        %vm1498 = vcmp.lt.s32.totalorder %v733, 7
        %v1499 = vsel %vm1498, %v1496, %v1497
        %v1500 = vsel %vm1498, %v1495, %v1496
        %v1501 = vsel %vm1498, %v1494, %v1495
        %v1502 = vsel %vm1498, %v1493, %v1494
        %v1503 = vsel %vm1498, %v1492, %v1493
        %v1504 = vsel %vm1498, %v1491, %v1492
        %v1505 = vsel %vm1498, %v1490, %v1491
        %v1506 = vsel %vm1498, %v1497, %v1490
        %v1507 = vsel %vm885, 1, 0
        %v1508 = vsel %vm886, 1, 0
        %v1509 = vsel %vm887, 1, 0
        %v1510 = vsel %vm888, 1, 0
        %v1511 = vsel %vm889, 1, 0
        %v1512 = vsel %vm890, 1, 0
        %v1513 = vsel %vm891, 1, 0
        %v1514 = vsel %vm892, 1, 0
        %vm1515 = vcmp.eq.s32.totalorder %v1507, 1
        %vm1516 = vcmp.eq.s32.totalorder %v1508, 1
        %vm1517 = vcmp.eq.s32.totalorder %v1509, 1
        %vm1518 = vcmp.eq.s32.totalorder %v1510, 1
        %vm1519 = vcmp.eq.s32.totalorder %v1511, 1
        %vm1520 = vcmp.eq.s32.totalorder %v1512, 1
        %vm1521 = vcmp.eq.s32.totalorder %v1513, 1
        %vm1522 = vcmp.eq.s32.totalorder %v1514, 1
        %v1523 = vsel %vm1515, %v1506, 0.0
        %v1524 = vsel %vm1516, %v1505, 0.0
        %v1525 = vsel %vm1517, %v1504, 0.0
        %v1526 = vsel %vm1518, %v1503, 0.0
        %v1527 = vsel %vm1519, %v1502, 0.0
        %v1528 = vsel %vm1520, %v1501, 0.0
        %v1529 = vsel %vm1521, %v1500, 0.0
        %v1530 = vsel %vm1522, %v1499, 0.0
        %v1531 = vpack.c.bf16 %v1524, %v1523
        %v1532 = vpack.c.bf16 %v1526, %v1525
        %v1533 = vpack.c.bf16 %v1528, %v1527
        %v1534 = vpack.c.bf16 %v1530, %v1529
        %v1535 = vsel %vm901, 1, 0
        %v1536 = vsel %vm902, 1, 0
        %v1537 = vsel %vm903, 1, 0
        %v1538 = vsel %vm904, 1, 0
        %v1539 = vsel %vm905, 1, 0
        %v1540 = vsel %vm906, 1, 0
        %v1541 = vsel %vm907, 1, 0
        %v1542 = vsel %vm908, 1, 0
        %vm1543 = vcmp.eq.s32.totalorder %v1535, 1
        %vm1544 = vcmp.eq.s32.totalorder %v1536, 1
        %vm1545 = vcmp.eq.s32.totalorder %v1537, 1
        %vm1546 = vcmp.eq.s32.totalorder %v1538, 1
        %vm1547 = vcmp.eq.s32.totalorder %v1539, 1
        %vm1548 = vcmp.eq.s32.totalorder %v1540, 1
        %vm1549 = vcmp.eq.s32.totalorder %v1541, 1
        %vm1550 = vcmp.eq.s32.totalorder %v1542, 1
        %v1551 = vsel %vm1543, %v1433, 0.0
        %v1552 = vsel %vm1544, %v1432, 0.0
        %v1553 = vsel %vm1545, %v1431, 0.0
        %v1554 = vsel %vm1546, %v1430, 0.0
        %v1555 = vsel %vm1547, %v1429, 0.0
        %v1556 = vsel %vm1548, %v1428, 0.0
        %v1557 = vsel %vm1549, %v1427, 0.0
        %v1558 = vsel %vm1550, %v1426, 0.0
        %v1559 = vpack.c.bf16 %v1552, %v1551
        %v1560 = vpack.c.bf16 %v1554, %v1553
        %v1561 = vpack.c.bf16 %v1556, %v1555
        %v1562 = vpack.c.bf16 %v1558, %v1557
        %v1563 = vpack.c.bf16 %v1410, %v1409
        %v1564 = vpack.c.bf16 %v1412, %v1411
        %v1565 = vpack.c.bf16 %v1414, %v1413
        %v1566 = vpack.c.bf16 %v1416, %v1415
        %v1567 = vsel %vm917, 1, 0
        %v1568 = vsel %vm918, 1, 0
        %v1569 = vsel %vm919, 1, 0
        %v1570 = vsel %vm920, 1, 0
        %v1571 = vsel %vm921, 1, 0
        %v1572 = vsel %vm922, 1, 0
        %v1573 = vsel %vm923, 1, 0
        %v1574 = vsel %vm924, 1, 0
        %vm1575 = vcmp.eq.s32.totalorder %v1567, 1
        %vm1576 = vcmp.eq.s32.totalorder %v1568, 1
        %vm1577 = vcmp.eq.s32.totalorder %v1569, 1
        %vm1578 = vcmp.eq.s32.totalorder %v1570, 1
        %vm1579 = vcmp.eq.s32.totalorder %v1571, 1
        %vm1580 = vcmp.eq.s32.totalorder %v1572, 1
        %vm1581 = vcmp.eq.s32.totalorder %v1573, 1
        %vm1582 = vcmp.eq.s32.totalorder %v1574, 1
        %v1583 = vsel %vm1575, %v1505, 0.0
        %v1584 = vsel %vm1576, %v1504, 0.0
        %v1585 = vsel %vm1577, %v1503, 0.0
        %v1586 = vsel %vm1578, %v1502, 0.0
        %v1587 = vsel %vm1579, %v1501, 0.0
        %v1588 = vsel %vm1580, %v1500, 0.0
        %v1589 = vsel %vm1581, %v1499, 0.0
        %v1590 = vsel %vm1582, %v1506, 0.0
        %v1591 = vpack.c.bf16 %v1584, %v1583
        %v1592 = vpack.c.bf16 %v1586, %v1585
        %v1593 = vpack.c.bf16 %v1588, %v1587
        %v1594 = vpack.c.bf16 %v1590, %v1589
        %v1595 = vsel %vm933, 1, 0
        %v1596 = vsel %vm934, 1, 0
        %v1597 = vsel %vm935, 1, 0
        %v1598 = vsel %vm936, 1, 0
        %v1599 = vsel %vm937, 1, 0
        %v1600 = vsel %vm938, 1, 0
        %v1601 = vsel %vm939, 1, 0
        %v1602 = vsel %vm940, 1, 0
        %vm1603 = vcmp.eq.s32.totalorder %v1595, 1
        %vm1604 = vcmp.eq.s32.totalorder %v1596, 1
        %vm1605 = vcmp.eq.s32.totalorder %v1597, 1
        %vm1606 = vcmp.eq.s32.totalorder %v1598, 1
        %vm1607 = vcmp.eq.s32.totalorder %v1599, 1
        %vm1608 = vcmp.eq.s32.totalorder %v1600, 1
        %vm1609 = vcmp.eq.s32.totalorder %v1601, 1
        %vm1610 = vcmp.eq.s32.totalorder %v1602, 1
        %v1611 = vsel %vm1603, %v1432, 0.0
        %v1612 = vsel %vm1604, %v1431, 0.0
        %v1613 = vsel %vm1605, %v1430, 0.0
        %v1614 = vsel %vm1606, %v1429, 0.0
        %v1615 = vsel %vm1607, %v1428, 0.0
        %v1616 = vsel %vm1608, %v1427, 0.0
        %v1617 = vsel %vm1609, %v1426, 0.0
        %v1618 = vsel %vm1610, %v1433, 0.0
        %v1619 = vpack.c.bf16 %v1612, %v1611
        %v1620 = vpack.c.bf16 %v1614, %v1613
        %v1621 = vpack.c.bf16 %v1616, %v1615
        %v1622 = vpack.c.bf16 %v1618, %v1617
        %v1623 = vsel %vm941, 1, 0
        %v1624 = vsel %vm942, 1, 0
        %v1625 = vsel %vm943, 1, 0
        %v1626 = vsel %vm944, 1, 0
        %v1627 = vsel %vm945, 1, 0
        %v1628 = vsel %vm946, 1, 0
        %v1629 = vsel %vm947, 1, 0
        %v1630 = vsel %vm948, 1, 0
        %vm1631 = vcmp.eq.s32.totalorder %v1623, 1
        %vm1632 = vcmp.eq.s32.totalorder %v1624, 1
        %vm1633 = vcmp.eq.s32.totalorder %v1625, 1
        %vm1634 = vcmp.eq.s32.totalorder %v1626, 1
        %vm1635 = vcmp.eq.s32.totalorder %v1627, 1
        %vm1636 = vcmp.eq.s32.totalorder %v1628, 1
        %vm1637 = vcmp.eq.s32.totalorder %v1629, 1
        %vm1638 = vcmp.eq.s32.totalorder %v1630, 1
        %v1639 = vsel %vm1631, %v1410, 0.0
        %v1640 = vsel %vm1632, %v1411, 0.0
        %v1641 = vsel %vm1633, %v1412, 0.0
        %v1642 = vsel %vm1634, %v1413, 0.0
        %v1643 = vsel %vm1635, %v1414, 0.0
        %v1644 = vsel %vm1636, %v1415, 0.0
        %v1645 = vsel %vm1637, %v1416, 0.0
        %v1646 = vsel %vm1638, %v1409, 0.0
        %v1647 = vpack.c.bf16 %v1640, %v1639
        %v1648 = vpack.c.bf16 %v1642, %v1641
        %v1649 = vpack.c.bf16 %v1644, %v1643
        %v1650 = vpack.c.bf16 %v1646, %v1645
        %v1651 = vsel %vm957, 1, 0
        %v1652 = vsel %vm958, 1, 0
        %v1653 = vsel %vm959, 1, 0
        %v1654 = vsel %vm960, 1, 0
        %v1655 = vsel %vm961, 1, 0
        %v1656 = vsel %vm962, 1, 0
        %v1657 = vsel %vm963, 1, 0
        %v1658 = vsel %vm964, 1, 0
        %vm1659 = vcmp.eq.s32.totalorder %v1651, 1
        %vm1660 = vcmp.eq.s32.totalorder %v1652, 1
        %vm1661 = vcmp.eq.s32.totalorder %v1653, 1
        %vm1662 = vcmp.eq.s32.totalorder %v1654, 1
        %vm1663 = vcmp.eq.s32.totalorder %v1655, 1
        %vm1664 = vcmp.eq.s32.totalorder %v1656, 1
        %vm1665 = vcmp.eq.s32.totalorder %v1657, 1
        %vm1666 = vcmp.eq.s32.totalorder %v1658, 1
        %v1667 = vsel %vm1659, %v1504, 0.0
        %v1668 = vsel %vm1660, %v1503, 0.0
        %v1669 = vsel %vm1661, %v1502, 0.0
        %v1670 = vsel %vm1662, %v1501, 0.0
        %v1671 = vsel %vm1663, %v1500, 0.0
        %v1672 = vsel %vm1664, %v1499, 0.0
        %v1673 = vsel %vm1665, %v1506, 0.0
        %v1674 = vsel %vm1666, %v1505, 0.0
        %v1675 = vpack.c.bf16 %v1668, %v1667
        %v1676 = vpack.c.bf16 %v1670, %v1669
        %v1677 = vpack.c.bf16 %v1672, %v1671
        %v1678 = vpack.c.bf16 %v1674, %v1673
        %1683 = vrot.lane.b32.xlu0 %v1486, 32
        %v1684 = vpop.permute.xlu0 %1683
        %1685 = vrot.lane.b32.xlu0 %v1487, 32
        %v1686 = vpop.permute.xlu0 %1685
        %1687 = vrot.lane.b32.xlu0 %v1488, 32
        %v1688 = vpop.permute.xlu0 %1687
        %1689 = vrot.lane.b32.xlu0 %v1489, 32
        %v1690 = vpop.permute.xlu0 %1689
        %1695 = vrot.lane.b32.xlu0 %v1531, 64
        %v1696 = vpop.permute.xlu0 %1695
        %1697 = vrot.lane.b32.xlu0 %v1532, 64
        %v1698 = vpop.permute.xlu0 %1697
        %1699 = vrot.lane.b32.xlu0 %v1533, 64
        %v1700 = vpop.permute.xlu0 %1699
        %1701 = vrot.lane.b32.xlu0 %v1534, 64
        %v1702 = vpop.permute.xlu0 %1701
        %1707 = vrot.lane.b32.xlu0 %v1559, 96
        %v1708 = vpop.permute.xlu0 %1707
        %1709 = vrot.lane.b32.xlu0 %v1560, 96
        %v1710 = vpop.permute.xlu0 %1709
        %1711 = vrot.lane.b32.xlu0 %v1561, 96
        %v1712 = vpop.permute.xlu0 %1711
        %1713 = vrot.lane.b32.xlu0 %v1562, 96
        %v1714 = vpop.permute.xlu0 %1713
        %1719 = vrot.lane.b32.xlu0 %v1591, 32
        %v1720 = vpop.permute.xlu0 %1719
        %1721 = vrot.lane.b32.xlu0 %v1592, 32
        %v1722 = vpop.permute.xlu0 %1721
        %1723 = vrot.lane.b32.xlu0 %v1593, 32
        %v1724 = vpop.permute.xlu0 %1723
        %1725 = vrot.lane.b32.xlu0 %v1594, 32
        %v1726 = vpop.permute.xlu0 %1725
        %1731 = vrot.lane.b32.xlu0 %v1619, 64
        %v1732 = vpop.permute.xlu0 %1731
        %1733 = vrot.lane.b32.xlu0 %v1620, 64
        %v1734 = vpop.permute.xlu0 %1733
        %1735 = vrot.lane.b32.xlu0 %v1621, 64
        %v1736 = vpop.permute.xlu0 %1735
        %1737 = vrot.lane.b32.xlu0 %v1622, 64
        %v1738 = vpop.permute.xlu0 %1737
        %1743 = vrot.lane.b32.xlu0 %v1647, 96
        %v1744 = vpop.permute.xlu0 %1743
        %1745 = vrot.lane.b32.xlu0 %v1648, 96
        %v1746 = vpop.permute.xlu0 %1745
        %1747 = vrot.lane.b32.xlu0 %v1649, 96
        %v1748 = vpop.permute.xlu0 %1747
        %1749 = vrot.lane.b32.xlu0 %v1650, 96
        %v1750 = vpop.permute.xlu0 %1749
        %v1753 = vsel %vm975, %v1458, %v1684
        %v1756 = vsel %vm975, %v1459, %v1686
        %v1759 = vsel %vm975, %v1460, %v1688
        %v1762 = vsel %vm975, %v1461, %v1690
        %vm1763 = vcmask 523264
        %v1765 = vsel %vm1763, %v1753, %v1696
        %v1767 = vsel %vm1763, %v1756, %v1698
        %v1769 = vsel %vm1763, %v1759, %v1700
        %v1771 = vsel %vm1763, %v1762, %v1702
        %vm1772 = vcmask 785408
        %v1774 = vsel %vm1772, %v1765, %v1708
        %v1777 = vsel %vm1772, %v1767, %v1710
        %v1780 = vsel %vm1772, %v1769, %v1712
        %v1783 = vsel %vm1772, %v1771, %v1714
        %v1787 = vsel %vm975, %v1563, %v1720
        %v1790 = vsel %vm975, %v1564, %v1722
        %v1793 = vsel %vm975, %v1565, %v1724
        %v1796 = vsel %vm975, %v1566, %v1726
        %v1798 = vsel %vm1763, %v1787, %v1732
        %v1800 = vsel %vm1763, %v1790, %v1734
        %v1802 = vsel %vm1763, %v1793, %v1736
        %v1804 = vsel %vm1763, %v1796, %v1738
        %v1806 = vsel %vm1772, %v1798, %v1744
        %v1809 = vsel %vm1772, %v1800, %v1746
        %v1812 = vsel %vm1772, %v1802, %v1748
        %v1815 = vsel %vm1772, %v1804, %v1750
        %v1817 = vld [vmem:[%s6] sm:$0xf]
        %v1818 = vld [vmem:[%s6 + $0x4] sm:$0xf]
        %v1819 = vld [vmem:[%s6 + $0x8] sm:$0xf]
        %v1820 = vld [vmem:[%s6 + $0xc] sm:$0xf]
        %v1821 = vld [vmem:[%s6 + $0x10] sm:$0xf]
        %v1822 = vld [vmem:[%s6 + $0x14] sm:$0xf]
        %v1823 = vld [vmem:[%s6 + $0x18] sm:$0xf]
        %v1824 = vld [vmem:[%s6 + $0x1c] sm:$0xf]
        %v1825 = vld [vmem:[%s6 + $0x20] sm:$0xf]
        %v1826 = vld [vmem:[%s6 + $0x24] sm:$0xf]
        %v1827 = vld [vmem:[%s6 + $0x28] sm:$0xf]
        %v1828 = vld [vmem:[%s6 + $0x2c] sm:$0xf]
        %v1829 = vld [vmem:[%s6 + $0x30] sm:$0xf]
        %v1830 = vld [vmem:[%s6 + $0x34] sm:$0xf]
        %v1831 = vld [vmem:[%s6 + $0x38] sm:$0xf]
        %v1832 = vld [vmem:[%s6 + $0x3c] sm:$0xf]
        %v1833 = vld [vmem:[%s6 + $0x40] sm:$0xf]
        %v1834 = vld [vmem:[%s6 + $0x44] sm:$0xf]
        %v1835 = vld [vmem:[%s6 + $0x48] sm:$0xf]
        %v1836 = vld [vmem:[%s6 + $0x4c] sm:$0xf]
        %v1837 = vld [vmem:[%s6 + $0x50] sm:$0xf]
        %v1838 = vld [vmem:[%s6 + $0x54] sm:$0xf]
        %v1839 = vld [vmem:[%s6 + $0x58] sm:$0xf]
        %v1840 = vld [vmem:[%s6 + $0x5c] sm:$0xf]
        %v1841 = vld [vmem:[%s6 + $0x60] sm:$0xf]
        %v1842 = vld [vmem:[%s6 + $0x64] sm:$0xf]
        %v1843 = vld [vmem:[%s6 + $0x68] sm:$0xf]
        %v1844 = vld [vmem:[%s6 + $0x6c] sm:$0xf]
        %v1845 = vld [vmem:[%s6 + $0x70] sm:$0xf]
        %v1846 = vld [vmem:[%s6 + $0x74] sm:$0xf]
        %v1847 = vld [vmem:[%s6 + $0x78] sm:$0xf]
        %v1848 = vld [vmem:[%s6 + $0x7c] sm:$0xf]
        %v1849 = vld [vmem:[%s6 + $0x80] sm:$0xf]
        %v1850 = vld [vmem:[%s6 + $0x84] sm:$0xf]
        %v1851 = vld [vmem:[%s6 + $0x88] sm:$0xf]
        %v1852 = vld [vmem:[%s6 + $0x8c] sm:$0xf]
        %v1853 = vld [vmem:[%s7] sm:$0x1]
        %v1855 = vlaneseq
        %v1856 = vshrl.u32 %v1855, 7
        %v1857 = vsub.s32 0, %v1856
        %v1858 = vrot.slane %v1853, %v1857
        %v1896 = vunpack.c.l.b16 %v1817
        %v1897 = vunpack.c.l.b16 %v1818
        %v1898 = vunpack.c.l.b16 %v1819
        %v1899 = vunpack.c.l.b16 %v1820
        %v1900 = vunpack.c.l.b16 %v1821
        %v1901 = vunpack.c.l.b16 %v1822
        %v1902 = vunpack.c.l.b16 %v1823
        %v1903 = vunpack.c.l.b16 %v1824
        %v1904 = vunpack.c.l.b16 %v1825
        %v1905 = vunpack.c.l.b16 %v1826
        %v1906 = vunpack.c.l.b16 %v1827
        %v1907 = vunpack.c.l.b16 %v1828
        %v1908 = vunpack.c.l.b16 %v1829
        %v1909 = vunpack.c.l.b16 %v1830
        %v1910 = vunpack.c.l.b16 %v1831
        %v1911 = vunpack.c.l.b16 %v1832
        %v1912 = vunpack.c.l.b16 %v1833
        %v1913 = vunpack.c.l.b16 %v1834
        %v1914 = vunpack.c.l.b16 %v1835
        %v1915 = vunpack.c.l.b16 %v1836
        %v1916 = vunpack.c.l.b16 %v1837
        %v1917 = vunpack.c.l.b16 %v1838
        %v1918 = vunpack.c.l.b16 %v1839
        %v1919 = vunpack.c.l.b16 %v1840
        %v1920 = vunpack.c.l.b16 %v1841
        %v1921 = vunpack.c.l.b16 %v1842
        %v1922 = vunpack.c.l.b16 %v1843
        %v1923 = vunpack.c.l.b16 %v1844
        %v1924 = vunpack.c.l.b16 %v1845
        %v1925 = vunpack.c.l.b16 %v1846
        %v1926 = vunpack.c.l.b16 %v1847
        %v1927 = vunpack.c.l.b16 %v1848
        %v1928 = vunpack.c.l.b16 %v1849
        %v1929 = vunpack.c.l.b16 %v1850
        %v1930 = vunpack.c.l.b16 %v1851
        %v1931 = vunpack.c.l.b16 %v1852
        %v1932 = vpack.c.b16 %v1897, %v1896
        %v1933 = vpack.c.b16 %v1899, %v1898
        %v1934 = vpack.c.b16 %v1901, %v1900
        %v1935 = vpack.c.b16 %v1903, %v1902
        %v1936 = vpack.c.b16 %v1905, %v1904
        %v1937 = vpack.c.b16 %v1907, %v1906
        %v1938 = vpack.c.b16 %v1909, %v1908
        %v1939 = vpack.c.b16 %v1911, %v1910
        %v1940 = vpack.c.b16 %v1913, %v1912
        %v1941 = vpack.c.b16 %v1915, %v1914
        %v1942 = vpack.c.b16 %v1917, %v1916
        %v1943 = vpack.c.b16 %v1919, %v1918
        %v1944 = vpack.c.b16 %v1921, %v1920
        %v1945 = vpack.c.b16 %v1923, %v1922
        %v1946 = vpack.c.b16 %v1925, %v1924
        %v1947 = vpack.c.b16 %v1927, %v1926
        %v1948 = vpack.c.b16 %v1929, %v1928
        %v1949 = vpack.c.b16 %v1931, %v1930
        %v1969 = vsel %vm975, %v1675, 0
        %v1972 = vsel %vm975, %v1676, 0
        %v1975 = vsel %vm975, %v1677, 0
        %v1978 = vsel %vm975, %v1678, 0
        %1980 = vmatprep.subr.bf16.mxu0 0
        %1981 = vmatpush1.bf16.msra.mxu0 %v1932
        %1982 = vmatprep.subr.bf16.mxu0 0
        %1983 = vmatpush1.bf16.msra.mxu0 %v1933
        %1984 = vmatprep.subr.bf16.mxu0 0
        %1985 = vmatpush1.bf16.msra.mxu0 %v1934
        %1986 = vmatprep.subr.bf16.mxu0 0
        %1987 = vmatpush1.bf16.msra.mxu0 %v1935
        %1988 = vmatprep.subr.bf16.mxu0 0
        %1989 = vmatpush1.bf16.msra.mxu0 %v1936
        %1990 = vmatprep.subr.bf16.mxu0 0
        %1991 = vmatpush1.bf16.msra.mxu0 %v1937
        %1992 = vmatprep.subr.bf16.mxu0 0
        %1993 = vmatpush1.bf16.msra.mxu0 %v1938
        %1994 = vmatprep.subr.bf16.mxu0 0
        %1995 = vmatpush1.bf16.msra.mxu0 %v1939
        %1996 = vmatprep.subr.bf16.mxu0 0
        %1997 = vmatpush1.bf16.msra.mxu0 %v1940
        %1998 = vmatprep.subr.bf16.mxu0 0
        %1999 = vmatpush1.bf16.msra.mxu0 %v1941
        %2000 = vmatprep.subr.bf16.mxu0 0
        %2001 = vmatpush1.bf16.msra.mxu0 %v1942
        %2002 = vmatprep.subr.bf16.mxu0 0
        %2003 = vmatpush1.bf16.msra.mxu0 %v1943
        %2004 = vmatprep.subr.bf16.mxu0 0
        %2005 = vmatpush1.bf16.msra.mxu0 %v1944
        %2006 = vmatprep.subr.bf16.mxu0 0
        %2007 = vmatpush1.bf16.msra.mxu0 %v1945
        %2008 = vmatprep.subr.bf16.mxu0 0
        %2009 = vmatpush1.bf16.msra.mxu0 %v1946
        %2010 = vmatprep.subr.bf16.mxu0 0
        %2011 = vmatpush1.bf16.msra.mxu0 %v1947
        %2012 = vmatprep.mubr.bf16.mxu0 %v1806
        %2013 = vmatmul.mubr.bf16.gmra.mrb[0].mxu0 %v1774
        %v2014 = vpop.f32.mrb[0].mxu0
        %v2015 = vadd.f32 %v1858, %v2014
        %v2016 = vpop.f32.mrb[0].mxu0
        %v2017 = vpop.f32.mrb[0].mxu0
        %v2018 = vadd.f32 %v1858, %v2017
        %v2019 = vpop.f32.mrb[0].mxu0
        %2020 = vmatprep.mubr.bf16.mxu0 %v1809
        %2021 = vmatmul.mubr.bf16.gmra.mrb[0].mxu0 %v1777
        %v2022 = vpop.f32.mrb[0].mxu0
        %v2023 = vadd.f32 %v1858, %v2022
        %v2024 = vpop.f32.mrb[0].mxu0
        %v2025 = vpop.f32.mrb[0].mxu0
        %v2026 = vadd.f32 %v1858, %v2025
        %v2027 = vpop.f32.mrb[0].mxu0
        %2028 = vmatprep.mubr.bf16.mxu0 %v1812
        %2029 = vmatmul.mubr.bf16.gmra.mrb[0].mxu0 %v1780
        %v2030 = vpop.f32.mrb[0].mxu0
        %v2031 = vadd.f32 %v1858, %v2030
        %v2032 = vpop.f32.mrb[0].mxu0
        %v2033 = vpop.f32.mrb[0].mxu0
        %v2034 = vadd.f32 %v1858, %v2033
        %v2035 = vpop.f32.mrb[0].mxu0
        %2036 = vmatprep.mubr.bf16.mxu0 %v1815
        %2037 = vmatmul.mubr.bf16.gmra.mrb[0].mxu0 %v1783
        %v2038 = vpop.f32.mrb[0].mxu0
        %v2039 = vadd.f32 %v1858, %v2038
        %v2040 = vpop.f32.mrb[0].mxu0
        %v2041 = vpop.f32.mrb[0].mxu0
        %v2042 = vadd.f32 %v1858, %v2041
        %v2043 = vpop.f32.mrb[0].mxu0
        %2044 = vdwg.mxu0
        %2045 = vmatprep.subr.bf16.mxu0 0
        %2046 = vmatpush1.bf16.msra.mxu0 %v1948
        %2047 = vmatprep.subr.bf16.mxu0 0
        %2048 = vmatpush1.bf16.msra.mxu0 %v1949
        %2049 = vmatprep.subr.bf16.mxu0 0
        %2050 = vmatpush1.bf16.msra.mxu0 0
        %2051 = vmatprep.subr.bf16.mxu0 0
        %2052 = vmatpush1.bf16.msra.mxu0 0
        %2053 = vmatprep.subr.bf16.mxu0 0
        %2054 = vmatpush1.bf16.msra.mxu0 0
        %2055 = vmatprep.subr.bf16.mxu0 0
        %2056 = vmatpush1.bf16.msra.mxu0 0
        %2057 = vmatprep.subr.bf16.mxu0 0
        %2058 = vmatpush1.bf16.msra.mxu0 0
        %2059 = vmatprep.subr.bf16.mxu0 0
        %2060 = vmatpush1.bf16.msra.mxu0 0
        %2061 = vmatprep.subr.bf16.mxu0 0
        %2062 = vmatpush1.bf16.msra.mxu0 0
        %2063 = vmatprep.subr.bf16.mxu0 0
        %2064 = vmatpush1.bf16.msra.mxu0 0
        %2065 = vmatprep.subr.bf16.mxu0 0
        %2066 = vmatpush1.bf16.msra.mxu0 0
        %2067 = vmatprep.subr.bf16.mxu0 0
        %2068 = vmatpush1.bf16.msra.mxu0 0
        %2069 = vmatprep.subr.bf16.mxu0 0
        %2070 = vmatpush1.bf16.msra.mxu0 0
        %2071 = vmatprep.subr.bf16.mxu0 0
        %2072 = vmatpush1.bf16.msra.mxu0 0
        %2073 = vmatprep.subr.bf16.mxu0 0
        %2074 = vmatpush1.bf16.msra.mxu0 0
        %2075 = vmatprep.subr.bf16.mxu0 0
        %2076 = vmatpush1.bf16.msra.mxu0 0
        %2077 = vmatprep.mubr.bf16.mxu0 0
        %2078 = vmatmul.mubr.bf16.gmra.mrb[0].mxu0 %v1969
        %v2079 = vpop.f32.mrb[0].mxu0
        %v2080 = vadd.f32 %v2015, %v2079
        %v2081 = vpop.f32.mrb[0].mxu0
        %v2082 = vpop.f32.mrb[0].mxu0
        %v2083 = vadd.f32 %v2018, %v2082
        %v2084 = vpop.f32.mrb[0].mxu0
        %2085 = vmatprep.mubr.bf16.mxu0 0
        %2086 = vmatmul.mubr.bf16.gmra.mrb[0].mxu0 %v1972
        %v2087 = vpop.f32.mrb[0].mxu0
        %v2088 = vadd.f32 %v2023, %v2087
        %v2089 = vpop.f32.mrb[0].mxu0
        %v2090 = vpop.f32.mrb[0].mxu0
        %v2091 = vadd.f32 %v2026, %v2090
        %v2092 = vpop.f32.mrb[0].mxu0
        %2093 = vmatprep.mubr.bf16.mxu0 0
        %2094 = vmatmul.mubr.bf16.gmra.mrb[0].mxu0 %v1975
        %v2095 = vpop.f32.mrb[0].mxu0
        %v2096 = vadd.f32 %v2031, %v2095
        %v2097 = vpop.f32.mrb[0].mxu0
        %v2098 = vpop.f32.mrb[0].mxu0
        %v2099 = vadd.f32 %v2034, %v2098
        %v2100 = vpop.f32.mrb[0].mxu0
        %2101 = vmatprep.mubr.bf16.mxu0 0
        %2102 = vmatmul.mubr.bf16.gmra.mrb[0].mxu0 %v1978
        %v2103 = vpop.f32.mrb[0].mxu0
        %v2104 = vadd.f32 %v2039, %v2103
        %v2105 = vpop.f32.mrb[0].mxu0
        %v2106 = vpop.f32.mrb[0].mxu0
        %v2107 = vadd.f32 %v2042, %v2106
        %v2108 = vpop.f32.mrb[0].mxu0
        %2109 = vdwg.mxu0
        %v2110 = vld [vmem:[%s722] sm:$0x1]
        %v2111 = vxor.u32 %v2110, 2147483648
        %v2112 = vmul.f32 %v2111, 1.442695
        %v2113 = vpow.pop %v2112
        %v2114 = vadd.f32 %v2113, 1.0
        %v2115 = vrcp.pop %v2114
        %v2116 = vmul.f32 1.0, %v2115
        %v2117 = vmul.f32 %v2110, %v2116
        %v2118 = vld [vmem:[%s8] sm:$0xff]
        %v2119 = vld [vmem:[%s8 + $0x8] sm:$0xff]
        %vm2120 = vcmask 130048
        %v2122 = vsel %vm2120, %v2117, 0
        %2124 = vmatprep.subr.mxu0 0.0
        %2125 = vmatpush1.msra.mxu0 %v2118
        %2126 = vmatprep.subr.mxu0 0.0
        %2127 = vmatpush1.msra.mxu0 %v2119
        %2128 = vmatprep.subr.mxu0 0.0
        %2129 = vmatpush1.msra.mxu0 0.0
        %2130 = vmatprep.subr.mxu0 0.0
        %2131 = vmatpush1.msra.mxu0 0.0
        %2132 = vmatprep.subr.mxu0 0.0
        %2133 = vmatpush1.msra.mxu0 0.0
        %2134 = vmatprep.subr.mxu0 0.0
        %2135 = vmatpush1.msra.mxu0 0.0
        %2136 = vmatprep.subr.mxu0 0.0
        %2137 = vmatpush1.msra.mxu0 0.0
        %2138 = vmatprep.subr.mxu0 0.0
        %2139 = vmatpush1.msra.mxu0 0.0
        %2140 = vmatprep.subr.mxu0 0.0
        %2141 = vmatpush1.msra.mxu0 0.0
        %2142 = vmatprep.subr.mxu0 0.0
        %2143 = vmatpush1.msra.mxu0 0.0
        %2144 = vmatprep.subr.mxu0 0.0
        %2145 = vmatpush1.msra.mxu0 0.0
        %2146 = vmatprep.subr.mxu0 0.0
        %2147 = vmatpush1.msra.mxu0 0.0
        %2148 = vmatprep.subr.mxu0 0.0
        %2149 = vmatpush1.msra.mxu0 0.0
        %2150 = vmatprep.subr.mxu0 0.0
        %2151 = vmatpush1.msra.mxu0 0.0
        %2152 = vmatprep.subr.mxu0 0.0
        %2153 = vmatpush1.msra.mxu0 0.0
        %2154 = vmatprep.subr.mxu0 0.0
        %2155 = vmatpush1.msra.mxu0 0.0
        %2156 = vmatprep.subr.mxu0 0.0
        %2157 = vmatpush1.msra.mxu0 0.0
        %2158 = vmatprep.subr.mxu0 0.0
        %2159 = vmatpush1.msra.mxu0 0.0
        %2160 = vmatprep.subr.mxu0 0.0
        %2161 = vmatpush1.msra.mxu0 0.0
        %2162 = vmatprep.subr.mxu0 0.0
        %2163 = vmatpush1.msra.mxu0 0.0
        %2164 = vmatprep.subr.mxu0 0.0
        %2165 = vmatpush1.msra.mxu0 0.0
        %2166 = vmatprep.subr.mxu0 0.0
        %2167 = vmatpush1.msra.mxu0 0.0
        %2168 = vmatprep.subr.mxu0 0.0
        %2169 = vmatpush1.msra.mxu0 0.0
        %2170 = vmatprep.subr.mxu0 0.0
        %2171 = vmatpush1.msra.mxu0 0.0
        %2172 = vmatprep.subr.mxu0 0.0
        %2173 = vmatpush1.msra.mxu0 0.0
        %2174 = vmatprep.subr.mxu0 0.0
        %2175 = vmatpush1.msra.mxu0 0.0
        %2176 = vmatprep.subr.mxu0 0.0
        %2177 = vmatpush1.msra.mxu0 0.0
        %2178 = vmatprep.subr.mxu0 0.0
        %2179 = vmatpush1.msra.mxu0 0.0
        %2180 = vmatprep.subr.mxu0 0.0
        %2181 = vmatpush1.msra.mxu0 0.0
        %2182 = vmatprep.subr.mxu0 0.0
        %2183 = vmatpush1.msra.mxu0 0.0
        %2184 = vmatprep.subr.mxu0 0.0
        %2185 = vmatpush1.msra.mxu0 0.0
        %2186 = vmatprep.subr.mxu0 0.0
        %2187 = vmatpush1.msra.mxu0 0.0
        %2188 = vmatprep.mubr.f32.mxu0 0.0
        %2189 = vmatmul.mubr.f32.gmra.mrb[0].mxu0 %v2122
        %v2190 = vpop.f32.mrb[0].mxu0
        %v2191 = vadd.f32 0.0, %v2190
        %v2192 = vpop.f32.mrb[0].mxu0
        %2193 = vdwg.mxu0
        %v2194 = vlaneseq
        %v2195 = vshrl.u32 %v2194, 7
        %v2196 = vsub.s32 0, %v2195
        %v2197 = vrot.slane %v2191, %v2196
        %v2198 = vadd.f32 %v2080, %v2197
        %v2199 = vadd.f32 %v2083, %v2197
        %v2200 = vadd.f32 %v2088, %v2197
        %v2201 = vadd.f32 %v2091, %v2197
        %v2202 = vadd.f32 %v2096, %v2197
        %v2203 = vadd.f32 %v2099, %v2197
        %v2204 = vadd.f32 %v2104, %v2197
        %v2205 = vadd.f32 %v2107, %v2197
        %v2206 = vld [vmem:[%s9] sm:$0xff]
        %v2207 = vld [vmem:[%s9 + $0x8] sm:$0xff]
        %v2208 = vld [vmem:[%s9 + $0x10] sm:$0xff]
        %v2209 = vld [vmem:[%s9 + $0x18] sm:$0xff]
        %v2210 = vld [vmem:[%s9 + $0x20] sm:$0xff]
        %v2211 = vld [vmem:[%s9 + $0x28] sm:$0xff]
        %v2212 = vld [vmem:[%s9 + $0x30] sm:$0xff]
        %v2213 = vld [vmem:[%s9 + $0x38] sm:$0xff]
        %v2214 = vld [vmem:[%s10] sm:$0xff]
        %v2215 = vld [vmem:[%s10 + $0x8] sm:$0xff]
        %v2216 = vld [vmem:[%s10 + $0x10] sm:$0xff]
        %v2217 = vld [vmem:[%s10 + $0x18] sm:$0xff]
        %v2218 = vld [vmem:[%s11] sm:$0x1]
        %v2219 = vld [vmem:[%s12] sm:$0x1]
        %v2220 = vsel %vm1763, %v2198, 0.0
        %v2221 = vsel %vm1763, %v2199, 0.0
        %v2222 = vadd.f32 %v2220, %v2221
        %v2223 = vsel %vm1763, %v2200, 0.0
        %v2224 = vadd.f32 %v2222, %v2223
        %v2225 = vsel %vm1763, %v2201, 0.0
        %v2226 = vadd.f32 %v2224, %v2225
        %v2227 = vsel %vm1763, %v2202, 0.0
        %v2228 = vadd.f32 %v2226, %v2227
        %v2229 = vsel %vm1763, %v2203, 0.0
        %v2230 = vadd.f32 %v2228, %v2229
        %v2231 = vsel %vm1763, %v2204, 0.0
        %v2232 = vadd.f32 %v2230, %v2231
        %v2233 = vsel %vm1763, %v2205, 0.0
        %v2234 = vadd.f32 %v2232, %v2233
        %v2235 = vrot.slane %v2234, 4
        %v2236 = vadd.f32 %v2234, %v2235
        %v2237 = vrot.slane %v2236, 2
        %v2238 = vadd.f32 %v2236, %v2237
        %v2239 = vrot.slane %v2238, 1
        %v2240 = vadd.f32 %v2238, %v2239
        %v2242 = vsel %vm1763, %v2240, 0
        %2244 = vmatprep.subr.mxu0 0.0
        %2245 = vmatpush1.msra.mxu0 %v2206
        %2246 = vmatprep.subr.mxu0 0.0
        %2247 = vmatpush1.msra.mxu0 %v2207
        %2248 = vmatprep.subr.mxu0 0.0
        %2249 = vmatpush1.msra.mxu0 %v2208
        %2250 = vmatprep.subr.mxu0 0.0
        %2251 = vmatpush1.msra.mxu0 %v2209
        %2252 = vmatprep.subr.mxu0 0.0
        %2253 = vmatpush1.msra.mxu0 %v2210
        %2254 = vmatprep.subr.mxu0 0.0
        %2255 = vmatpush1.msra.mxu0 %v2211
        %2256 = vmatprep.subr.mxu0 0.0
        %2257 = vmatpush1.msra.mxu0 %v2212
        %2258 = vmatprep.subr.mxu0 0.0
        %2259 = vmatpush1.msra.mxu0 %v2213
        %2260 = vmatprep.subr.mxu0 0.0
        %2261 = vmatpush1.msra.mxu0 0.0
        %2262 = vmatprep.subr.mxu0 0.0
        %2263 = vmatpush1.msra.mxu0 0.0
        %2264 = vmatprep.subr.mxu0 0.0
        %2265 = vmatpush1.msra.mxu0 0.0
        %2266 = vmatprep.subr.mxu0 0.0
        %2267 = vmatpush1.msra.mxu0 0.0
        %2268 = vmatprep.subr.mxu0 0.0
        %2269 = vmatpush1.msra.mxu0 0.0
        %2270 = vmatprep.subr.mxu0 0.0
        %2271 = vmatpush1.msra.mxu0 0.0
        %2272 = vmatprep.subr.mxu0 0.0
        %2273 = vmatpush1.msra.mxu0 0.0
        %2274 = vmatprep.subr.mxu0 0.0
        %2275 = vmatpush1.msra.mxu0 0.0
        %2276 = vmatprep.subr.mxu0 0.0
        %2277 = vmatpush1.msra.mxu0 0.0
        %2278 = vmatprep.subr.mxu0 0.0
        %2279 = vmatpush1.msra.mxu0 0.0
        %2280 = vmatprep.subr.mxu0 0.0
        %2281 = vmatpush1.msra.mxu0 0.0
        %2282 = vmatprep.subr.mxu0 0.0
        %2283 = vmatpush1.msra.mxu0 0.0
        %2284 = vmatprep.subr.mxu0 0.0
        %2285 = vmatpush1.msra.mxu0 0.0
        %2286 = vmatprep.subr.mxu0 0.0
        %2287 = vmatpush1.msra.mxu0 0.0
        %2288 = vmatprep.subr.mxu0 0.0
        %2289 = vmatpush1.msra.mxu0 0.0
        %2290 = vmatprep.subr.mxu0 0.0
        %2291 = vmatpush1.msra.mxu0 0.0
        %2292 = vmatprep.subr.mxu0 0.0
        %2293 = vmatpush1.msra.mxu0 0.0
        %2294 = vmatprep.subr.mxu0 0.0
        %2295 = vmatpush1.msra.mxu0 0.0
        %2296 = vmatprep.subr.mxu0 0.0
        %2297 = vmatpush1.msra.mxu0 0.0
        %2298 = vmatprep.subr.mxu0 0.0
        %2299 = vmatpush1.msra.mxu0 0.0
        %2300 = vmatprep.subr.mxu0 0.0
        %2301 = vmatpush1.msra.mxu0 0.0
        %2302 = vmatprep.subr.mxu0 0.0
        %2303 = vmatpush1.msra.mxu0 0.0
        %2304 = vmatprep.subr.mxu0 0.0
        %2305 = vmatpush1.msra.mxu0 0.0
        %2306 = vmatprep.subr.mxu0 0.0
        %2307 = vmatpush1.msra.mxu0 0.0
        %2308 = vmatprep.mubr.f32.mxu0 0.0
        %2309 = vmatmul.mubr.f32.gmra.mrb[0].mxu0 %v2242
        %v2310 = vpop.f32.mrb[0].mxu0
        %v2311 = vadd.f32 0.0, %v2310
        %v2312 = vpop.f32.mrb[0].mxu0
        %2313 = vdwg.mxu0
        %v2314 = vmul.f32 %v2311, 0.0078125
        %v2316 = vsel %vm975, %v2314, 0
        %2318 = vmatprep.subr.mxu0 0.0
        %2319 = vmatpush1.msra.mxu0 %v2214
        %2320 = vmatprep.subr.mxu0 0.0
        %2321 = vmatpush1.msra.mxu0 %v2215
        %2322 = vmatprep.subr.mxu0 0.0
        %2323 = vmatpush1.msra.mxu0 %v2216
        %2324 = vmatprep.subr.mxu0 0.0
        %2325 = vmatpush1.msra.mxu0 %v2217
        %2326 = vmatprep.subr.mxu0 0.0
        %2327 = vmatpush1.msra.mxu0 0.0
        %2328 = vmatprep.subr.mxu0 0.0
        %2329 = vmatpush1.msra.mxu0 0.0
        %2330 = vmatprep.subr.mxu0 0.0
        %2331 = vmatpush1.msra.mxu0 0.0
        %2332 = vmatprep.subr.mxu0 0.0
        %2333 = vmatpush1.msra.mxu0 0.0
        %2334 = vmatprep.subr.mxu0 0.0
        %2335 = vmatpush1.msra.mxu0 0.0
        %2336 = vmatprep.subr.mxu0 0.0
        %2337 = vmatpush1.msra.mxu0 0.0
        %2338 = vmatprep.subr.mxu0 0.0
        %2339 = vmatpush1.msra.mxu0 0.0
        %2340 = vmatprep.subr.mxu0 0.0
        %2341 = vmatpush1.msra.mxu0 0.0
        %2342 = vmatprep.subr.mxu0 0.0
        %2343 = vmatpush1.msra.mxu0 0.0
        %2344 = vmatprep.subr.mxu0 0.0
        %2345 = vmatpush1.msra.mxu0 0.0
        %2346 = vmatprep.subr.mxu0 0.0
        %2347 = vmatpush1.msra.mxu0 0.0
        %2348 = vmatprep.subr.mxu0 0.0
        %2349 = vmatpush1.msra.mxu0 0.0
        %2350 = vmatprep.subr.mxu0 0.0
        %2351 = vmatpush1.msra.mxu0 0.0
        %2352 = vmatprep.subr.mxu0 0.0
        %2353 = vmatpush1.msra.mxu0 0.0
        %2354 = vmatprep.subr.mxu0 0.0
        %2355 = vmatpush1.msra.mxu0 0.0
        %2356 = vmatprep.subr.mxu0 0.0
        %2357 = vmatpush1.msra.mxu0 0.0
        %2358 = vmatprep.subr.mxu0 0.0
        %2359 = vmatpush1.msra.mxu0 0.0
        %2360 = vmatprep.subr.mxu0 0.0
        %2361 = vmatpush1.msra.mxu0 0.0
        %2362 = vmatprep.subr.mxu0 0.0
        %2363 = vmatpush1.msra.mxu0 0.0
        %2364 = vmatprep.subr.mxu0 0.0
        %2365 = vmatpush1.msra.mxu0 0.0
        %2366 = vmatprep.subr.mxu0 0.0
        %2367 = vmatpush1.msra.mxu0 0.0
        %2368 = vmatprep.subr.mxu0 0.0
        %2369 = vmatpush1.msra.mxu0 0.0
        %2370 = vmatprep.subr.mxu0 0.0
        %2371 = vmatpush1.msra.mxu0 0.0
        %2372 = vmatprep.subr.mxu0 0.0
        %2373 = vmatpush1.msra.mxu0 0.0
        %2374 = vmatprep.subr.mxu0 0.0
        %2375 = vmatpush1.msra.mxu0 0.0
        %2376 = vmatprep.subr.mxu0 0.0
        %2377 = vmatpush1.msra.mxu0 0.0
        %2378 = vmatprep.subr.mxu0 0.0
        %2379 = vmatpush1.msra.mxu0 0.0
        %2380 = vmatprep.subr.mxu0 0.0
        %2381 = vmatpush1.msra.mxu0 0.0
        %2382 = vmatprep.mubr.f32.mxu0 0.0
        %2383 = vmatmul.mubr.f32.gmra.mrb[0].mxu0 %v2316
        %v2384 = vpop.f32.mrb[0].mxu0
        %v2385 = vadd.f32 0.0, %v2384
        %v2386 = vpop.f32.mrb[0].mxu0
        %2387 = vdwg.mxu0
        %v2388 = vlaneseq
        %v2389 = vshrl.u32 %v2388, 7
        %v2390 = vsub.s32 0, %v2389
        %v2391 = vrot.slane %v2385, %v2390
        %v2392 = vsub.f32 %v2198, %v2391
        %v2393 = vsub.f32 %v2199, %v2391
        %v2394 = vsub.f32 %v2200, %v2391
        %v2395 = vsub.f32 %v2201, %v2391
        %v2396 = vsub.f32 %v2202, %v2391
        %v2397 = vsub.f32 %v2203, %v2391
        %v2398 = vsub.f32 %v2204, %v2391
        %v2399 = vsub.f32 %v2205, %v2391
        %v2400 = vmul.f32 %v2392, %v2392
        %v2401 = vmul.f32 %v2393, %v2393
        %v2402 = vmul.f32 %v2394, %v2394
        %v2403 = vmul.f32 %v2395, %v2395
        %v2404 = vmul.f32 %v2396, %v2396
        %v2405 = vmul.f32 %v2397, %v2397
        %v2406 = vmul.f32 %v2398, %v2398
        %v2407 = vmul.f32 %v2399, %v2399
        %v2408 = vsel %vm1763, %v2400, 0.0
        %v2409 = vsel %vm1763, %v2401, 0.0
        %v2410 = vadd.f32 %v2408, %v2409
        %v2411 = vsel %vm1763, %v2402, 0.0
        %v2412 = vadd.f32 %v2410, %v2411
        %v2413 = vsel %vm1763, %v2403, 0.0
        %v2414 = vadd.f32 %v2412, %v2413
        %v2415 = vsel %vm1763, %v2404, 0.0
        %v2416 = vadd.f32 %v2414, %v2415
        %v2417 = vsel %vm1763, %v2405, 0.0
        %v2418 = vadd.f32 %v2416, %v2417
        %v2419 = vsel %vm1763, %v2406, 0.0
        %v2420 = vadd.f32 %v2418, %v2419
        %v2421 = vsel %vm1763, %v2407, 0.0
        %v2422 = vadd.f32 %v2420, %v2421
        %v2423 = vrot.slane %v2422, 4
        %v2424 = vadd.f32 %v2422, %v2423
        %v2425 = vrot.slane %v2424, 2
        %v2426 = vadd.f32 %v2424, %v2425
        %v2427 = vrot.slane %v2426, 1
        %v2428 = vadd.f32 %v2426, %v2427
        %v2430 = vsel %vm1763, %v2428, 0
        %2432 = vmatprep.subr.mxu0 0.0
        %2433 = vmatpush1.msra.mxu0 %v2206
        %2434 = vmatprep.subr.mxu0 0.0
        %2435 = vmatpush1.msra.mxu0 %v2207
        %2436 = vmatprep.subr.mxu0 0.0
        %2437 = vmatpush1.msra.mxu0 %v2208
        %2438 = vmatprep.subr.mxu0 0.0
        %2439 = vmatpush1.msra.mxu0 %v2209
        %2440 = vmatprep.subr.mxu0 0.0
        %2441 = vmatpush1.msra.mxu0 %v2210
        %2442 = vmatprep.subr.mxu0 0.0
        %2443 = vmatpush1.msra.mxu0 %v2211
        %2444 = vmatprep.subr.mxu0 0.0
        %2445 = vmatpush1.msra.mxu0 %v2212
        %2446 = vmatprep.subr.mxu0 0.0
        %2447 = vmatpush1.msra.mxu0 %v2213
        %2448 = vmatprep.subr.mxu0 0.0
        %2449 = vmatpush1.msra.mxu0 0.0
        %2450 = vmatprep.subr.mxu0 0.0
        %2451 = vmatpush1.msra.mxu0 0.0
        %2452 = vmatprep.subr.mxu0 0.0
        %2453 = vmatpush1.msra.mxu0 0.0
        %2454 = vmatprep.subr.mxu0 0.0
        %2455 = vmatpush1.msra.mxu0 0.0
        %2456 = vmatprep.subr.mxu0 0.0
        %2457 = vmatpush1.msra.mxu0 0.0
        %2458 = vmatprep.subr.mxu0 0.0
        %2459 = vmatpush1.msra.mxu0 0.0
        %2460 = vmatprep.subr.mxu0 0.0
        %2461 = vmatpush1.msra.mxu0 0.0
        %2462 = vmatprep.subr.mxu0 0.0
        %2463 = vmatpush1.msra.mxu0 0.0
        %2464 = vmatprep.subr.mxu0 0.0
        %2465 = vmatpush1.msra.mxu0 0.0
        %2466 = vmatprep.subr.mxu0 0.0
        %2467 = vmatpush1.msra.mxu0 0.0
        %2468 = vmatprep.subr.mxu0 0.0
        %2469 = vmatpush1.msra.mxu0 0.0
        %2470 = vmatprep.subr.mxu0 0.0
        %2471 = vmatpush1.msra.mxu0 0.0
        %2472 = vmatprep.subr.mxu0 0.0
        %2473 = vmatpush1.msra.mxu0 0.0
        %2474 = vmatprep.subr.mxu0 0.0
        %2475 = vmatpush1.msra.mxu0 0.0
        %2476 = vmatprep.subr.mxu0 0.0
        %2477 = vmatpush1.msra.mxu0 0.0
        %2478 = vmatprep.subr.mxu0 0.0
        %2479 = vmatpush1.msra.mxu0 0.0
        %2480 = vmatprep.subr.mxu0 0.0
        %2481 = vmatpush1.msra.mxu0 0.0
        %2482 = vmatprep.subr.mxu0 0.0
        %2483 = vmatpush1.msra.mxu0 0.0
        %2484 = vmatprep.subr.mxu0 0.0
        %2485 = vmatpush1.msra.mxu0 0.0
        %2486 = vmatprep.subr.mxu0 0.0
        %2487 = vmatpush1.msra.mxu0 0.0
        %2488 = vmatprep.subr.mxu0 0.0
        %2489 = vmatpush1.msra.mxu0 0.0
        %2490 = vmatprep.subr.mxu0 0.0
        %2491 = vmatpush1.msra.mxu0 0.0
        %2492 = vmatprep.subr.mxu0 0.0
        %2493 = vmatpush1.msra.mxu0 0.0
        %2494 = vmatprep.subr.mxu0 0.0
        %2495 = vmatpush1.msra.mxu0 0.0
        %2496 = vmatprep.mubr.f32.mxu0 0.0
        %2497 = vmatmul.mubr.f32.gmra.mrb[0].mxu0 %v2430
        %v2498 = vpop.f32.mrb[0].mxu0
        %v2499 = vadd.f32 0.0, %v2498
        %v2500 = vpop.f32.mrb[0].mxu0
        %2501 = vdwg.mxu0
        %v2502 = vmul.f32 %v2499, 0.0078125
        %v2503 = vadd.f32 %v2502, 1e-05
        %v2504 = vrsqrt.pop %v2503
        %v2506 = vsel %vm975, %v2504, 0
        %2508 = vmatprep.subr.mxu0 0.0
        %2509 = vmatpush1.msra.mxu0 %v2214
        %2510 = vmatprep.subr.mxu0 0.0
        %2511 = vmatpush1.msra.mxu0 %v2215
        %2512 = vmatprep.subr.mxu0 0.0
        %2513 = vmatpush1.msra.mxu0 %v2216
        %2514 = vmatprep.subr.mxu0 0.0
        %2515 = vmatpush1.msra.mxu0 %v2217
        %2516 = vmatprep.subr.mxu0 0.0
        %2517 = vmatpush1.msra.mxu0 0.0
        %2518 = vmatprep.subr.mxu0 0.0
        %2519 = vmatpush1.msra.mxu0 0.0
        %2520 = vmatprep.subr.mxu0 0.0
        %2521 = vmatpush1.msra.mxu0 0.0
        %2522 = vmatprep.subr.mxu0 0.0
        %2523 = vmatpush1.msra.mxu0 0.0
        %2524 = vmatprep.subr.mxu0 0.0
        %2525 = vmatpush1.msra.mxu0 0.0
        %2526 = vmatprep.subr.mxu0 0.0
        %2527 = vmatpush1.msra.mxu0 0.0
        %2528 = vmatprep.subr.mxu0 0.0
        %2529 = vmatpush1.msra.mxu0 0.0
        %2530 = vmatprep.subr.mxu0 0.0
        %2531 = vmatpush1.msra.mxu0 0.0
        %2532 = vmatprep.subr.mxu0 0.0
        %2533 = vmatpush1.msra.mxu0 0.0
        %2534 = vmatprep.subr.mxu0 0.0
        %2535 = vmatpush1.msra.mxu0 0.0
        %2536 = vmatprep.subr.mxu0 0.0
        %2537 = vmatpush1.msra.mxu0 0.0
        %2538 = vmatprep.subr.mxu0 0.0
        %2539 = vmatpush1.msra.mxu0 0.0
        %2540 = vmatprep.subr.mxu0 0.0
        %2541 = vmatpush1.msra.mxu0 0.0
        %2542 = vmatprep.subr.mxu0 0.0
        %2543 = vmatpush1.msra.mxu0 0.0
        %2544 = vmatprep.subr.mxu0 0.0
        %2545 = vmatpush1.msra.mxu0 0.0
        %2546 = vmatprep.subr.mxu0 0.0
        %2547 = vmatpush1.msra.mxu0 0.0
        %2548 = vmatprep.subr.mxu0 0.0
        %2549 = vmatpush1.msra.mxu0 0.0
        %2550 = vmatprep.subr.mxu0 0.0
        %2551 = vmatpush1.msra.mxu0 0.0
        %2552 = vmatprep.subr.mxu0 0.0
        %2553 = vmatpush1.msra.mxu0 0.0
        %2554 = vmatprep.subr.mxu0 0.0
        %2555 = vmatpush1.msra.mxu0 0.0
        %2556 = vmatprep.subr.mxu0 0.0
        %2557 = vmatpush1.msra.mxu0 0.0
        %2558 = vmatprep.subr.mxu0 0.0
        %2559 = vmatpush1.msra.mxu0 0.0
        %2560 = vmatprep.subr.mxu0 0.0
        %2561 = vmatpush1.msra.mxu0 0.0
        %2562 = vmatprep.subr.mxu0 0.0
        %2563 = vmatpush1.msra.mxu0 0.0
        %2564 = vmatprep.subr.mxu0 0.0
        %2565 = vmatpush1.msra.mxu0 0.0
        %2566 = vmatprep.subr.mxu0 0.0
        %2567 = vmatpush1.msra.mxu0 0.0
        %2568 = vmatprep.subr.mxu0 0.0
        %2569 = vmatpush1.msra.mxu0 0.0
        %2570 = vmatprep.subr.mxu0 0.0
        %2571 = vmatpush1.msra.mxu0 0.0
        %2572 = vmatprep.mubr.f32.mxu0 0.0
        %2573 = vmatmul.mubr.f32.gmra.mrb[0].mxu0 %v2506
        %v2574 = vpop.f32.mrb[0].mxu0
        %v2575 = vadd.f32 0.0, %v2574
        %v2576 = vpop.f32.mrb[0].mxu0
        %2577 = vdwg.mxu0
        %v2578 = vmul.f32 %v2575, %v2218
        %v2579 = vlaneseq
        %v2580 = vshrl.u32 %v2579, 7
        %v2581 = vsub.s32 0, %v2580
        %v2582 = vrot.slane %v2578, %v2581
        %v2583 = vmul.f32 %v2392, %v2582
        %v2584 = vmul.f32 %v2393, %v2582
        %v2585 = vmul.f32 %v2394, %v2582
        %v2586 = vmul.f32 %v2395, %v2582
        %v2587 = vmul.f32 %v2396, %v2582
        %v2588 = vmul.f32 %v2397, %v2582
        %v2589 = vmul.f32 %v2398, %v2582
        %v2590 = vmul.f32 %v2399, %v2582
        %v2592 = vlaneseq
        %v2593 = vshrl.u32 %v2592, 7
        %v2594 = vsub.s32 0, %v2593
        %v2595 = vrot.slane %v2219, %v2594
        %v2597 = vadd.f32 %v2583, %v2595
        %v2598 = vadd.f32 %v2584, %v2595
        %v2599 = vadd.f32 %v2585, %v2595
        %v2600 = vadd.f32 %v2586, %v2595
        %v2601 = vadd.f32 %v2587, %v2595
        %v2602 = vadd.f32 %v2588, %v2595
        %v2603 = vadd.f32 %v2589, %v2595
        %v2604 = vadd.f32 %v2590, %v2595
        %v2605 = vxor.u32 %v2597, 2147483648
        %v2606 = vxor.u32 %v2598, 2147483648
        %v2607 = vxor.u32 %v2599, 2147483648
        %v2608 = vxor.u32 %v2600, 2147483648
        %v2609 = vxor.u32 %v2601, 2147483648
        %v2610 = vxor.u32 %v2602, 2147483648
        %v2611 = vxor.u32 %v2603, 2147483648
        %v2612 = vxor.u32 %v2604, 2147483648
        %v2613 = vmul.f32 %v2605, 1.442695
        %v2614 = vpow.pop %v2613
        %v2615 = vmul.f32 %v2606, 1.442695
        %v2616 = vpow.pop %v2615
        %v2617 = vmul.f32 %v2607, 1.442695
        %v2618 = vpow.pop %v2617
        %v2619 = vmul.f32 %v2608, 1.442695
        %v2620 = vpow.pop %v2619
        %v2621 = vmul.f32 %v2609, 1.442695
        %v2622 = vpow.pop %v2621
        %v2623 = vmul.f32 %v2610, 1.442695
        %v2624 = vpow.pop %v2623
        %v2625 = vmul.f32 %v2611, 1.442695
        %v2626 = vpow.pop %v2625
        %v2627 = vmul.f32 %v2612, 1.442695
        %v2628 = vpow.pop %v2627
        %v2629 = vadd.f32 %v2614, 1.0
        %v2630 = vadd.f32 %v2616, 1.0
        %v2631 = vadd.f32 %v2618, 1.0
        %v2632 = vadd.f32 %v2620, 1.0
        %v2633 = vadd.f32 %v2622, 1.0
        %v2634 = vadd.f32 %v2624, 1.0
        %v2635 = vadd.f32 %v2626, 1.0
        %v2636 = vadd.f32 %v2628, 1.0
        %v2637 = vrcp.pop %v2629
        %v2638 = vmul.f32 1.0, %v2637
        %v2639 = vrcp.pop %v2630
        %v2640 = vmul.f32 1.0, %v2639
        %v2641 = vrcp.pop %v2631
        %v2642 = vmul.f32 1.0, %v2641
        %v2643 = vrcp.pop %v2632
        %v2644 = vmul.f32 1.0, %v2643
        %v2645 = vrcp.pop %v2633
        %v2646 = vmul.f32 1.0, %v2645
        %v2647 = vrcp.pop %v2634
        %v2648 = vmul.f32 1.0, %v2647
        %v2649 = vrcp.pop %v2635
        %v2650 = vmul.f32 1.0, %v2649
        %v2651 = vrcp.pop %v2636
        %v2652 = vmul.f32 1.0, %v2651
        %v2653 = vmul.f32 %v2597, %v2638
        %v2654 = vmul.f32 %v2598, %v2640
        %v2655 = vmul.f32 %v2599, %v2642
        %v2656 = vmul.f32 %v2600, %v2644
        %v2657 = vmul.f32 %v2601, %v2646
        %v2658 = vmul.f32 %v2602, %v2648
        %v2659 = vmul.f32 %v2603, %v2650
        %v2660 = vmul.f32 %v2604, %v2652
        %v2661 = vrot.slane %v2653, 7
        %v2662 = vrot.slane %v2654, 7
        %v2663 = vrot.slane %v2655, 7
        %v2664 = vrot.slane %v2656, 7
        %v2665 = vrot.slane %v2657, 7
        %v2666 = vrot.slane %v2658, 7
        %v2667 = vrot.slane %v2659, 7
        %v2668 = vrot.slane %v2660, 7
        %v2669 = vsel %vm1425, %v2667, %v2668
        %v2670 = vsel %vm1425, %v2666, %v2667
        %v2671 = vsel %vm1425, %v2665, %v2666
        %v2672 = vsel %vm1425, %v2664, %v2665
        %v2673 = vsel %vm1425, %v2663, %v2664
        %v2674 = vsel %vm1425, %v2662, %v2663
        %v2675 = vsel %vm1425, %v2661, %v2662
        %v2676 = vsel %vm1425, %v2668, %v2661
        %v2677 = vsel %vm1442, %v2669, 0.0
        %v2678 = vsel %vm1443, %v2676, 0.0
        %v2679 = vsel %vm1444, %v2675, 0.0
        %v2680 = vsel %vm1445, %v2674, 0.0
        %v2681 = vsel %vm1446, %v2673, 0.0
        %v2682 = vsel %vm1447, %v2672, 0.0
        %v2683 = vsel %vm1448, %v2671, 0.0
        %v2684 = vsel %vm1449, %v2670, 0.0
        %v2685 = vpack.c.bf16 %v2678, %v2677
        %v2686 = vpack.c.bf16 %v2680, %v2679
        %v2687 = vpack.c.bf16 %v2682, %v2681
        %v2688 = vpack.c.bf16 %v2684, %v2683
        %v2689 = vsel %vm1470, %v2660, 0.0
        %v2690 = vsel %vm1471, %v2653, 0.0
        %v2691 = vsel %vm1472, %v2654, 0.0
        %v2692 = vsel %vm1473, %v2655, 0.0
        %v2693 = vsel %vm1474, %v2656, 0.0
        %v2694 = vsel %vm1475, %v2657, 0.0
        %v2695 = vsel %vm1476, %v2658, 0.0
        %v2696 = vsel %vm1477, %v2659, 0.0
        %v2697 = vpack.c.bf16 %v2690, %v2689
        %v2698 = vpack.c.bf16 %v2692, %v2691
        %v2699 = vpack.c.bf16 %v2694, %v2693
        %v2700 = vpack.c.bf16 %v2696, %v2695
        %v2701 = vrot.slane %v2653, 1
        %v2702 = vrot.slane %v2654, 1
        %v2703 = vrot.slane %v2655, 1
        %v2704 = vrot.slane %v2656, 1
        %v2705 = vrot.slane %v2657, 1
        %v2706 = vrot.slane %v2658, 1
        %v2707 = vrot.slane %v2659, 1
        %v2708 = vrot.slane %v2660, 1
        %v2709 = vsel %vm1498, %v2707, %v2708
        %v2710 = vsel %vm1498, %v2706, %v2707
        %v2711 = vsel %vm1498, %v2705, %v2706
        %v2712 = vsel %vm1498, %v2704, %v2705
        %v2713 = vsel %vm1498, %v2703, %v2704
        %v2714 = vsel %vm1498, %v2702, %v2703
        %v2715 = vsel %vm1498, %v2701, %v2702
        %v2716 = vsel %vm1498, %v2708, %v2701
        %v2717 = vsel %vm1515, %v2716, 0.0
        %v2718 = vsel %vm1516, %v2715, 0.0
        %v2719 = vsel %vm1517, %v2714, 0.0
        %v2720 = vsel %vm1518, %v2713, 0.0
        %v2721 = vsel %vm1519, %v2712, 0.0
        %v2722 = vsel %vm1520, %v2711, 0.0
        %v2723 = vsel %vm1521, %v2710, 0.0
        %v2724 = vsel %vm1522, %v2709, 0.0
        %v2725 = vpack.c.bf16 %v2718, %v2717
        %v2726 = vpack.c.bf16 %v2720, %v2719
        %v2727 = vpack.c.bf16 %v2722, %v2721
        %v2728 = vpack.c.bf16 %v2724, %v2723
        %v2729 = vsel %vm1543, %v2676, 0.0
        %v2730 = vsel %vm1544, %v2675, 0.0
        %v2731 = vsel %vm1545, %v2674, 0.0
        %v2732 = vsel %vm1546, %v2673, 0.0
        %v2733 = vsel %vm1547, %v2672, 0.0
        %v2734 = vsel %vm1548, %v2671, 0.0
        %v2735 = vsel %vm1549, %v2670, 0.0
        %v2736 = vsel %vm1550, %v2669, 0.0
        %v2737 = vpack.c.bf16 %v2730, %v2729
        %v2738 = vpack.c.bf16 %v2732, %v2731
        %v2739 = vpack.c.bf16 %v2734, %v2733
        %v2740 = vpack.c.bf16 %v2736, %v2735
        %v2741 = vpack.c.bf16 %v2654, %v2653
        %v2742 = vpack.c.bf16 %v2656, %v2655
        %v2743 = vpack.c.bf16 %v2658, %v2657
        %v2744 = vpack.c.bf16 %v2660, %v2659
        %v2745 = vsel %vm1575, %v2715, 0.0
        %v2746 = vsel %vm1576, %v2714, 0.0
        %v2747 = vsel %vm1577, %v2713, 0.0
        %v2748 = vsel %vm1578, %v2712, 0.0
        %v2749 = vsel %vm1579, %v2711, 0.0
        %v2750 = vsel %vm1580, %v2710, 0.0
        %v2751 = vsel %vm1581, %v2709, 0.0
        %v2752 = vsel %vm1582, %v2716, 0.0
        %v2753 = vpack.c.bf16 %v2746, %v2745
        %v2754 = vpack.c.bf16 %v2748, %v2747
        %v2755 = vpack.c.bf16 %v2750, %v2749
        %v2756 = vpack.c.bf16 %v2752, %v2751
        %v2757 = vsel %vm1603, %v2675, 0.0
        %v2758 = vsel %vm1604, %v2674, 0.0
        %v2759 = vsel %vm1605, %v2673, 0.0
        %v2760 = vsel %vm1606, %v2672, 0.0
        %v2761 = vsel %vm1607, %v2671, 0.0
        %v2762 = vsel %vm1608, %v2670, 0.0
        %v2763 = vsel %vm1609, %v2669, 0.0
        %v2764 = vsel %vm1610, %v2676, 0.0
        %v2765 = vpack.c.bf16 %v2758, %v2757
        %v2766 = vpack.c.bf16 %v2760, %v2759
        %v2767 = vpack.c.bf16 %v2762, %v2761
        %v2768 = vpack.c.bf16 %v2764, %v2763
        %v2769 = vsel %vm1631, %v2654, 0.0
        %v2770 = vsel %vm1632, %v2655, 0.0
        %v2771 = vsel %vm1633, %v2656, 0.0
        %v2772 = vsel %vm1634, %v2657, 0.0
        %v2773 = vsel %vm1635, %v2658, 0.0
        %v2774 = vsel %vm1636, %v2659, 0.0
        %v2775 = vsel %vm1637, %v2660, 0.0
        %v2776 = vsel %vm1638, %v2653, 0.0
        %v2777 = vpack.c.bf16 %v2770, %v2769
        %v2778 = vpack.c.bf16 %v2772, %v2771
        %v2779 = vpack.c.bf16 %v2774, %v2773
        %v2780 = vpack.c.bf16 %v2776, %v2775
        %v2781 = vsel %vm1659, %v2714, 0.0
        %v2782 = vsel %vm1660, %v2713, 0.0
        %v2783 = vsel %vm1661, %v2712, 0.0
        %v2784 = vsel %vm1662, %v2711, 0.0
        %v2785 = vsel %vm1663, %v2710, 0.0
        %v2786 = vsel %vm1664, %v2709, 0.0
        %v2787 = vsel %vm1665, %v2716, 0.0
        %v2788 = vsel %vm1666, %v2715, 0.0
        %v2789 = vpack.c.bf16 %v2782, %v2781
        %v2790 = vpack.c.bf16 %v2784, %v2783
        %v2791 = vpack.c.bf16 %v2786, %v2785
        %v2792 = vpack.c.bf16 %v2788, %v2787
        %2797 = vrot.lane.b32.xlu0 %v2697, 64
        %v2798 = vpop.permute.xlu0 %2797
        %2799 = vrot.lane.b32.xlu0 %v2698, 64
        %v2800 = vpop.permute.xlu0 %2799
        %2801 = vrot.lane.b32.xlu0 %v2699, 64
        %v2802 = vpop.permute.xlu0 %2801
        %2803 = vrot.lane.b32.xlu0 %v2700, 64
        %v2804 = vpop.permute.xlu0 %2803
        %2809 = vrot.lane.b32.xlu0 %v2737, 64
        %v2810 = vpop.permute.xlu0 %2809
        %2811 = vrot.lane.b32.xlu0 %v2738, 64
        %v2812 = vpop.permute.xlu0 %2811
        %2813 = vrot.lane.b32.xlu0 %v2739, 64
        %v2814 = vpop.permute.xlu0 %2813
        %2815 = vrot.lane.b32.xlu0 %v2740, 64
        %v2816 = vpop.permute.xlu0 %2815
        %2821 = vrot.lane.b32.xlu0 %v2753, 64
        %v2822 = vpop.permute.xlu0 %2821
        %2823 = vrot.lane.b32.xlu0 %v2754, 64
        %v2824 = vpop.permute.xlu0 %2823
        %2825 = vrot.lane.b32.xlu0 %v2755, 64
        %v2826 = vpop.permute.xlu0 %2825
        %2827 = vrot.lane.b32.xlu0 %v2756, 64
        %v2828 = vpop.permute.xlu0 %2827
        %2833 = vrot.lane.b32.xlu0 %v2777, 64
        %v2834 = vpop.permute.xlu0 %2833
        %2835 = vrot.lane.b32.xlu0 %v2778, 64
        %v2836 = vpop.permute.xlu0 %2835
        %2837 = vrot.lane.b32.xlu0 %v2779, 64
        %v2838 = vpop.permute.xlu0 %2837
        %2839 = vrot.lane.b32.xlu0 %v2780, 64
        %v2840 = vpop.permute.xlu0 %2839
        %v2843 = vsel %vm1763, %v2685, %v2798
        %v2847 = vsel %vm1763, %v2686, %v2800
        %v2851 = vsel %vm1763, %v2687, %v2802
        %v2855 = vsel %vm1763, %v2688, %v2804
        %v2859 = vsel %vm1763, %v2725, %v2810
        %v2863 = vsel %vm1763, %v2726, %v2812
        %v2867 = vsel %vm1763, %v2727, %v2814
        %v2871 = vsel %vm1763, %v2728, %v2816
        %v2875 = vsel %vm1763, %v2741, %v2822
        %v2879 = vsel %vm1763, %v2742, %v2824
        %v2883 = vsel %vm1763, %v2743, %v2826
        %v2887 = vsel %vm1763, %v2744, %v2828
        %v2891 = vsel %vm1763, %v2765, %v2834
        %v2895 = vsel %vm1763, %v2766, %v2836
        %v2899 = vsel %vm1763, %v2767, %v2838
        %v2903 = vsel %vm1763, %v2768, %v2840
        %v2905 = vld [vmem:[%s13] sm:$0xf]
        %v2906 = vld [vmem:[%s13 + $0x4] sm:$0xf]
        %v2907 = vld [vmem:[%s13 + $0x8] sm:$0xf]
        %v2908 = vld [vmem:[%s13 + $0xc] sm:$0xf]
        %v2909 = vld [vmem:[%s13 + $0x10] sm:$0xf]
        %v2910 = vld [vmem:[%s13 + $0x14] sm:$0xf]
        %v2911 = vld [vmem:[%s13 + $0x18] sm:$0xf]
        %v2912 = vld [vmem:[%s13 + $0x1c] sm:$0xf]
        %v2913 = vld [vmem:[%s13 + $0x20] sm:$0xf]
        %v2914 = vld [vmem:[%s13 + $0x24] sm:$0xf]
        %v2915 = vld [vmem:[%s13 + $0x28] sm:$0xf]
        %v2916 = vld [vmem:[%s13 + $0x2c] sm:$0xf]
        %v2917 = vld [vmem:[%s13 + $0x30] sm:$0xf]
        %v2918 = vld [vmem:[%s13 + $0x34] sm:$0xf]
        %v2919 = vld [vmem:[%s13 + $0x38] sm:$0xf]
        %v2920 = vld [vmem:[%s13 + $0x3c] sm:$0xf]
        %v2921 = vld [vmem:[%s13 + $0x40] sm:$0xf]
        %v2922 = vld [vmem:[%s13 + $0x44] sm:$0xf]
        %v2923 = vld [vmem:[%s13 + $0x48] sm:$0xf]
        %v2924 = vld [vmem:[%s13 + $0x4c] sm:$0xf]
        %v2925 = vld [vmem:[%s13 + $0x50] sm:$0xf]
        %v2926 = vld [vmem:[%s13 + $0x54] sm:$0xf]
        %v2927 = vld [vmem:[%s13 + $0x58] sm:$0xf]
        %v2928 = vld [vmem:[%s13 + $0x5c] sm:$0xf]
        %v2929 = vld [vmem:[%s13 + $0x60] sm:$0xf]
        %v2930 = vld [vmem:[%s13 + $0x64] sm:$0xf]
        %v2931 = vld [vmem:[%s13 + $0x68] sm:$0xf]
        %v2932 = vld [vmem:[%s13 + $0x6c] sm:$0xf]
        %v2933 = vld [vmem:[%s13 + $0x70] sm:$0xf]
        %v2934 = vld [vmem:[%s13 + $0x74] sm:$0xf]
        %v2935 = vld [vmem:[%s13 + $0x78] sm:$0xf]
        %v2936 = vld [vmem:[%s13 + $0x7c] sm:$0xf]
        %v2937 = vld [vmem:[%s13 + $0x80] sm:$0xf]
        %v2938 = vld [vmem:[%s13 + $0x84] sm:$0xf]
        %v2939 = vld [vmem:[%s13 + $0x88] sm:$0xf]
        %v2940 = vld [vmem:[%s13 + $0x8c] sm:$0xf]
        %v2941 = vld [vmem:[%s13 + $0x90] sm:$0xf]
        %v2942 = vld [vmem:[%s13 + $0x94] sm:$0xf]
        %v2943 = vld [vmem:[%s13 + $0x98] sm:$0xf]
        %v2944 = vld [vmem:[%s13 + $0x9c] sm:$0xf]
        %v2945 = vld [vmem:[%s13 + $0xa0] sm:$0xf]
        %v2946 = vld [vmem:[%s13 + $0xa4] sm:$0xf]
        %v2947 = vld [vmem:[%s13 + $0xa8] sm:$0xf]
        %v2948 = vld [vmem:[%s13 + $0xac] sm:$0xf]
        %v2949 = vld [vmem:[%s13 + $0xb0] sm:$0xf]
        %v2950 = vld [vmem:[%s13 + $0xb4] sm:$0xf]
        %v2951 = vld [vmem:[%s13 + $0xb8] sm:$0xf]
        %v2952 = vld [vmem:[%s13 + $0xbc] sm:$0xf]
        %v2953 = vld [vmem:[%s13 + $0xc0] sm:$0xf]
        %v2954 = vld [vmem:[%s13 + $0xc4] sm:$0xf]
        %v2955 = vld [vmem:[%s13 + $0xc8] sm:$0xf]
        %v2956 = vld [vmem:[%s13 + $0xcc] sm:$0xf]
        %v2957 = vld [vmem:[%s13 + $0xd0] sm:$0xf]
        %v2958 = vld [vmem:[%s13 + $0xd4] sm:$0xf]
        %v2959 = vld [vmem:[%s13 + $0xd8] sm:$0xf]
        %v2960 = vld [vmem:[%s13 + $0xdc] sm:$0xf]
        %v2961 = vld [vmem:[%s13 + $0xe0] sm:$0xf]
        %v2962 = vld [vmem:[%s13 + $0xe4] sm:$0xf]
        %v2963 = vld [vmem:[%s13 + $0xe8] sm:$0xf]
        %v2964 = vld [vmem:[%s13 + $0xec] sm:$0xf]
        %v2965 = vld [vmem:[%s13 + $0xf0] sm:$0xf]
        %v2966 = vld [vmem:[%s13 + $0xf4] sm:$0xf]
        %v2967 = vld [vmem:[%s13 + $0xf8] sm:$0xf]
        %v2968 = vld [vmem:[%s13 + $0xfc] sm:$0xf]
        %v2969 = vld [vmem:[%s13 + $0x100] sm:$0xf]
        %v2970 = vld [vmem:[%s13 + $0x104] sm:$0xf]
        %v2971 = vld [vmem:[%s13 + $0x108] sm:$0xf]
        %v2972 = vld [vmem:[%s13 + $0x10c] sm:$0xf]
        %v2973 = vld [vmem:[%s13 + $0x110] sm:$0xf]
        %v2974 = vld [vmem:[%s13 + $0x114] sm:$0xf]
        %v2975 = vld [vmem:[%s13 + $0x118] sm:$0xf]
        %v2976 = vld [vmem:[%s13 + $0x11c] sm:$0xf]
        %v2977 = vld [vmem:[%s14] sm:$0x1]
        %v2979 = vlaneseq
        %v2980 = vshrl.u32 %v2979, 7
        %v2981 = vsub.s32 0, %v2980
        %v2982 = vrot.slane %v2977, %v2981
        %v3056 = vunpack.c.l.b16 %v2905
        %v3057 = vunpack.c.l.b16 %v2906
        %v3058 = vunpack.c.l.b16 %v2907
        %v3059 = vunpack.c.l.b16 %v2908
        %v3060 = vunpack.c.l.b16 %v2909
        %v3061 = vunpack.c.l.b16 %v2910
        %v3062 = vunpack.c.l.b16 %v2911
        %v3063 = vunpack.c.l.b16 %v2912
        %v3064 = vunpack.c.l.b16 %v2913
        %v3065 = vunpack.c.l.b16 %v2914
        %v3066 = vunpack.c.l.b16 %v2915
        %v3067 = vunpack.c.l.b16 %v2916
        %v3068 = vunpack.c.l.b16 %v2917
        %v3069 = vunpack.c.l.b16 %v2918
        %v3070 = vunpack.c.l.b16 %v2919
        %v3071 = vunpack.c.l.b16 %v2920
        %v3072 = vunpack.c.l.b16 %v2921
        %v3073 = vunpack.c.l.b16 %v2922
        %v3074 = vunpack.c.l.b16 %v2923
        %v3075 = vunpack.c.l.b16 %v2924
        %v3076 = vunpack.c.l.b16 %v2925
        %v3077 = vunpack.c.l.b16 %v2926
        %v3078 = vunpack.c.l.b16 %v2927
        %v3079 = vunpack.c.l.b16 %v2928
        %v3080 = vunpack.c.l.b16 %v2929
        %v3081 = vunpack.c.l.b16 %v2930
        %v3082 = vunpack.c.l.b16 %v2931
        %v3083 = vunpack.c.l.b16 %v2932
        %v3084 = vunpack.c.l.b16 %v2933
        %v3085 = vunpack.c.l.b16 %v2934
        %v3086 = vunpack.c.l.b16 %v2935
        %v3087 = vunpack.c.l.b16 %v2936
        %v3088 = vunpack.c.l.b16 %v2937
        %v3089 = vunpack.c.l.b16 %v2938
        %v3090 = vunpack.c.l.b16 %v2939
        %v3091 = vunpack.c.l.b16 %v2940
        %v3092 = vunpack.c.l.b16 %v2941
        %v3093 = vunpack.c.l.b16 %v2942
        %v3094 = vunpack.c.l.b16 %v2943
        %v3095 = vunpack.c.l.b16 %v2944
        %v3096 = vunpack.c.l.b16 %v2945
        %v3097 = vunpack.c.l.b16 %v2946
        %v3098 = vunpack.c.l.b16 %v2947
        %v3099 = vunpack.c.l.b16 %v2948
        %v3100 = vunpack.c.l.b16 %v2949
        %v3101 = vunpack.c.l.b16 %v2950
        %v3102 = vunpack.c.l.b16 %v2951
        %v3103 = vunpack.c.l.b16 %v2952
        %v3104 = vunpack.c.l.b16 %v2953
        %v3105 = vunpack.c.l.b16 %v2954
        %v3106 = vunpack.c.l.b16 %v2955
        %v3107 = vunpack.c.l.b16 %v2956
        %v3108 = vunpack.c.l.b16 %v2957
        %v3109 = vunpack.c.l.b16 %v2958
        %v3110 = vunpack.c.l.b16 %v2959
        %v3111 = vunpack.c.l.b16 %v2960
        %v3112 = vunpack.c.l.b16 %v2961
        %v3113 = vunpack.c.l.b16 %v2962
        %v3114 = vunpack.c.l.b16 %v2963
        %v3115 = vunpack.c.l.b16 %v2964
        %v3116 = vunpack.c.l.b16 %v2965
        %v3117 = vunpack.c.l.b16 %v2966
        %v3118 = vunpack.c.l.b16 %v2967
        %v3119 = vunpack.c.l.b16 %v2968
        %v3120 = vunpack.c.l.b16 %v2969
        %v3121 = vunpack.c.l.b16 %v2970
        %v3122 = vunpack.c.l.b16 %v2971
        %v3123 = vunpack.c.l.b16 %v2972
        %v3124 = vunpack.c.l.b16 %v2973
        %v3125 = vunpack.c.l.b16 %v2974
        %v3126 = vunpack.c.l.b16 %v2975
        %v3127 = vunpack.c.l.b16 %v2976
        %v3128 = vpack.c.b16 %v3057, %v3056
        %v3129 = vpack.c.b16 %v3059, %v3058
        %v3130 = vpack.c.b16 %v3061, %v3060
        %v3131 = vpack.c.b16 %v3063, %v3062
        %v3132 = vpack.c.b16 %v3065, %v3064
        %v3133 = vpack.c.b16 %v3067, %v3066
        %v3134 = vpack.c.b16 %v3069, %v3068
        %v3135 = vpack.c.b16 %v3071, %v3070
        %v3136 = vpack.c.b16 %v3073, %v3072
        %v3137 = vpack.c.b16 %v3075, %v3074
        %v3138 = vpack.c.b16 %v3077, %v3076
        %v3139 = vpack.c.b16 %v3079, %v3078
        %v3140 = vpack.c.b16 %v3081, %v3080
        %v3141 = vpack.c.b16 %v3083, %v3082
        %v3142 = vpack.c.b16 %v3085, %v3084
        %v3143 = vpack.c.b16 %v3087, %v3086
        %v3144 = vpack.c.b16 %v3089, %v3088
        %v3145 = vpack.c.b16 %v3091, %v3090
        %v3146 = vpack.c.b16 %v3093, %v3092
        %v3147 = vpack.c.b16 %v3095, %v3094
        %v3148 = vpack.c.b16 %v3097, %v3096
        %v3149 = vpack.c.b16 %v3099, %v3098
        %v3150 = vpack.c.b16 %v3101, %v3100
        %v3151 = vpack.c.b16 %v3103, %v3102
        %v3152 = vpack.c.b16 %v3105, %v3104
        %v3153 = vpack.c.b16 %v3107, %v3106
        %v3154 = vpack.c.b16 %v3109, %v3108
        %v3155 = vpack.c.b16 %v3111, %v3110
        %v3156 = vpack.c.b16 %v3113, %v3112
        %v3157 = vpack.c.b16 %v3115, %v3114
        %v3158 = vpack.c.b16 %v3117, %v3116
        %v3159 = vpack.c.b16 %v3119, %v3118
        %v3160 = vpack.c.b16 %v3121, %v3120
        %v3161 = vpack.c.b16 %v3123, %v3122
        %v3162 = vpack.c.b16 %v3125, %v3124
        %v3163 = vpack.c.b16 %v3127, %v3126
        %v3201 = vsel %vm1763, %v2789, 0
        %v3204 = vsel %vm1763, %v2790, 0
        %v3207 = vsel %vm1763, %v2791, 0
        %v3210 = vsel %vm1763, %v2792, 0
        %3212 = vmatprep.subr.bf16.mxu0 0
        %3213 = vmatpush1.bf16.msra.mxu0 %v3128
        %3214 = vmatprep.subr.bf16.mxu0 0
        %3215 = vmatpush1.bf16.msra.mxu0 %v3129
        %3216 = vmatprep.subr.bf16.mxu0 0
        %3217 = vmatpush1.bf16.msra.mxu0 %v3130
        %3218 = vmatprep.subr.bf16.mxu0 0
        %3219 = vmatpush1.bf16.msra.mxu0 %v3131
        %3220 = vmatprep.subr.bf16.mxu0 0
        %3221 = vmatpush1.bf16.msra.mxu0 %v3132
        %3222 = vmatprep.subr.bf16.mxu0 0
        %3223 = vmatpush1.bf16.msra.mxu0 %v3133
        %3224 = vmatprep.subr.bf16.mxu0 0
        %3225 = vmatpush1.bf16.msra.mxu0 %v3134
        %3226 = vmatprep.subr.bf16.mxu0 0
        %3227 = vmatpush1.bf16.msra.mxu0 %v3135
        %3228 = vmatprep.subr.bf16.mxu0 0
        %3229 = vmatpush1.bf16.msra.mxu0 %v3136
        %3230 = vmatprep.subr.bf16.mxu0 0
        %3231 = vmatpush1.bf16.msra.mxu0 %v3137
        %3232 = vmatprep.subr.bf16.mxu0 0
        %3233 = vmatpush1.bf16.msra.mxu0 %v3138
        %3234 = vmatprep.subr.bf16.mxu0 0
        %3235 = vmatpush1.bf16.msra.mxu0 %v3139
        %3236 = vmatprep.subr.bf16.mxu0 0
        %3237 = vmatpush1.bf16.msra.mxu0 %v3140
        %3238 = vmatprep.subr.bf16.mxu0 0
        %3239 = vmatpush1.bf16.msra.mxu0 %v3141
        %3240 = vmatprep.subr.bf16.mxu0 0
        %3241 = vmatpush1.bf16.msra.mxu0 %v3142
        %3242 = vmatprep.subr.bf16.mxu0 0
        %3243 = vmatpush1.bf16.msra.mxu0 %v3143
        %3244 = vmatprep.mubr.bf16.mxu0 %v2859
        %3245 = vmatmul.mubr.bf16.gmra.mrb[0].mxu0 %v2843
        %v3246 = vpop.f32.mrb[0].mxu0
        %v3247 = vadd.f32 %v2982, %v3246
        %v3248 = vpop.f32.mrb[0].mxu0
        %v3249 = vpop.f32.mrb[0].mxu0
        %v3250 = vadd.f32 %v2982, %v3249
        %v3251 = vpop.f32.mrb[0].mxu0
        %3252 = vmatprep.mubr.bf16.mxu0 %v2863
        %3253 = vmatmul.mubr.bf16.gmra.mrb[0].mxu0 %v2847
        %v3254 = vpop.f32.mrb[0].mxu0
        %v3255 = vadd.f32 %v2982, %v3254
        %v3256 = vpop.f32.mrb[0].mxu0
        %v3257 = vpop.f32.mrb[0].mxu0
        %v3258 = vadd.f32 %v2982, %v3257
        %v3259 = vpop.f32.mrb[0].mxu0
        %3260 = vmatprep.mubr.bf16.mxu0 %v2867
        %3261 = vmatmul.mubr.bf16.gmra.mrb[0].mxu0 %v2851
        %v3262 = vpop.f32.mrb[0].mxu0
        %v3263 = vadd.f32 %v2982, %v3262
        %v3264 = vpop.f32.mrb[0].mxu0
        %v3265 = vpop.f32.mrb[0].mxu0
        %v3266 = vadd.f32 %v2982, %v3265
        %v3267 = vpop.f32.mrb[0].mxu0
        %3268 = vmatprep.mubr.bf16.mxu0 %v2871
        %3269 = vmatmul.mubr.bf16.gmra.mrb[0].mxu0 %v2855
        %v3270 = vpop.f32.mrb[0].mxu0
        %v3271 = vadd.f32 %v2982, %v3270
        %v3272 = vpop.f32.mrb[0].mxu0
        %v3273 = vpop.f32.mrb[0].mxu0
        %v3274 = vadd.f32 %v2982, %v3273
        %v3275 = vpop.f32.mrb[0].mxu0
        %3276 = vdwg.mxu0
        %3277 = vmatprep.subr.bf16.mxu0 0
        %3278 = vmatpush1.bf16.msra.mxu0 %v3144
        %3279 = vmatprep.subr.bf16.mxu0 0
        %3280 = vmatpush1.bf16.msra.mxu0 %v3145
        %3281 = vmatprep.subr.bf16.mxu0 0
        %3282 = vmatpush1.bf16.msra.mxu0 %v3146
        %3283 = vmatprep.subr.bf16.mxu0 0
        %3284 = vmatpush1.bf16.msra.mxu0 %v3147
        %3285 = vmatprep.subr.bf16.mxu0 0
        %3286 = vmatpush1.bf16.msra.mxu0 %v3148
        %3287 = vmatprep.subr.bf16.mxu0 0
        %3288 = vmatpush1.bf16.msra.mxu0 %v3149
        %3289 = vmatprep.subr.bf16.mxu0 0
        %3290 = vmatpush1.bf16.msra.mxu0 %v3150
        %3291 = vmatprep.subr.bf16.mxu0 0
        %3292 = vmatpush1.bf16.msra.mxu0 %v3151
        %3293 = vmatprep.subr.bf16.mxu0 0
        %3294 = vmatpush1.bf16.msra.mxu0 %v3152
        %3295 = vmatprep.subr.bf16.mxu0 0
        %3296 = vmatpush1.bf16.msra.mxu0 %v3153
        %3297 = vmatprep.subr.bf16.mxu0 0
        %3298 = vmatpush1.bf16.msra.mxu0 %v3154
        %3299 = vmatprep.subr.bf16.mxu0 0
        %3300 = vmatpush1.bf16.msra.mxu0 %v3155
        %3301 = vmatprep.subr.bf16.mxu0 0
        %3302 = vmatpush1.bf16.msra.mxu0 %v3156
        %3303 = vmatprep.subr.bf16.mxu0 0
        %3304 = vmatpush1.bf16.msra.mxu0 %v3157
        %3305 = vmatprep.subr.bf16.mxu0 0
        %3306 = vmatpush1.bf16.msra.mxu0 %v3158
        %3307 = vmatprep.subr.bf16.mxu0 0
        %3308 = vmatpush1.bf16.msra.mxu0 %v3159
        %3309 = vmatprep.mubr.bf16.mxu0 %v2891
        %3310 = vmatmul.mubr.bf16.gmra.mrb[0].mxu0 %v2875
        %v3311 = vpop.f32.mrb[0].mxu0
        %v3312 = vadd.f32 %v3247, %v3311
        %v3313 = vpop.f32.mrb[0].mxu0
        %v3314 = vpop.f32.mrb[0].mxu0
        %v3315 = vadd.f32 %v3250, %v3314
        %v3316 = vpop.f32.mrb[0].mxu0
        %3317 = vmatprep.mubr.bf16.mxu0 %v2895
        %3318 = vmatmul.mubr.bf16.gmra.mrb[0].mxu0 %v2879
        %v3319 = vpop.f32.mrb[0].mxu0
        %v3320 = vadd.f32 %v3255, %v3319
        %v3321 = vpop.f32.mrb[0].mxu0
        %v3322 = vpop.f32.mrb[0].mxu0
        %v3323 = vadd.f32 %v3258, %v3322
        %v3324 = vpop.f32.mrb[0].mxu0
        %3325 = vmatprep.mubr.bf16.mxu0 %v2899
        %3326 = vmatmul.mubr.bf16.gmra.mrb[0].mxu0 %v2883
        %v3327 = vpop.f32.mrb[0].mxu0
        %v3328 = vadd.f32 %v3263, %v3327
        %v3329 = vpop.f32.mrb[0].mxu0
        %v3330 = vpop.f32.mrb[0].mxu0
        %v3331 = vadd.f32 %v3266, %v3330
        %v3332 = vpop.f32.mrb[0].mxu0
        %3333 = vmatprep.mubr.bf16.mxu0 %v2903
        %3334 = vmatmul.mubr.bf16.gmra.mrb[0].mxu0 %v2887
        %v3335 = vpop.f32.mrb[0].mxu0
        %v3336 = vadd.f32 %v3271, %v3335
        %v3337 = vpop.f32.mrb[0].mxu0
        %v3338 = vpop.f32.mrb[0].mxu0
        %v3339 = vadd.f32 %v3274, %v3338
        %v3340 = vpop.f32.mrb[0].mxu0
        %3341 = vdwg.mxu0
        %3342 = vmatprep.subr.bf16.mxu0 0
        %3343 = vmatpush1.bf16.msra.mxu0 %v3160
        %3344 = vmatprep.subr.bf16.mxu0 0
        %3345 = vmatpush1.bf16.msra.mxu0 %v3161
        %3346 = vmatprep.subr.bf16.mxu0 0
        %3347 = vmatpush1.bf16.msra.mxu0 %v3162
        %3348 = vmatprep.subr.bf16.mxu0 0
        %3349 = vmatpush1.bf16.msra.mxu0 %v3163
        %3350 = vmatprep.subr.bf16.mxu0 0
        %3351 = vmatpush1.bf16.msra.mxu0 0
        %3352 = vmatprep.subr.bf16.mxu0 0
        %3353 = vmatpush1.bf16.msra.mxu0 0
        %3354 = vmatprep.subr.bf16.mxu0 0
        %3355 = vmatpush1.bf16.msra.mxu0 0
        %3356 = vmatprep.subr.bf16.mxu0 0
        %3357 = vmatpush1.bf16.msra.mxu0 0
        %3358 = vmatprep.subr.bf16.mxu0 0
        %3359 = vmatpush1.bf16.msra.mxu0 0
        %3360 = vmatprep.subr.bf16.mxu0 0
        %3361 = vmatpush1.bf16.msra.mxu0 0
        %3362 = vmatprep.subr.bf16.mxu0 0
        %3363 = vmatpush1.bf16.msra.mxu0 0
        %3364 = vmatprep.subr.bf16.mxu0 0
        %3365 = vmatpush1.bf16.msra.mxu0 0
        %3366 = vmatprep.subr.bf16.mxu0 0
        %3367 = vmatpush1.bf16.msra.mxu0 0
        %3368 = vmatprep.subr.bf16.mxu0 0
        %3369 = vmatpush1.bf16.msra.mxu0 0
        %3370 = vmatprep.subr.bf16.mxu0 0
        %3371 = vmatpush1.bf16.msra.mxu0 0
        %3372 = vmatprep.subr.bf16.mxu0 0
        %3373 = vmatpush1.bf16.msra.mxu0 0
        %3374 = vmatprep.mubr.bf16.mxu0 0
        %3375 = vmatmul.mubr.bf16.gmra.mrb[0].mxu0 %v3201
        %v3376 = vpop.f32.mrb[0].mxu0
        %v3377 = vadd.f32 %v3312, %v3376
        %v3378 = vpop.f32.mrb[0].mxu0
        %v3379 = vpop.f32.mrb[0].mxu0
        %v3380 = vadd.f32 %v3315, %v3379
        %v3381 = vpop.f32.mrb[0].mxu0
        %3382 = vmatprep.mubr.bf16.mxu0 0
        %3383 = vmatmul.mubr.bf16.gmra.mrb[0].mxu0 %v3204
        %v3384 = vpop.f32.mrb[0].mxu0
        %v3385 = vadd.f32 %v3320, %v3384
        %v3386 = vpop.f32.mrb[0].mxu0
        %v3387 = vpop.f32.mrb[0].mxu0
        %v3388 = vadd.f32 %v3323, %v3387
        %v3389 = vpop.f32.mrb[0].mxu0
        %3390 = vmatprep.mubr.bf16.mxu0 0
        %3391 = vmatmul.mubr.bf16.gmra.mrb[0].mxu0 %v3207
        %v3392 = vpop.f32.mrb[0].mxu0
        %v3393 = vadd.f32 %v3328, %v3392
        %v3394 = vpop.f32.mrb[0].mxu0
        %v3395 = vpop.f32.mrb[0].mxu0
        %v3396 = vadd.f32 %v3331, %v3395
        %v3397 = vpop.f32.mrb[0].mxu0
        %3398 = vmatprep.mubr.bf16.mxu0 0
        %3399 = vmatmul.mubr.bf16.gmra.mrb[0].mxu0 %v3210
        %v3400 = vpop.f32.mrb[0].mxu0
        %v3401 = vadd.f32 %v3336, %v3400
        %v3402 = vpop.f32.mrb[0].mxu0
        %v3403 = vpop.f32.mrb[0].mxu0
        %v3404 = vadd.f32 %v3339, %v3403
        %v3405 = vpop.f32.mrb[0].mxu0
        %3406 = vdwg.mxu0
        %v3407 = vpack.c.bf16 %v725, %v724
        %v3408 = vpack.c.bf16 %v727, %v726
        %v3409 = vpack.c.bf16 %v729, %v728
        %v3410 = vpack.c.bf16 %v731, %v730
        %v3411 = vld [vmem:[%s15] sm:$0xf]
        %v3412 = vld [vmem:[%s15 + $0x4] sm:$0xf]
        %v3413 = vld [vmem:[%s15 + $0x8] sm:$0xf]
        %v3414 = vld [vmem:[%s15 + $0xc] sm:$0xf]
        %v3415 = vld [vmem:[%s16] sm:$0x1]
        %v3417 = vlaneseq
        %v3418 = vshrl.u32 %v3417, 7
        %v3419 = vsub.s32 0, %v3418
        %v3420 = vrot.slane %v3415, %v3419
        %v3426 = vunpack.c.l.b16 %v3411
        %v3427 = vunpack.c.l.b16 %v3412
        %v3428 = vunpack.c.l.b16 %v3413
        %v3429 = vunpack.c.l.b16 %v3414
        %v3430 = vpack.c.b16 %v3427, %v3426
        %v3431 = vpack.c.b16 %v3429, %v3428
        %v3435 = vsel %vm975, %v3407, 0
        %v3438 = vsel %vm975, %v3408, 0
        %v3441 = vsel %vm975, %v3409, 0
        %v3444 = vsel %vm975, %v3410, 0
        %3446 = vmatprep.subr.bf16.mxu0 0
        %3447 = vmatpush1.bf16.msra.mxu0 %v3430
        %3448 = vmatprep.subr.bf16.mxu0 0
        %3449 = vmatpush1.bf16.msra.mxu0 %v3431
        %3450 = vmatprep.subr.bf16.mxu0 0
        %3451 = vmatpush1.bf16.msra.mxu0 0
        %3452 = vmatprep.subr.bf16.mxu0 0
        %3453 = vmatpush1.bf16.msra.mxu0 0
        %3454 = vmatprep.subr.bf16.mxu0 0
        %3455 = vmatpush1.bf16.msra.mxu0 0
        %3456 = vmatprep.subr.bf16.mxu0 0
        %3457 = vmatpush1.bf16.msra.mxu0 0
        %3458 = vmatprep.subr.bf16.mxu0 0
        %3459 = vmatpush1.bf16.msra.mxu0 0
        %3460 = vmatprep.subr.bf16.mxu0 0
        %3461 = vmatpush1.bf16.msra.mxu0 0
        %3462 = vmatprep.subr.bf16.mxu0 0
        %3463 = vmatpush1.bf16.msra.mxu0 0
        %3464 = vmatprep.subr.bf16.mxu0 0
        %3465 = vmatpush1.bf16.msra.mxu0 0
        %3466 = vmatprep.subr.bf16.mxu0 0
        %3467 = vmatpush1.bf16.msra.mxu0 0
        %3468 = vmatprep.subr.bf16.mxu0 0
        %3469 = vmatpush1.bf16.msra.mxu0 0
        %3470 = vmatprep.subr.bf16.mxu0 0
        %3471 = vmatpush1.bf16.msra.mxu0 0
        %3472 = vmatprep.subr.bf16.mxu0 0
        %3473 = vmatpush1.bf16.msra.mxu0 0
        %3474 = vmatprep.subr.bf16.mxu0 0
        %3475 = vmatpush1.bf16.msra.mxu0 0
        %3476 = vmatprep.subr.bf16.mxu0 0
        %3477 = vmatpush1.bf16.msra.mxu0 0
        %3478 = vmatprep.mubr.bf16.mxu0 0
        %3479 = vmatmul.mubr.bf16.gmra.mrb[0].mxu0 %v3435
        %v3480 = vpop.f32.mrb[0].mxu0
        %v3481 = vadd.f32 %v3420, %v3480
        %v3482 = vpop.f32.mrb[0].mxu0
        %v3483 = vpop.f32.mrb[0].mxu0
        %v3484 = vadd.f32 %v3420, %v3483
        %v3485 = vpop.f32.mrb[0].mxu0
        %3486 = vmatprep.mubr.bf16.mxu0 0
        %3487 = vmatmul.mubr.bf16.gmra.mrb[0].mxu0 %v3438
        %v3488 = vpop.f32.mrb[0].mxu0
        %v3489 = vadd.f32 %v3420, %v3488
        %v3490 = vpop.f32.mrb[0].mxu0
        %v3491 = vpop.f32.mrb[0].mxu0
        %v3492 = vadd.f32 %v3420, %v3491
        %v3493 = vpop.f32.mrb[0].mxu0
        %3494 = vmatprep.mubr.bf16.mxu0 0
        %3495 = vmatmul.mubr.bf16.gmra.mrb[0].mxu0 %v3441
        %v3496 = vpop.f32.mrb[0].mxu0
        %v3497 = vadd.f32 %v3420, %v3496
        %v3498 = vpop.f32.mrb[0].mxu0
        %v3499 = vpop.f32.mrb[0].mxu0
        %v3500 = vadd.f32 %v3420, %v3499
        %v3501 = vpop.f32.mrb[0].mxu0
        %3502 = vmatprep.mubr.bf16.mxu0 0
        %3503 = vmatmul.mubr.bf16.gmra.mrb[0].mxu0 %v3444
        %v3504 = vpop.f32.mrb[0].mxu0
        %v3505 = vadd.f32 %v3420, %v3504
        %v3506 = vpop.f32.mrb[0].mxu0
        %v3507 = vpop.f32.mrb[0].mxu0
        %v3508 = vadd.f32 %v3420, %v3507
        %v3509 = vpop.f32.mrb[0].mxu0
        %3510 = vdwg.mxu0
        %v3511 = vadd.f32 %v3377, %v3481
        %v3512 = vadd.f32 %v3380, %v3484
        %v3513 = vadd.f32 %v3385, %v3489
        %v3514 = vadd.f32 %v3388, %v3492
        %v3515 = vadd.f32 %v3393, %v3497
        %v3516 = vadd.f32 %v3396, %v3500
        %v3517 = vadd.f32 %v3401, %v3505
        %v3518 = vadd.f32 %v3404, %v3508
        %v3519 = vld [vmem:[%s17] sm:$0x1]
        %v3520 = vld [vmem:[%s18] sm:$0x1]
        %v3521 = vsel %vm1763, %v3511, 0.0
        %v3522 = vsel %vm1763, %v3512, 0.0
        %v3523 = vadd.f32 %v3521, %v3522
        %v3524 = vsel %vm1763, %v3513, 0.0
        %v3525 = vadd.f32 %v3523, %v3524
        %v3526 = vsel %vm1763, %v3514, 0.0
        %v3527 = vadd.f32 %v3525, %v3526
        %v3528 = vsel %vm1763, %v3515, 0.0
        %v3529 = vadd.f32 %v3527, %v3528
        %v3530 = vsel %vm1763, %v3516, 0.0
        %v3531 = vadd.f32 %v3529, %v3530
        %v3532 = vsel %vm1763, %v3517, 0.0
        %v3533 = vadd.f32 %v3531, %v3532
        %v3534 = vsel %vm1763, %v3518, 0.0
        %v3535 = vadd.f32 %v3533, %v3534
        %v3536 = vrot.slane %v3535, 4
        %v3537 = vadd.f32 %v3535, %v3536
        %v3538 = vrot.slane %v3537, 2
        %v3539 = vadd.f32 %v3537, %v3538
        %v3540 = vrot.slane %v3539, 1
        %v3541 = vadd.f32 %v3539, %v3540
        %v3543 = vsel %vm1763, %v3541, 0
        %3545 = vmatprep.subr.mxu0 0.0
        %3546 = vmatpush1.msra.mxu0 %v2206
        %3547 = vmatprep.subr.mxu0 0.0
        %3548 = vmatpush1.msra.mxu0 %v2207
        %3549 = vmatprep.subr.mxu0 0.0
        %3550 = vmatpush1.msra.mxu0 %v2208
        %3551 = vmatprep.subr.mxu0 0.0
        %3552 = vmatpush1.msra.mxu0 %v2209
        %3553 = vmatprep.subr.mxu0 0.0
        %3554 = vmatpush1.msra.mxu0 %v2210
        %3555 = vmatprep.subr.mxu0 0.0
        %3556 = vmatpush1.msra.mxu0 %v2211
        %3557 = vmatprep.subr.mxu0 0.0
        %3558 = vmatpush1.msra.mxu0 %v2212
        %3559 = vmatprep.subr.mxu0 0.0
        %3560 = vmatpush1.msra.mxu0 %v2213
        %3561 = vmatprep.subr.mxu0 0.0
        %3562 = vmatpush1.msra.mxu0 0.0
        %3563 = vmatprep.subr.mxu0 0.0
        %3564 = vmatpush1.msra.mxu0 0.0
        %3565 = vmatprep.subr.mxu0 0.0
        %3566 = vmatpush1.msra.mxu0 0.0
        %3567 = vmatprep.subr.mxu0 0.0
        %3568 = vmatpush1.msra.mxu0 0.0
        %3569 = vmatprep.subr.mxu0 0.0
        %3570 = vmatpush1.msra.mxu0 0.0
        %3571 = vmatprep.subr.mxu0 0.0
        %3572 = vmatpush1.msra.mxu0 0.0
        %3573 = vmatprep.subr.mxu0 0.0
        %3574 = vmatpush1.msra.mxu0 0.0
        %3575 = vmatprep.subr.mxu0 0.0
        %3576 = vmatpush1.msra.mxu0 0.0
        %3577 = vmatprep.subr.mxu0 0.0
        %3578 = vmatpush1.msra.mxu0 0.0
        %3579 = vmatprep.subr.mxu0 0.0
        %3580 = vmatpush1.msra.mxu0 0.0
        %3581 = vmatprep.subr.mxu0 0.0
        %3582 = vmatpush1.msra.mxu0 0.0
        %3583 = vmatprep.subr.mxu0 0.0
        %3584 = vmatpush1.msra.mxu0 0.0
        %3585 = vmatprep.subr.mxu0 0.0
        %3586 = vmatpush1.msra.mxu0 0.0
        %3587 = vmatprep.subr.mxu0 0.0
        %3588 = vmatpush1.msra.mxu0 0.0
        %3589 = vmatprep.subr.mxu0 0.0
        %3590 = vmatpush1.msra.mxu0 0.0
        %3591 = vmatprep.subr.mxu0 0.0
        %3592 = vmatpush1.msra.mxu0 0.0
        %3593 = vmatprep.subr.mxu0 0.0
        %3594 = vmatpush1.msra.mxu0 0.0
        %3595 = vmatprep.subr.mxu0 0.0
        %3596 = vmatpush1.msra.mxu0 0.0
        %3597 = vmatprep.subr.mxu0 0.0
        %3598 = vmatpush1.msra.mxu0 0.0
        %3599 = vmatprep.subr.mxu0 0.0
        %3600 = vmatpush1.msra.mxu0 0.0
        %3601 = vmatprep.subr.mxu0 0.0
        %3602 = vmatpush1.msra.mxu0 0.0
        %3603 = vmatprep.subr.mxu0 0.0
        %3604 = vmatpush1.msra.mxu0 0.0
        %3605 = vmatprep.subr.mxu0 0.0
        %3606 = vmatpush1.msra.mxu0 0.0
        %3607 = vmatprep.subr.mxu0 0.0
        %3608 = vmatpush1.msra.mxu0 0.0
        %3609 = vmatprep.mubr.f32.mxu0 0.0
        %3610 = vmatmul.mubr.f32.gmra.mrb[0].mxu0 %v3543
        %v3611 = vpop.f32.mrb[0].mxu0
        %v3612 = vadd.f32 0.0, %v3611
        %v3613 = vpop.f32.mrb[0].mxu0
        %3614 = vdwg.mxu0
        %v3615 = vmul.f32 %v3612, 0.0078125
        %v3617 = vsel %vm975, %v3615, 0
        %3619 = vmatprep.subr.mxu0 0.0
        %3620 = vmatpush1.msra.mxu0 %v2214
        %3621 = vmatprep.subr.mxu0 0.0
        %3622 = vmatpush1.msra.mxu0 %v2215
        %3623 = vmatprep.subr.mxu0 0.0
        %3624 = vmatpush1.msra.mxu0 %v2216
        %3625 = vmatprep.subr.mxu0 0.0
        %3626 = vmatpush1.msra.mxu0 %v2217
        %3627 = vmatprep.subr.mxu0 0.0
        %3628 = vmatpush1.msra.mxu0 0.0
        %3629 = vmatprep.subr.mxu0 0.0
        %3630 = vmatpush1.msra.mxu0 0.0
        %3631 = vmatprep.subr.mxu0 0.0
        %3632 = vmatpush1.msra.mxu0 0.0
        %3633 = vmatprep.subr.mxu0 0.0
        %3634 = vmatpush1.msra.mxu0 0.0
        %3635 = vmatprep.subr.mxu0 0.0
        %3636 = vmatpush1.msra.mxu0 0.0
        %3637 = vmatprep.subr.mxu0 0.0
        %3638 = vmatpush1.msra.mxu0 0.0
        %3639 = vmatprep.subr.mxu0 0.0
        %3640 = vmatpush1.msra.mxu0 0.0
        %3641 = vmatprep.subr.mxu0 0.0
        %3642 = vmatpush1.msra.mxu0 0.0
        %3643 = vmatprep.subr.mxu0 0.0
        %3644 = vmatpush1.msra.mxu0 0.0
        %3645 = vmatprep.subr.mxu0 0.0
        %3646 = vmatpush1.msra.mxu0 0.0
        %3647 = vmatprep.subr.mxu0 0.0
        %3648 = vmatpush1.msra.mxu0 0.0
        %3649 = vmatprep.subr.mxu0 0.0
        %3650 = vmatpush1.msra.mxu0 0.0
        %3651 = vmatprep.subr.mxu0 0.0
        %3652 = vmatpush1.msra.mxu0 0.0
        %3653 = vmatprep.subr.mxu0 0.0
        %3654 = vmatpush1.msra.mxu0 0.0
        %3655 = vmatprep.subr.mxu0 0.0
        %3656 = vmatpush1.msra.mxu0 0.0
        %3657 = vmatprep.subr.mxu0 0.0
        %3658 = vmatpush1.msra.mxu0 0.0
        %3659 = vmatprep.subr.mxu0 0.0
        %3660 = vmatpush1.msra.mxu0 0.0
        %3661 = vmatprep.subr.mxu0 0.0
        %3662 = vmatpush1.msra.mxu0 0.0
        %3663 = vmatprep.subr.mxu0 0.0
        %3664 = vmatpush1.msra.mxu0 0.0
        %3665 = vmatprep.subr.mxu0 0.0
        %3666 = vmatpush1.msra.mxu0 0.0
        %3667 = vmatprep.subr.mxu0 0.0
        %3668 = vmatpush1.msra.mxu0 0.0
        %3669 = vmatprep.subr.mxu0 0.0
        %3670 = vmatpush1.msra.mxu0 0.0
        %3671 = vmatprep.subr.mxu0 0.0
        %3672 = vmatpush1.msra.mxu0 0.0
        %3673 = vmatprep.subr.mxu0 0.0
        %3674 = vmatpush1.msra.mxu0 0.0
        %3675 = vmatprep.subr.mxu0 0.0
        %3676 = vmatpush1.msra.mxu0 0.0
        %3677 = vmatprep.subr.mxu0 0.0
        %3678 = vmatpush1.msra.mxu0 0.0
        %3679 = vmatprep.subr.mxu0 0.0
        %3680 = vmatpush1.msra.mxu0 0.0
        %3681 = vmatprep.subr.mxu0 0.0
        %3682 = vmatpush1.msra.mxu0 0.0
        %3683 = vmatprep.mubr.f32.mxu0 0.0
        %3684 = vmatmul.mubr.f32.gmra.mrb[0].mxu0 %v3617
        %v3685 = vpop.f32.mrb[0].mxu0
        %v3686 = vadd.f32 0.0, %v3685
        %v3687 = vpop.f32.mrb[0].mxu0
        %3688 = vdwg.mxu0
        %v3689 = vlaneseq
        %v3690 = vshrl.u32 %v3689, 7
        %v3691 = vsub.s32 0, %v3690
        %v3692 = vrot.slane %v3686, %v3691
        %v3693 = vsub.f32 %v3511, %v3692
        %v3694 = vsub.f32 %v3512, %v3692
        %v3695 = vsub.f32 %v3513, %v3692
        %v3696 = vsub.f32 %v3514, %v3692
        %v3697 = vsub.f32 %v3515, %v3692
        %v3698 = vsub.f32 %v3516, %v3692
        %v3699 = vsub.f32 %v3517, %v3692
        %v3700 = vsub.f32 %v3518, %v3692
        %v3701 = vmul.f32 %v3693, %v3693
        %v3702 = vmul.f32 %v3694, %v3694
        %v3703 = vmul.f32 %v3695, %v3695
        %v3704 = vmul.f32 %v3696, %v3696
        %v3705 = vmul.f32 %v3697, %v3697
        %v3706 = vmul.f32 %v3698, %v3698
        %v3707 = vmul.f32 %v3699, %v3699
        %v3708 = vmul.f32 %v3700, %v3700
        %v3709 = vsel %vm1763, %v3701, 0.0
        %v3710 = vsel %vm1763, %v3702, 0.0
        %v3711 = vadd.f32 %v3709, %v3710
        %v3712 = vsel %vm1763, %v3703, 0.0
        %v3713 = vadd.f32 %v3711, %v3712
        %v3714 = vsel %vm1763, %v3704, 0.0
        %v3715 = vadd.f32 %v3713, %v3714
        %v3716 = vsel %vm1763, %v3705, 0.0
        %v3717 = vadd.f32 %v3715, %v3716
        %v3718 = vsel %vm1763, %v3706, 0.0
        %v3719 = vadd.f32 %v3717, %v3718
        %v3720 = vsel %vm1763, %v3707, 0.0
        %v3721 = vadd.f32 %v3719, %v3720
        %v3722 = vsel %vm1763, %v3708, 0.0
        %v3723 = vadd.f32 %v3721, %v3722
        %v3724 = vrot.slane %v3723, 4
        %v3725 = vadd.f32 %v3723, %v3724
        %v3726 = vrot.slane %v3725, 2
        %v3727 = vadd.f32 %v3725, %v3726
        %v3728 = vrot.slane %v3727, 1
        %v3729 = vadd.f32 %v3727, %v3728
        %v3731 = vsel %vm1763, %v3729, 0
        %3733 = vmatprep.subr.mxu0 0.0
        %3734 = vmatpush1.msra.mxu0 %v2206
        %3735 = vmatprep.subr.mxu0 0.0
        %3736 = vmatpush1.msra.mxu0 %v2207
        %3737 = vmatprep.subr.mxu0 0.0
        %3738 = vmatpush1.msra.mxu0 %v2208
        %3739 = vmatprep.subr.mxu0 0.0
        %3740 = vmatpush1.msra.mxu0 %v2209
        %3741 = vmatprep.subr.mxu0 0.0
        %3742 = vmatpush1.msra.mxu0 %v2210
        %3743 = vmatprep.subr.mxu0 0.0
        %3744 = vmatpush1.msra.mxu0 %v2211
        %3745 = vmatprep.subr.mxu0 0.0
        %3746 = vmatpush1.msra.mxu0 %v2212
        %3747 = vmatprep.subr.mxu0 0.0
        %3748 = vmatpush1.msra.mxu0 %v2213
        %3749 = vmatprep.subr.mxu0 0.0
        %3750 = vmatpush1.msra.mxu0 0.0
        %3751 = vmatprep.subr.mxu0 0.0
        %3752 = vmatpush1.msra.mxu0 0.0
        %3753 = vmatprep.subr.mxu0 0.0
        %3754 = vmatpush1.msra.mxu0 0.0
        %3755 = vmatprep.subr.mxu0 0.0
        %3756 = vmatpush1.msra.mxu0 0.0
        %3757 = vmatprep.subr.mxu0 0.0
        %3758 = vmatpush1.msra.mxu0 0.0
        %3759 = vmatprep.subr.mxu0 0.0
        %3760 = vmatpush1.msra.mxu0 0.0
        %3761 = vmatprep.subr.mxu0 0.0
        %3762 = vmatpush1.msra.mxu0 0.0
        %3763 = vmatprep.subr.mxu0 0.0
        %3764 = vmatpush1.msra.mxu0 0.0
        %3765 = vmatprep.subr.mxu0 0.0
        %3766 = vmatpush1.msra.mxu0 0.0
        %3767 = vmatprep.subr.mxu0 0.0
        %3768 = vmatpush1.msra.mxu0 0.0
        %3769 = vmatprep.subr.mxu0 0.0
        %3770 = vmatpush1.msra.mxu0 0.0
        %3771 = vmatprep.subr.mxu0 0.0
        %3772 = vmatpush1.msra.mxu0 0.0
        %3773 = vmatprep.subr.mxu0 0.0
        %3774 = vmatpush1.msra.mxu0 0.0
        %3775 = vmatprep.subr.mxu0 0.0
        %3776 = vmatpush1.msra.mxu0 0.0
        %3777 = vmatprep.subr.mxu0 0.0
        %3778 = vmatpush1.msra.mxu0 0.0
        %3779 = vmatprep.subr.mxu0 0.0
        %3780 = vmatpush1.msra.mxu0 0.0
        %3781 = vmatprep.subr.mxu0 0.0
        %3782 = vmatpush1.msra.mxu0 0.0
        %3783 = vmatprep.subr.mxu0 0.0
        %3784 = vmatpush1.msra.mxu0 0.0
        %3785 = vmatprep.subr.mxu0 0.0
        %3786 = vmatpush1.msra.mxu0 0.0
        %3787 = vmatprep.subr.mxu0 0.0
        %3788 = vmatpush1.msra.mxu0 0.0
        %3789 = vmatprep.subr.mxu0 0.0
        %3790 = vmatpush1.msra.mxu0 0.0
        %3791 = vmatprep.subr.mxu0 0.0
        %3792 = vmatpush1.msra.mxu0 0.0
        %3793 = vmatprep.subr.mxu0 0.0
        %3794 = vmatpush1.msra.mxu0 0.0
        %3795 = vmatprep.subr.mxu0 0.0
        %3796 = vmatpush1.msra.mxu0 0.0
        %3797 = vmatprep.mubr.f32.mxu0 0.0
        %3798 = vmatmul.mubr.f32.gmra.mrb[0].mxu0 %v3731
        %v3799 = vpop.f32.mrb[0].mxu0
        %v3800 = vadd.f32 0.0, %v3799
        %v3801 = vpop.f32.mrb[0].mxu0
        %3802 = vdwg.mxu0
        %v3803 = vmul.f32 %v3800, 0.0078125
        %v3804 = vadd.f32 %v3803, 1e-05
        %v3805 = vrsqrt.pop %v3804
        %v3807 = vsel %vm975, %v3805, 0
        %3809 = vmatprep.subr.mxu0 0.0
        %3810 = vmatpush1.msra.mxu0 %v2214
        %3811 = vmatprep.subr.mxu0 0.0
        %3812 = vmatpush1.msra.mxu0 %v2215
        %3813 = vmatprep.subr.mxu0 0.0
        %3814 = vmatpush1.msra.mxu0 %v2216
        %3815 = vmatprep.subr.mxu0 0.0
        %3816 = vmatpush1.msra.mxu0 %v2217
        %3817 = vmatprep.subr.mxu0 0.0
        %3818 = vmatpush1.msra.mxu0 0.0
        %3819 = vmatprep.subr.mxu0 0.0
        %3820 = vmatpush1.msra.mxu0 0.0
        %3821 = vmatprep.subr.mxu0 0.0
        %3822 = vmatpush1.msra.mxu0 0.0
        %3823 = vmatprep.subr.mxu0 0.0
        %3824 = vmatpush1.msra.mxu0 0.0
        %3825 = vmatprep.subr.mxu0 0.0
        %3826 = vmatpush1.msra.mxu0 0.0
        %3827 = vmatprep.subr.mxu0 0.0
        %3828 = vmatpush1.msra.mxu0 0.0
        %3829 = vmatprep.subr.mxu0 0.0
        %3830 = vmatpush1.msra.mxu0 0.0
        %3831 = vmatprep.subr.mxu0 0.0
        %3832 = vmatpush1.msra.mxu0 0.0
        %3833 = vmatprep.subr.mxu0 0.0
        %3834 = vmatpush1.msra.mxu0 0.0
        %3835 = vmatprep.subr.mxu0 0.0
        %3836 = vmatpush1.msra.mxu0 0.0
        %3837 = vmatprep.subr.mxu0 0.0
        %3838 = vmatpush1.msra.mxu0 0.0
        %3839 = vmatprep.subr.mxu0 0.0
        %3840 = vmatpush1.msra.mxu0 0.0
        %3841 = vmatprep.subr.mxu0 0.0
        %3842 = vmatpush1.msra.mxu0 0.0
        %3843 = vmatprep.subr.mxu0 0.0
        %3844 = vmatpush1.msra.mxu0 0.0
        %3845 = vmatprep.subr.mxu0 0.0
        %3846 = vmatpush1.msra.mxu0 0.0
        %3847 = vmatprep.subr.mxu0 0.0
        %3848 = vmatpush1.msra.mxu0 0.0
        %3849 = vmatprep.subr.mxu0 0.0
        %3850 = vmatpush1.msra.mxu0 0.0
        %3851 = vmatprep.subr.mxu0 0.0
        %3852 = vmatpush1.msra.mxu0 0.0
        %3853 = vmatprep.subr.mxu0 0.0
        %3854 = vmatpush1.msra.mxu0 0.0
        %3855 = vmatprep.subr.mxu0 0.0
        %3856 = vmatpush1.msra.mxu0 0.0
        %3857 = vmatprep.subr.mxu0 0.0
        %3858 = vmatpush1.msra.mxu0 0.0
        %3859 = vmatprep.subr.mxu0 0.0
        %3860 = vmatpush1.msra.mxu0 0.0
        %3861 = vmatprep.subr.mxu0 0.0
        %3862 = vmatpush1.msra.mxu0 0.0
        %3863 = vmatprep.subr.mxu0 0.0
        %3864 = vmatpush1.msra.mxu0 0.0
        %3865 = vmatprep.subr.mxu0 0.0
        %3866 = vmatpush1.msra.mxu0 0.0
        %3867 = vmatprep.subr.mxu0 0.0
        %3868 = vmatpush1.msra.mxu0 0.0
        %3869 = vmatprep.subr.mxu0 0.0
        %3870 = vmatpush1.msra.mxu0 0.0
        %3871 = vmatprep.subr.mxu0 0.0
        %3872 = vmatpush1.msra.mxu0 0.0
        %3873 = vmatprep.mubr.f32.mxu0 0.0
        %3874 = vmatmul.mubr.f32.gmra.mrb[0].mxu0 %v3807
        %v3875 = vpop.f32.mrb[0].mxu0
        %v3876 = vadd.f32 0.0, %v3875
        %v3877 = vpop.f32.mrb[0].mxu0
        %3878 = vdwg.mxu0
        %v3879 = vmul.f32 %v3876, %v3519
        %v3880 = vlaneseq
        %v3881 = vshrl.u32 %v3880, 7
        %v3882 = vsub.s32 0, %v3881
        %v3883 = vrot.slane %v3879, %v3882
        %v3884 = vmul.f32 %v3693, %v3883
        %v3885 = vmul.f32 %v3694, %v3883
        %v3886 = vmul.f32 %v3695, %v3883
        %v3887 = vmul.f32 %v3696, %v3883
        %v3888 = vmul.f32 %v3697, %v3883
        %v3889 = vmul.f32 %v3698, %v3883
        %v3890 = vmul.f32 %v3699, %v3883
        %v3891 = vmul.f32 %v3700, %v3883
        %v3893 = vlaneseq
        %v3894 = vshrl.u32 %v3893, 7
        %v3895 = vsub.s32 0, %v3894
        %v3896 = vrot.slane %v3520, %v3895
        %v3898 = vadd.f32 %v3884, %v3896
        %v3899 = vadd.f32 %v3885, %v3896
        %v3900 = vadd.f32 %v3886, %v3896
        %v3901 = vadd.f32 %v3887, %v3896
        %v3902 = vadd.f32 %v3888, %v3896
        %v3903 = vadd.f32 %v3889, %v3896
        %v3904 = vadd.f32 %v3890, %v3896
        %v3905 = vadd.f32 %v3891, %v3896
        %v3906 = vpack.c.bf16 %v3899, %v3898
        %v3907 = vpack.c.bf16 %v3901, %v3900
        %v3908 = vpack.c.bf16 %v3903, %v3902
        %v3909 = vpack.c.bf16 %v3905, %v3904
        %v3910 = vld [vmem:[%s19] sm:$0xff]
        %v3911 = vld [vmem:[%s19 + $0x8] sm:$0xff]
        %v3912 = vld [vmem:[%s19 + $0x10] sm:$0xff]
        %v3913 = vld [vmem:[%s19 + $0x18] sm:$0xff]
        %v3914 = vld [vmem:[%s19 + $0x20] sm:$0xff]
        %v3915 = vld [vmem:[%s19 + $0x28] sm:$0xff]
        %v3916 = vld [vmem:[%s19 + $0x30] sm:$0xff]
        %v3917 = vld [vmem:[%s19 + $0x38] sm:$0xff]
        %v3918 = vld [vmem:[%s20] sm:$0x3]
        %v3920 = vlaneseq
        %v3921 = vshrl.u32 %v3920, 7
        %v3922 = vsub.s32 0, %v3921
        %v3923 = vrot.slane %v3918, %v3922
        %v3924 = vlaneseq
        %v3925 = vshrl.u32 %v3924, 7
        %v3926 = vsub.s32 1, %v3925
        %v3927 = vrot.slane %v3918, %v3926
        %v3938 = vunpack.c.l.b16 %v3910
        %v3939 = vunpack.c.h.b16 %v3910
        %v3940 = vunpack.c.l.b16 %v3911
        %v3941 = vunpack.c.h.b16 %v3911
        %v3942 = vunpack.c.l.b16 %v3912
        %v3943 = vunpack.c.h.b16 %v3912
        %v3944 = vunpack.c.l.b16 %v3913
        %v3945 = vunpack.c.h.b16 %v3913
        %v3946 = vunpack.c.l.b16 %v3914
        %v3947 = vunpack.c.h.b16 %v3914
        %v3948 = vunpack.c.l.b16 %v3915
        %v3949 = vunpack.c.h.b16 %v3915
        %v3950 = vunpack.c.l.b16 %v3916
        %v3951 = vunpack.c.h.b16 %v3916
        %v3952 = vunpack.c.l.b16 %v3917
        %v3953 = vunpack.c.h.b16 %v3917
        %v3954 = vpack.c.b16 %v3940, %v3938
        %v3955 = vpack.c.b16 %v3941, %v3939
        %v3956 = vpack.c.b16 %v3944, %v3942
        %v3957 = vpack.c.b16 %v3945, %v3943
        %v3958 = vpack.c.b16 %v3948, %v3946
        %v3959 = vpack.c.b16 %v3949, %v3947
        %v3960 = vpack.c.b16 %v3952, %v3950
        %v3961 = vpack.c.b16 %v3953, %v3951
        %v3971 = vsel %vm1763, %v3906, 0
        %v3974 = vsel %vm1763, %v3907, 0
        %v3977 = vsel %vm1763, %v3908, 0
        %v3980 = vsel %vm1763, %v3909, 0
        %3982 = vmatprep.subr.bf16.mxu0 %v3955
        %3983 = vmatpush1.bf16.msra.mxu0 %v3954
        %3984 = vmatprep.subr.bf16.mxu0 %v3957
        %3985 = vmatpush1.bf16.msra.mxu0 %v3956
        %3986 = vmatprep.subr.bf16.mxu0 %v3959
        %3987 = vmatpush1.bf16.msra.mxu0 %v3958
        %3988 = vmatprep.subr.bf16.mxu0 %v3961
        %3989 = vmatpush1.bf16.msra.mxu0 %v3960
        %3990 = vmatprep.subr.bf16.mxu0 0
        %3991 = vmatpush1.bf16.msra.mxu0 0
        %3992 = vmatprep.subr.bf16.mxu0 0
        %3993 = vmatpush1.bf16.msra.mxu0 0
        %3994 = vmatprep.subr.bf16.mxu0 0
        %3995 = vmatpush1.bf16.msra.mxu0 0
        %3996 = vmatprep.subr.bf16.mxu0 0
        %3997 = vmatpush1.bf16.msra.mxu0 0
        %3998 = vmatprep.subr.bf16.mxu0 0
        %3999 = vmatpush1.bf16.msra.mxu0 0
        %4000 = vmatprep.subr.bf16.mxu0 0
        %4001 = vmatpush1.bf16.msra.mxu0 0
        %4002 = vmatprep.subr.bf16.mxu0 0
        %4003 = vmatpush1.bf16.msra.mxu0 0
        %4004 = vmatprep.subr.bf16.mxu0 0
        %4005 = vmatpush1.bf16.msra.mxu0 0
        %4006 = vmatprep.subr.bf16.mxu0 0
        %4007 = vmatpush1.bf16.msra.mxu0 0
        %4008 = vmatprep.subr.bf16.mxu0 0
        %4009 = vmatpush1.bf16.msra.mxu0 0
        %4010 = vmatprep.subr.bf16.mxu0 0
        %4011 = vmatpush1.bf16.msra.mxu0 0
        %4012 = vmatprep.subr.bf16.mxu0 0
        %4013 = vmatpush1.bf16.msra.mxu0 0
        %4014 = vmatprep.mubr.bf16.mxu0 0
        %4015 = vmatmul.mubr.bf16.gmra.mrb[0].mxu0 %v3971
        %v4016 = vpop.f32.mrb[0].mxu0
        %v4017 = vadd.f32 %v3923, %v4016
        %v4018 = vpop.f32.mrb[0].mxu0
        %v4019 = vadd.f32 %v3927, %v4018
        %v4020 = vpop.f32.mrb[0].mxu0
        %v4021 = vadd.f32 %v3923, %v4020
        %v4022 = vpop.f32.mrb[0].mxu0
        %v4023 = vadd.f32 %v3927, %v4022
        %4024 = vmatprep.mubr.bf16.mxu0 0
        %4025 = vmatmul.mubr.bf16.gmra.mrb[0].mxu0 %v3974
        %v4026 = vpop.f32.mrb[0].mxu0
        %v4027 = vadd.f32 %v3923, %v4026
        %v4028 = vpop.f32.mrb[0].mxu0
        %v4029 = vadd.f32 %v3927, %v4028
        %v4030 = vpop.f32.mrb[0].mxu0
        %v4031 = vadd.f32 %v3923, %v4030
        %v4032 = vpop.f32.mrb[0].mxu0
        %v4033 = vadd.f32 %v3927, %v4032
        %4034 = vmatprep.mubr.bf16.mxu0 0
        %4035 = vmatmul.mubr.bf16.gmra.mrb[0].mxu0 %v3977
        %v4036 = vpop.f32.mrb[0].mxu0
        %v4037 = vadd.f32 %v3923, %v4036
        %v4038 = vpop.f32.mrb[0].mxu0
        %v4039 = vadd.f32 %v3927, %v4038
        %v4040 = vpop.f32.mrb[0].mxu0
        %v4041 = vadd.f32 %v3923, %v4040
        %v4042 = vpop.f32.mrb[0].mxu0
        %v4043 = vadd.f32 %v3927, %v4042
        %4044 = vmatprep.mubr.bf16.mxu0 0
        %4045 = vmatmul.mubr.bf16.gmra.mrb[0].mxu0 %v3980
        %v4046 = vpop.f32.mrb[0].mxu0
        %v4047 = vadd.f32 %v3923, %v4046
        %v4048 = vpop.f32.mrb[0].mxu0
        %v4049 = vadd.f32 %v3927, %v4048
        %v4050 = vpop.f32.mrb[0].mxu0
        %v4051 = vadd.f32 %v3923, %v4050
        %v4052 = vpop.f32.mrb[0].mxu0
        %v4053 = vadd.f32 %v3927, %v4052
        %4054 = vdwg.mxu0
        %v4055 = vld [vmem:[%s21] sm:$0xf]
        %v4056 = vld [vmem:[%s21 + $0x4] sm:$0xf]
        %v4057 = vld [vmem:[%s21 + $0x8] sm:$0xf]
        %v4058 = vld [vmem:[%s21 + $0xc] sm:$0xf]
        %v4059 = vld [vmem:[%s21 + $0x10] sm:$0xf]
        %v4060 = vld [vmem:[%s21 + $0x14] sm:$0xf]
        %v4061 = vld [vmem:[%s21 + $0x18] sm:$0xf]
        %v4062 = vld [vmem:[%s21 + $0x1c] sm:$0xf]
        %v4063 = vmul.f32 %v4017, 0.125
        %v4064 = vmul.f32 %v4021, 0.125
        %v4065 = vmul.f32 %v4027, 0.125
        %v4066 = vmul.f32 %v4031, 0.125
        %v4067 = vmul.f32 %v4037, 0.125
        %v4068 = vmul.f32 %v4041, 0.125
        %v4069 = vmul.f32 %v4047, 0.125
        %v4070 = vmul.f32 %v4051, 0.125
        %v4071 = vpack.c.bf16 %v4064, %v4063
        %v4072 = vpack.c.bf16 %v4066, %v4065
        %v4073 = vpack.c.bf16 %v4068, %v4067
        %v4074 = vpack.c.bf16 %v4070, %v4069
        %v4075 = vpack.c.bf16 %v4021, %v4017
        %v4076 = vpack.c.bf16 %v4031, %v4027
        %v4077 = vpack.c.bf16 %v4041, %v4037
        %v4078 = vpack.c.bf16 %v4051, %v4047
        %v4079 = vpack.c.bf16 %v4023, %v4019
        %v4080 = vpack.c.bf16 %v4033, %v4029
        %v4081 = vpack.c.bf16 %v4043, %v4039
        %v4082 = vpack.c.bf16 %v4053, %v4049
        %4087 = vrot.lane.b32.xlu0 %v4075, 64
        %v4088 = vpop.permute.xlu0 %4087
        %4089 = vrot.lane.b32.xlu0 %v4076, 64
        %v4090 = vpop.permute.xlu0 %4089
        %4091 = vrot.lane.b32.xlu0 %v4077, 64
        %v4092 = vpop.permute.xlu0 %4091
        %4093 = vrot.lane.b32.xlu0 %v4078, 64
        %v4094 = vpop.permute.xlu0 %4093
        %v4096 = vsel %vm1763, %v4071, 0
        %v4099 = vsel %vm1763, %v4072, 0
        %v4102 = vsel %vm1763, %v4073, 0
        %v4105 = vsel %vm1763, %v4074, 0
        %v4108 = vsel %vm1763, %v4088, 0
        %v4111 = vsel %vm1763, %v4090, 0
        %v4114 = vsel %vm1763, %v4092, 0
        %v4117 = vsel %vm1763, %v4094, 0
        %4119 = vmatprep.subr.bf16.mxu0 0
        %4120 = vmatpush1.bf16.xpose.msra.mxu0 %v4108
        %4121 = vmatprep.subr.bf16.mxu0 0
        %4122 = vmatpush1.bf16.xpose.msra.mxu0 %v4111
        %4123 = vmatprep.subr.bf16.mxu0 0
        %4124 = vmatpush1.bf16.xpose.msra.mxu0 %v4114
        %4125 = vmatprep.subr.bf16.mxu0 0
        %4126 = vmatpush1.bf16.xpose.msra.mxu0 %v4117
        %4127 = vmatprep.subr.bf16.mxu0 0
        %4128 = vmatpush1.bf16.xpose.msra.mxu0 0
        %4129 = vmatprep.subr.bf16.mxu0 0
        %4130 = vmatpush1.bf16.xpose.msra.mxu0 0
        %4131 = vmatprep.subr.bf16.mxu0 0
        %4132 = vmatpush1.bf16.xpose.msra.mxu0 0
        %4133 = vmatprep.subr.bf16.mxu0 0
        %4134 = vmatpush1.bf16.xpose.msra.mxu0 0
        %4135 = vmatprep.subr.bf16.mxu0 0
        %4136 = vmatpush1.bf16.xpose.msra.mxu0 0
        %4137 = vmatprep.subr.bf16.mxu0 0
        %4138 = vmatpush1.bf16.xpose.msra.mxu0 0
        %4139 = vmatprep.subr.bf16.mxu0 0
        %4140 = vmatpush1.bf16.xpose.msra.mxu0 0
        %4141 = vmatprep.subr.bf16.mxu0 0
        %4142 = vmatpush1.bf16.xpose.msra.mxu0 0
        %4143 = vmatprep.subr.bf16.mxu0 0
        %4144 = vmatpush1.bf16.xpose.msra.mxu0 0
        %4145 = vmatprep.subr.bf16.mxu0 0
        %4146 = vmatpush1.bf16.xpose.msra.mxu0 0
        %4147 = vmatprep.subr.bf16.mxu0 0
        %4148 = vmatpush1.bf16.xpose.msra.mxu0 0
        %4149 = vmatprep.subr.bf16.mxu0 0
        %4150 = vmatpush1.bf16.xpose.msra.mxu0 0
        %4151 = vmatprep.mubr.bf16.mxu0 0
        %4152 = vmatmul.mubr.bf16.gmra.mrb[0].mxu0 %v4096
        %v4153 = vpop.f32.mrb[0].mxu0
        %v4154 = vadd.f32 0.0, %v4153
        %v4155 = vpop.f32.mrb[0].mxu0
        %v4156 = vpop.f32.mrb[0].mxu0
        %v4157 = vadd.f32 0.0, %v4156
        %v4158 = vpop.f32.mrb[0].mxu0
        %4159 = vmatprep.mubr.bf16.mxu0 0
        %4160 = vmatmul.mubr.bf16.gmra.mrb[0].mxu0 %v4099
        %v4161 = vpop.f32.mrb[0].mxu0
        %v4162 = vadd.f32 0.0, %v4161
        %v4163 = vpop.f32.mrb[0].mxu0
        %v4164 = vpop.f32.mrb[0].mxu0
        %v4165 = vadd.f32 0.0, %v4164
        %v4166 = vpop.f32.mrb[0].mxu0
        %4167 = vmatprep.mubr.bf16.mxu0 0
        %4168 = vmatmul.mubr.bf16.gmra.mrb[0].mxu0 %v4102
        %v4169 = vpop.f32.mrb[0].mxu0
        %v4170 = vadd.f32 0.0, %v4169
        %v4171 = vpop.f32.mrb[0].mxu0
        %v4172 = vpop.f32.mrb[0].mxu0
        %v4173 = vadd.f32 0.0, %v4172
        %v4174 = vpop.f32.mrb[0].mxu0
        %4175 = vmatprep.mubr.bf16.mxu0 0
        %4176 = vmatmul.mubr.bf16.gmra.mrb[0].mxu0 %v4105
        %v4177 = vpop.f32.mrb[0].mxu0
        %v4178 = vadd.f32 0.0, %v4177
        %v4179 = vpop.f32.mrb[0].mxu0
        %v4180 = vpop.f32.mrb[0].mxu0
        %v4181 = vadd.f32 0.0, %v4180
        %v4182 = vpop.f32.mrb[0].mxu0
        %4183 = vdwg.mxu0
        %v4184 = vsel %vm1763, %v4154, -inf
        %4185 = vmax.xlane.f32.xlu0 %v4184
        %v4186 = vpop.xlane.xlu0 %4185
        %v4187 = vsel %vm1763, %v4157, -inf
        %4188 = vmax.xlane.f32.xlu0 %v4187
        %v4189 = vpop.xlane.xlu0 %4188
        %v4190 = vsel %vm1763, %v4162, -inf
        %4191 = vmax.xlane.f32.xlu0 %v4190
        %v4192 = vpop.xlane.xlu0 %4191
        %v4193 = vsel %vm1763, %v4165, -inf
        %4194 = vmax.xlane.f32.xlu0 %v4193
        %v4195 = vpop.xlane.xlu0 %4194
        %v4196 = vsel %vm1763, %v4170, -inf
        %4197 = vmax.xlane.f32.xlu0 %v4196
        %v4198 = vpop.xlane.xlu0 %4197
        %v4199 = vsel %vm1763, %v4173, -inf
        %4200 = vmax.xlane.f32.xlu0 %v4199
        %v4201 = vpop.xlane.xlu0 %4200
        %v4202 = vsel %vm1763, %v4178, -inf
        %4203 = vmax.xlane.f32.xlu0 %v4202
        %v4204 = vpop.xlane.xlu0 %4203
        %v4205 = vsel %vm1763, %v4181, -inf
        %4206 = vmax.xlane.f32.xlu0 %v4205
        %v4207 = vpop.xlane.xlu0 %4206
        %v4208 = vsub.f32 %v4154, %v4186
        %v4209 = vsub.f32 %v4157, %v4189
        %v4210 = vsub.f32 %v4162, %v4192
        %v4211 = vsub.f32 %v4165, %v4195
        %v4212 = vsub.f32 %v4170, %v4198
        %v4213 = vsub.f32 %v4173, %v4201
        %v4214 = vsub.f32 %v4178, %v4204
        %v4215 = vsub.f32 %v4181, %v4207
        %v4216 = vmul.f32 %v4208, 1.442695
        %v4217 = vpow.pop %v4216
        %v4218 = vmul.f32 %v4209, 1.442695
        %v4219 = vpow.pop %v4218
        %v4220 = vmul.f32 %v4210, 1.442695
        %v4221 = vpow.pop %v4220
        %v4222 = vmul.f32 %v4211, 1.442695
        %v4223 = vpow.pop %v4222
        %v4224 = vmul.f32 %v4212, 1.442695
        %v4225 = vpow.pop %v4224
        %v4226 = vmul.f32 %v4213, 1.442695
        %v4227 = vpow.pop %v4226
        %v4228 = vmul.f32 %v4214, 1.442695
        %v4229 = vpow.pop %v4228
        %v4230 = vmul.f32 %v4215, 1.442695
        %v4231 = vpow.pop %v4230
        %v4232 = vsel %vm1763, %v4217, 0.0
        %4233 = vadd.xlane.f32.xlu0 %v4232
        %v4234 = vpop.xlane.xlu0 %4233
        %v4235 = vsel %vm1763, %v4219, 0.0
        %4236 = vadd.xlane.f32.xlu0 %v4235
        %v4237 = vpop.xlane.xlu0 %4236
        %v4238 = vsel %vm1763, %v4221, 0.0
        %4239 = vadd.xlane.f32.xlu0 %v4238
        %v4240 = vpop.xlane.xlu0 %4239
        %v4241 = vsel %vm1763, %v4223, 0.0
        %4242 = vadd.xlane.f32.xlu0 %v4241
        %v4243 = vpop.xlane.xlu0 %4242
        %v4244 = vsel %vm1763, %v4225, 0.0
        %4245 = vadd.xlane.f32.xlu0 %v4244
        %v4246 = vpop.xlane.xlu0 %4245
        %v4247 = vsel %vm1763, %v4227, 0.0
        %4248 = vadd.xlane.f32.xlu0 %v4247
        %v4249 = vpop.xlane.xlu0 %4248
        %v4250 = vsel %vm1763, %v4229, 0.0
        %4251 = vadd.xlane.f32.xlu0 %v4250
        %v4252 = vpop.xlane.xlu0 %4251
        %v4253 = vsel %vm1763, %v4231, 0.0
        %4254 = vadd.xlane.f32.xlu0 %v4253
        %v4255 = vpop.xlane.xlu0 %4254
        %v4256 = vrcp.pop %v4234
        %v4257 = vrcp.pop %v4237
        %v4258 = vrcp.pop %v4240
        %v4259 = vrcp.pop %v4243
        %v4260 = vrcp.pop %v4246
        %v4261 = vrcp.pop %v4249
        %v4262 = vrcp.pop %v4252
        %v4263 = vrcp.pop %v4255
        %v4264 = vmul.f32 %v4217, %v4256
        %v4265 = vmul.f32 %v4219, %v4257
        %v4266 = vmul.f32 %v4221, %v4258
        %v4267 = vmul.f32 %v4223, %v4259
        %v4268 = vmul.f32 %v4225, %v4260
        %v4269 = vmul.f32 %v4227, %v4261
        %v4270 = vmul.f32 %v4229, %v4262
        %v4271 = vmul.f32 %v4231, %v4263
        %v4272 = vpack.c.bf16 %v4265, %v4264
        %v4273 = vpack.c.bf16 %v4267, %v4266
        %v4274 = vpack.c.bf16 %v4269, %v4268
        %v4275 = vpack.c.bf16 %v4271, %v4270
        %v4277 = vsel %vm1763, %v4272, 0
        %v4280 = vsel %vm1763, %v4273, 0
        %v4283 = vsel %vm1763, %v4274, 0
        %v4286 = vsel %vm1763, %v4275, 0
        %4288 = vmatprep.subr.bf16.mxu0 0
        %4289 = vmatpush1.bf16.msra.mxu0 %v4079
        %4290 = vmatprep.subr.bf16.mxu0 0
        %4291 = vmatpush1.bf16.msra.mxu0 %v4080
        %4292 = vmatprep.subr.bf16.mxu0 0
        %4293 = vmatpush1.bf16.msra.mxu0 %v4081
        %4294 = vmatprep.subr.bf16.mxu0 0
        %4295 = vmatpush1.bf16.msra.mxu0 %v4082
        %4296 = vmatprep.subr.bf16.mxu0 0
        %4297 = vmatpush1.bf16.msra.mxu0 0
        %4298 = vmatprep.subr.bf16.mxu0 0
        %4299 = vmatpush1.bf16.msra.mxu0 0
        %4300 = vmatprep.subr.bf16.mxu0 0
        %4301 = vmatpush1.bf16.msra.mxu0 0
        %4302 = vmatprep.subr.bf16.mxu0 0
        %4303 = vmatpush1.bf16.msra.mxu0 0
        %4304 = vmatprep.subr.bf16.mxu0 0
        %4305 = vmatpush1.bf16.msra.mxu0 0
        %4306 = vmatprep.subr.bf16.mxu0 0
        %4307 = vmatpush1.bf16.msra.mxu0 0
        %4308 = vmatprep.subr.bf16.mxu0 0
        %4309 = vmatpush1.bf16.msra.mxu0 0
        %4310 = vmatprep.subr.bf16.mxu0 0
        %4311 = vmatpush1.bf16.msra.mxu0 0
        %4312 = vmatprep.subr.bf16.mxu0 0
        %4313 = vmatpush1.bf16.msra.mxu0 0
        %4314 = vmatprep.subr.bf16.mxu0 0
        %4315 = vmatpush1.bf16.msra.mxu0 0
        %4316 = vmatprep.subr.bf16.mxu0 0
        %4317 = vmatpush1.bf16.msra.mxu0 0
        %4318 = vmatprep.subr.bf16.mxu0 0
        %4319 = vmatpush1.bf16.msra.mxu0 0
        %4320 = vmatprep.mubr.bf16.mxu0 0
        %4321 = vmatmul.mubr.bf16.gmra.mrb[0].mxu0 %v4277
        %v4322 = vpop.f32.mrb[0].mxu0
        %v4323 = vadd.f32 0.0, %v4322
        %v4324 = vpop.f32.mrb[0].mxu0
        %v4325 = vpop.f32.mrb[0].mxu0
        %v4326 = vadd.f32 0.0, %v4325
        %v4327 = vpop.f32.mrb[0].mxu0
        %4328 = vmatprep.mubr.bf16.mxu0 0
        %4329 = vmatmul.mubr.bf16.gmra.mrb[0].mxu0 %v4280
        %v4330 = vpop.f32.mrb[0].mxu0
        %v4331 = vadd.f32 0.0, %v4330
        %v4332 = vpop.f32.mrb[0].mxu0
        %v4333 = vpop.f32.mrb[0].mxu0
        %v4334 = vadd.f32 0.0, %v4333
        %v4335 = vpop.f32.mrb[0].mxu0
        %4336 = vmatprep.mubr.bf16.mxu0 0
        %4337 = vmatmul.mubr.bf16.gmra.mrb[0].mxu0 %v4283
        %v4338 = vpop.f32.mrb[0].mxu0
        %v4339 = vadd.f32 0.0, %v4338
        %v4340 = vpop.f32.mrb[0].mxu0
        %v4341 = vpop.f32.mrb[0].mxu0
        %v4342 = vadd.f32 0.0, %v4341
        %v4343 = vpop.f32.mrb[0].mxu0
        %4344 = vmatprep.mubr.bf16.mxu0 0
        %4345 = vmatmul.mubr.bf16.gmra.mrb[0].mxu0 %v4286
        %v4346 = vpop.f32.mrb[0].mxu0
        %v4347 = vadd.f32 0.0, %v4346
        %v4348 = vpop.f32.mrb[0].mxu0
        %v4349 = vpop.f32.mrb[0].mxu0
        %v4350 = vadd.f32 0.0, %v4349
        %v4351 = vpop.f32.mrb[0].mxu0
        %4352 = vdwg.mxu0
        %v4353 = vpack.c.bf16 %v4326, %v4323
        %v4354 = vpack.c.bf16 %v4334, %v4331
        %v4355 = vpack.c.bf16 %v4342, %v4339
        %v4356 = vpack.c.bf16 %v4350, %v4347
        %v4357 = vld [vmem:[%s22] sm:$0x1]
        %v4359 = vlaneseq
        %v4360 = vshrl.u32 %v4359, 7
        %v4361 = vsub.s32 0, %v4360
        %v4362 = vrot.slane %v4357, %v4361
        %v4372 = vunpack.c.l.b16 %v4055
        %v4373 = vunpack.c.l.b16 %v4056
        %v4374 = vunpack.c.l.b16 %v4057
        %v4375 = vunpack.c.l.b16 %v4058
        %v4376 = vunpack.c.l.b16 %v4059
        %v4377 = vunpack.c.l.b16 %v4060
        %v4378 = vunpack.c.l.b16 %v4061
        %v4379 = vunpack.c.l.b16 %v4062
        %v4380 = vpack.c.b16 %v4373, %v4372
        %v4381 = vpack.c.b16 %v4375, %v4374
        %v4382 = vpack.c.b16 %v4377, %v4376
        %v4383 = vpack.c.b16 %v4379, %v4378
        %v4389 = vsel %vm1763, %v4353, 0
        %v4392 = vsel %vm1763, %v4354, 0
        %v4395 = vsel %vm1763, %v4355, 0
        %v4398 = vsel %vm1763, %v4356, 0
        %4400 = vmatprep.subr.bf16.mxu0 0
        %4401 = vmatpush1.bf16.msra.mxu0 %v4380
        %4402 = vmatprep.subr.bf16.mxu0 0
        %4403 = vmatpush1.bf16.msra.mxu0 %v4381
        %4404 = vmatprep.subr.bf16.mxu0 0
        %4405 = vmatpush1.bf16.msra.mxu0 %v4382
        %4406 = vmatprep.subr.bf16.mxu0 0
        %4407 = vmatpush1.bf16.msra.mxu0 %v4383
        %4408 = vmatprep.subr.bf16.mxu0 0
        %4409 = vmatpush1.bf16.msra.mxu0 0
        %4410 = vmatprep.subr.bf16.mxu0 0
        %4411 = vmatpush1.bf16.msra.mxu0 0
        %4412 = vmatprep.subr.bf16.mxu0 0
        %4413 = vmatpush1.bf16.msra.mxu0 0
        %4414 = vmatprep.subr.bf16.mxu0 0
        %4415 = vmatpush1.bf16.msra.mxu0 0
        %4416 = vmatprep.subr.bf16.mxu0 0
        %4417 = vmatpush1.bf16.msra.mxu0 0
        %4418 = vmatprep.subr.bf16.mxu0 0
        %4419 = vmatpush1.bf16.msra.mxu0 0
        %4420 = vmatprep.subr.bf16.mxu0 0
        %4421 = vmatpush1.bf16.msra.mxu0 0
        %4422 = vmatprep.subr.bf16.mxu0 0
        %4423 = vmatpush1.bf16.msra.mxu0 0
        %4424 = vmatprep.subr.bf16.mxu0 0
        %4425 = vmatpush1.bf16.msra.mxu0 0
        %4426 = vmatprep.subr.bf16.mxu0 0
        %4427 = vmatpush1.bf16.msra.mxu0 0
        %4428 = vmatprep.subr.bf16.mxu0 0
        %4429 = vmatpush1.bf16.msra.mxu0 0
        %4430 = vmatprep.subr.bf16.mxu0 0
        %4431 = vmatpush1.bf16.msra.mxu0 0
        %4432 = vmatprep.mubr.bf16.mxu0 0
        %4433 = vmatmul.mubr.bf16.gmra.mrb[0].mxu0 %v4389
        %v4434 = vpop.f32.mrb[0].mxu0
        %v4435 = vadd.f32 %v4362, %v4434
        %v4436 = vpop.f32.mrb[0].mxu0
        %v4437 = vpop.f32.mrb[0].mxu0
        %v4438 = vadd.f32 %v4362, %v4437
        %v4439 = vpop.f32.mrb[0].mxu0
        %4440 = vmatprep.mubr.bf16.mxu0 0
        %4441 = vmatmul.mubr.bf16.gmra.mrb[0].mxu0 %v4392
        %v4442 = vpop.f32.mrb[0].mxu0
        %v4443 = vadd.f32 %v4362, %v4442
        %v4444 = vpop.f32.mrb[0].mxu0
        %v4445 = vpop.f32.mrb[0].mxu0
        %v4446 = vadd.f32 %v4362, %v4445
        %v4447 = vpop.f32.mrb[0].mxu0
        %4448 = vmatprep.mubr.bf16.mxu0 0
        %4449 = vmatmul.mubr.bf16.gmra.mrb[0].mxu0 %v4395
        %v4450 = vpop.f32.mrb[0].mxu0
        %v4451 = vadd.f32 %v4362, %v4450
        %v4452 = vpop.f32.mrb[0].mxu0
        %v4453 = vpop.f32.mrb[0].mxu0
        %v4454 = vadd.f32 %v4362, %v4453
        %v4455 = vpop.f32.mrb[0].mxu0
        %4456 = vmatprep.mubr.bf16.mxu0 0
        %4457 = vmatmul.mubr.bf16.gmra.mrb[0].mxu0 %v4398
        %v4458 = vpop.f32.mrb[0].mxu0
        %v4459 = vadd.f32 %v4362, %v4458
        %v4460 = vpop.f32.mrb[0].mxu0
        %v4461 = vpop.f32.mrb[0].mxu0
        %v4462 = vadd.f32 %v4362, %v4461
        %v4463 = vpop.f32.mrb[0].mxu0
        %4464 = vdwg.mxu0
        %v4465 = vadd.f32 %v4435, %v3511
        %v4466 = vadd.f32 %v4438, %v3512
        %v4467 = vadd.f32 %v4443, %v3513
        %v4468 = vadd.f32 %v4446, %v3514
        %v4469 = vadd.f32 %v4451, %v3515
        %v4470 = vadd.f32 %v4454, %v3516
        %v4471 = vadd.f32 %v4459, %v3517
        %v4472 = vadd.f32 %v4462, %v3518
        %4473 = vst.msk [vmem:[%s714] sm:$0xff] %vm1763, %v4465
        %4474 = vst.msk [vmem:[%s714 + $0x8] sm:$0xff] %vm1763, %v4466
        %4475 = vst.msk [vmem:[%s714 + $0x10] sm:$0xff] %vm1763, %v4467
        %4476 = vst.msk [vmem:[%s714 + $0x18] sm:$0xff] %vm1763, %v4468
        %4477 = vst.msk [vmem:[%s714 + $0x20] sm:$0xff] %vm1763, %v4469
        %4478 = vst.msk [vmem:[%s714 + $0x28] sm:$0xff] %vm1763, %v4470
        %4479 = vst.msk [vmem:[%s714 + $0x30] sm:$0xff] %vm1763, %v4471
        %4480 = vst.msk [vmem:[%s714 + $0x38] sm:$0xff] %vm1763, %v4472
        %s4481 = sand.u32 %s538, 1
        %s4482 = scalar_lea.sflag [#allocation3], %s4481
        %s4483 = sand.u32 %s538, 1
        %s4484 = smul.addr %s4483, 64
        %s4485 = scalar_lea.vmem [#allocation2], %s4484
        // Predicated region
        $region113: #{tpu_custom_call.1} parent=111 // pred_check
          %p4486 = pneg %p548
        $region114: #{tpu_custom_call.1} parent=111 // pred_check_branch
          %4488 = sbr.rel (%p4486) target = $region116
        $region115: #{tpu_custom_call.1} parent=111 // pred_region
          %s4490 = ssub.s32 1024, 1024
          %4491 = vsyncadd %s4482, %s4490
          %s4492 = smul.addr %s37, 8
          %s4493 = smul.addr %s4492, 128
          %s4494 = scalar_lea.hbm %s23, %s4493
          %s4495 = sshll.u32 %s4485, 4
          %s4496 = int_to_ptr.vmem [resolvable:$true] %s4495
          %4501 = dma.vmem_to_hbm [thread:$0]  %s4496, 1024, %s4494, %s4482, 128, 128, 8
        $region116: #{tpu_custom_call.1} parent=111 // pred_fallthru
          _
      $region112: #{tpu_custom_call.1} parent=5 // pred_fallthru
        _
      %p4502 = scmp.le.s32.totalorder 2, %s32
      // Predicated region
      $region117: #{tpu_custom_call.1} parent=5 // pred_check
        %p4503 = pneg %p4502
      $region118: #{tpu_custom_call.1} parent=5 // pred_check_branch
        %4505 = sbr.rel (%p4503) target = $region120
      $region119: #{tpu_custom_call.1} parent=5 // pred_region
        %s4506 = ssub.s32 %s32, 2
        // Predicated region
        $region121: #{tpu_custom_call.1} parent=119 // pred_check
          %p4507 = pneg %p554
        $region122: #{tpu_custom_call.1} parent=119 // pred_check_branch
          %4509 = sbr.rel (%p4507) target = $region124
        $region123: #{tpu_custom_call.1} parent=119 // pred_region
          %s4510 = sand.u32 %s539, 1
          %s4511 = scalar_lea.sflag [#allocation3], %s4510
          %s4512 = sand.u32 %s539, 1
          %s4513 = smul.addr %s4512, 64
          %s4514 = scalar_lea.vmem [#allocation2], %s4513
          %4515 = dma.done %s4511, 1024
        $region124: #{tpu_custom_call.1} parent=119 // pred_fallthru
          _
      $region120: #{tpu_custom_call.1} parent=5 // pred_fallthru
        _
    $region6: #{tpu_custom_call.1} parent=1 // loop_footer
      %s36 = sadd.s32 1, %s32
    $region7: #{tpu_custom_call.1} parent=1 // loop_footer_branch
      %31 = sbr.rel target = $region3
    $region8: #{tpu_custom_call.1} parent=1 // loop_exit
      _
    %4516 = vsyncpa [#allocation3], 1
    %s4517 = scalar_lea.sflag [#allocation3], 1
    %4518 = vsyncpa %s4517, 1

</llo_original>
